<compile_context>
chip_gen: v6e
topology: v6e:2x2x1
jax: 0.10.0
libtpu: 0.0.40
codegen_flags: <defaults>
</compile_context>

<pallas_src>
import jax
import jax.numpy as jnp
from jax.experimental import pallas as pl
from jax.experimental.pallas import tpu as pltpu

# ----------------------------- small BERT config -----------------------------
VOCAB = 128          # vocab_size
HIDDEN = 32          # hidden_size
N_HEADS = 4
HEAD_DIM = HIDDEN // N_HEADS
N_LAYERS = 2
INTERMEDIATE = 64
MAX_POS = 64
TYPE_VOCAB = 2
LN_EPS = 1e-12
_INV_SQRT2 = 0.7071067811865476
_NEG_MASK = -10000.0          # matches the PyTorch reference
_PAD_GATE = 1.0e6             # pushes padded keys above any cumsum value


# ------------------------------ shared helpers --------------------------------
def _ln(h, g, b):
    mean = jnp.mean(h, axis=-1, keepdims=True)
    var = jnp.mean(jnp.square(h - mean), axis=-1, keepdims=True)
    return (h - mean) * jax.lax.rsqrt(var + LN_EPS) * g + b


def _gelu(y):
    # exact erf-GELU (matches HF BERT 'gelu')
    return 0.5 * y * (1.0 + jax.lax.erf(y * _INV_SQRT2))


# ------------------------------- fused kernel ---------------------------------
def _unilm_fused_kernel(
    # per-batch inputs (block leading dim = 1)
    ids_ref,    # (1, S, 1) int32   input token ids
    tt_ref,     # (1, S, 1) f32     token_type_ids
    idxc_ref,   # (1, S, 1) f32     cumsum(token_type)   -> query rows  idxs[i]
    gate_ref,   # (1, 1, S) f32     cumsum + pad gate    -> key columns
    # shared weights (full blocks, VMEM resident)
    wemb_ref,   # (V, H)
    pemb_ref,   # (S, H)            position-embedding rows [0, S)
    t0_ref,     # (1, H)            token_type embedding row 0
    t1_ref,     # (1, H)            token_type embedding row 1
    eg_ref, eb_ref,                 # embedding LayerNorm (1, H)
    wqkv_ref, bqkv_ref,             # (L, H, 3H), (L, 1, 3H)   fused QKV
    wo_ref, bo_ref,                 # (L, H, H),  (L, 1, H)
    g1_ref, b1_ref,                 # (L, 1, H)
    wi_ref, bi_ref,                 # (L, H, I),  (L, 1, I)
    wo2_ref, bo2_ref,               # (L, I, H),  (L, 1, H)
    g2_ref, b2_ref,                 # (L, 1, H)
    hw_ref, hb_ref,                 # LM head transform (H, H), (1, H)
    hg_ref, hb2_ref,                # LM head LayerNorm (1, H)
    dbias_ref,                      # decoder bias (1, V)
    # output
    o_ref,      # (1, S, V) f32 logits
):
    S = ids_ref.shape[1]

    ids = ids_ref[0]            # (S, 1) int32
    tt = tt_ref[0]              # (S, 1) f32

    # --- BertEmbeddings: word (one-hot MXU matmul) + position + token_type, LN
    lane_ids = jax.lax.broadcasted_iota(jnp.int32, (S, VOCAB), 1)
    onehot = (lane_ids == ids).astype(jnp.float32)                   # (S, V)
    we = jnp.dot(onehot, wemb_ref[...], preferred_element_type=jnp.float32)
    t0 = t0_ref[...]
    t1 = t1_ref[...]
    te = t0 + tt * (t1 - t0)                                         # (S, H)
    h = _ln(we + pemb_ref[...] + te, eg_ref[...], eb_ref[...])       # (S, H)

    # --- UniLM additive attention mask, built in-kernel ---
    # allowed(i, j)  iff  idxs[j] <= idxs[i]  AND  input_ids[j] > 0
    # gate[j] = idxs[j] + (1 - pad[j]) * BIG  (computed on host)
    add_mask = jnp.where(gate_ref[0] <= idxc_ref[0], 0.0, _NEG_MASK)  # (S, S)

    scale = 1.0 / float(HEAD_DIM) ** 0.5

    # --- BertEncoder layers (weights stacked on leading layer axis) ---
    for l in range(N_LAYERS):
        qkv = jnp.dot(h, wqkv_ref[l], preferred_element_type=jnp.float32)
        qkv = qkv + bqkv_ref[l]                                      # (S, 3H)

        heads = []
        for hd in range(N_HEADS):
            lo = hd * HEAD_DIM
            # pre-scale Q once (cheaper than scaling each (S,S) score matrix)
            qh = jax.lax.slice(qkv, (0, lo), (S, lo + HEAD_DIM)) * scale
            kh = jax.lax.slice(qkv, (0, HIDDEN + lo), (S, HIDDEN + lo + HEAD_DIM))
            vh = jax.lax.slice(qkv, (0, 2 * HIDDEN + lo), (S, 2 * HIDDEN + lo + HEAD_DIM))
            # scores = q @ k^T  (rhs-transposed matmul, stays on the MXU)
            s = jax.lax.dot_general(qh, kh, (((1,), (1,)), ((), ())),
                                    preferred_element_type=jnp.float32)
            s = s + add_mask
            s = s - jnp.max(s, axis=-1, keepdims=True)
            p = jnp.exp(s)
            p = p * pl.reciprocal(jnp.sum(p, axis=-1, keepdims=True), approx=True)
            heads.append(jnp.dot(p, vh, preferred_element_type=jnp.float32))
        ctx = jnp.concatenate(heads, axis=1)                         # (S, H)

        attn = jnp.dot(ctx, wo_ref[l], preferred_element_type=jnp.float32) + bo_ref[l]
        h = _ln(attn + h, g1_ref[l], b1_ref[l])

        inter = _gelu(jnp.dot(h, wi_ref[l], preferred_element_type=jnp.float32) + bi_ref[l])
        ffn = jnp.dot(inter, wo2_ref[l], preferred_element_type=jnp.float32) + bo2_ref[l]
        h = _ln(ffn + h, g2_ref[l], b2_ref[l])

    # --- BertLMPredictionHead: dense + gelu + LN, decoder tied to word emb ---
    t = _gelu(jnp.dot(h, hw_ref[...], preferred_element_type=jnp.float32) + hb_ref[...])
    t = _ln(t, hg_ref[...], hb2_ref[...])
    logits = jax.lax.dot_general(t, wemb_ref[...], (((1,), (1,)), ((), ())),
                                 preferred_element_type=jnp.float32)
    o_ref[0] = (logits + dbias_ref[...]).astype(o_ref.dtype)


# ------------------------------ spec helpers -----------------------------------
def _shared_spec(shape):
    # full-array block, same block for every grid step (DMA'd once, stays in VMEM)
    if len(shape) == 2:
        return pl.BlockSpec(tuple(shape), lambda b: (0, 0))
    return pl.BlockSpec(tuple(shape), lambda b: (0, 0, 0))


def _batched_spec(shape):
    # 3-D arrays with leading batch axis; one batch slab per grid step
    blk = (1,) + tuple(shape[1:])
    return pl.BlockSpec(blk, lambda b: (b, 0, 0))


# ------------------------------- parameters -----------------------------------
def init_params(key):
    kit = iter(jax.random.split(key, 16))

    def norm(shape):
        return 0.02 * jax.random.normal(next(kit), shape, jnp.float32)

    return dict(
        word_emb=norm((VOCAB, HIDDEN)),
        pos_emb=norm((MAX_POS, HIDDEN)),
        type_emb=norm((TYPE_VOCAB, HIDDEN)),
        emb_ln_g=jnp.ones((1, HIDDEN), jnp.float32),
        emb_ln_b=jnp.zeros((1, HIDDEN), jnp.float32),
        # encoder layers, stacked on a leading layer axis; QKV fused
        wqkv=norm((N_LAYERS, HIDDEN, 3 * HIDDEN)),
        bqkv=jnp.zeros((N_LAYERS, 1, 3 * HIDDEN), jnp.float32),
        wo=norm((N_LAYERS, HIDDEN, HIDDEN)),
        bo=jnp.zeros((N_LAYERS, 1, HIDDEN), jnp.float32),
        ln1_g=jnp.ones((N_LAYERS, 1, HIDDEN), jnp.float32),
        ln1_b=jnp.zeros((N_LAYERS, 1, HIDDEN), jnp.float32),
        wi=norm((N_LAYERS, HIDDEN, INTERMEDIATE)),
        bi=jnp.zeros((N_LAYERS, 1, INTERMEDIATE), jnp.float32),
        wo2=norm((N_LAYERS, INTERMEDIATE, HIDDEN)),
        bo2=jnp.zeros((N_LAYERS, 1, HIDDEN), jnp.float32),
        ln2_g=jnp.ones((N_LAYERS, 1, HIDDEN), jnp.float32),
        ln2_b=jnp.zeros((N_LAYERS, 1, HIDDEN), jnp.float32),
        # tied LM prediction head
        head_w=norm((HIDDEN, HIDDEN)),
        head_b=jnp.zeros((1, HIDDEN), jnp.float32),
        head_ln_g=jnp.ones((1, HIDDEN), jnp.float32),
        head_ln_b=jnp.zeros((1, HIDDEN), jnp.float32),
        dec_bias=jnp.zeros((1, VOCAB), jnp.float32),
    )


# -------------------------------- forward pass ---------------------------------
def unilm_forward(params, input_ids, token_type_ids):
    """Equivalent of UniLMModel.forward(input_ids, token_type_ids, compute_loss=False)."""
    B, S = input_ids.shape

    # tiny scalar glue: cumsum + pad flags folded into a single key-side gate
    idxs = jnp.cumsum(token_type_ids, axis=1).astype(jnp.float32)      # (B, S)
    pad = (input_ids > 0).astype(jnp.float32)                          # (B, S)
    gate = idxs + (1.0 - pad) * _PAD_GATE                              # (B, S)

    ids3 = input_ids.astype(jnp.int32).reshape(B, S, 1)
    tt3 = token_type_ids.astype(jnp.float32).reshape(B, S, 1)
    idxs_col = idxs.reshape(B, S, 1)
    gate_row = gate.reshape(B, 1, S)
    pos_s = params["pos_emb"][:S]                                      # (S, H)
    temb0 = params["type_emb"][0:1]                                    # (1, H)
    temb1 = params["type_emb"][1:2]                                    # (1, H)

    batched_in = [ids3, tt3, idxs_col, gate_row]
    shared_in = [
        params["word_emb"], pos_s, temb0, temb1,
        params["emb_ln_g"], params["emb_ln_b"],
        params["wqkv"], params["bqkv"],
        params["wo"], params["bo"],
        params["ln1_g"], params["ln1_b"],
        params["wi"], params["bi"],
        params["wo2"], params["bo2"],
        params["ln2_g"], params["ln2_b"],
        params["head_w"], params["head_b"],
        params["head_ln_g"], params["head_ln_b"],
        params["dec_bias"],
    ]

    in_specs = ([_batched_spec(a.shape) for a in batched_in]
                + [_shared_spec(a.shape) for a in shared_in])

    logits = pl.pallas_call(
        _unilm_fused_kernel,
        out_shape=jax.ShapeDtypeStruct((B, S, VOCAB), jnp.float32),
        grid=(B,),
        in_specs=in_specs,
        out_specs=pl.BlockSpec((1, S, VOCAB), lambda b: (b, 0, 0)),
        compiler_params=pltpu.CompilerParams(
            dimension_semantics=("parallel",),
            vmem_limit_bytes=32 * 1024 * 1024,
        ),
    )(*batched_in, *shared_in)
    return logits                                                      # (B, S, V)

# TODO(synk): compute_loss branch (cross-entropy over token_type==1 positions) and
# the tokenizer-based generate()/beam_search() host loops are glue, not kernels.


# --------------------------- pure-JAX reference (check) -------------------------
def unilm_reference(params, input_ids, token_type_ids):
    B, S = input_ids.shape
    we = params["word_emb"][input_ids]                                 # (B,S,H)
    pe = params["pos_emb"][:S][None]                                   # (1,S,H)
    te = params["type_emb"][token_type_ids]                            # (B,S,H)
    h = _ln(we + pe + te, params["emb_ln_g"], params["emb_ln_b"])

    idxs = jnp.cumsum(token_type_ids, axis=1)
    allowed = (idxs[:, None, :] <= idxs[:, :, None]) & (input_ids > 0)[:, None, :]
    add = jnp.where(allowed, 0.0, _NEG_MASK)[:, None]                  # (B,1,S,S)
    scale = 1.0 / float(HEAD_DIM) ** 0.5

    def split_heads(x):
        return x.reshape(B, S, N_HEADS, HEAD_DIM).transpose(0, 2, 1, 3)

    for l in range(N_LAYERS):
        qkv = h @ params["wqkv"][l] + params["bqkv"][l]
        q, k, v = jnp.split(qkv, 3, axis=-1)
        q, k, v = split_heads(q), split_heads(k), split_heads(v)
        s = jnp.einsum("bhqd,bhkd->bhqk", q, k) * scale + add
        p = jax.nn.softmax(s, axis=-1)
        ctx = jnp.einsum("bhqk,bhkd->bhqd", p, v).transpose(0, 2, 1, 3).reshape(B, S, HIDDEN)
        attn = ctx @ params["wo"][l] + params["bo"][l]
        h = _ln(attn + h, params["ln1_g"][l], params["ln1_b"][l])
        inter = _gelu(h @ params["wi"][l] + params["bi"][l])
        ffn = inter @ params["wo2"][l] + params["bo2"][l]
        h = _ln(ffn + h, params["ln2_g"][l], params["ln2_b"][l])

    t = _gelu(h @ params["head_w"] + params["head_b"])
    t = _ln(t, params["head_ln_g"], params["head_ln_b"])
    return t @ params["word_emb"].T + params["dec_bias"]


# ----------------------------------- main --------------------------------------
if __name__ == "__main__":
    key = jax.random.PRNGKey(0)
    pkey, dkey = jax.random.split(key)
    params = init_params(pkey)

    B, S = 2, 16
    k1, _ = jax.random.split(dkey)
    input_ids = jax.random.randint(k1, (B, S), 1, VOCAB, dtype=jnp.int32)
    input_ids = input_ids.at[1, -2:].set(0)                  # simulate [PAD]
    token_type_ids = jnp.concatenate(
        [jnp.zeros((B, 10), jnp.int32), jnp.ones((B, S - 10), jnp.int32)], axis=1)

    fwd = jax.jit(unilm_forward)
    logits = fwd(params, input_ids, token_type_ids)
    jax.block_until_ready(logits)
    assert logits.shape == (B, S, VOCAB) and logits.dtype == jnp.float32
    assert bool(jnp.all(jnp.isfinite(logits)))

    # correctness check vs pure-JAX reference (loose tol for approx reciprocal)
    ref = unilm_reference(params, input_ids, token_type_ids)
    max_err = float(jnp.max(jnp.abs(logits - ref)))
    assert max_err < 2e-2, f"max |pallas - ref| = {max_err}"
    print("KERNEL_OK")
</pallas_src>

<mosaic_0001>
module attributes {stable_mosaic.version = 11 : i64} {
  func.func @_unilm_fused_kernel(%arg0: i32, %arg1: memref<1x16x1xi32, #tpu.memory_space<vmem>>, %arg2: memref<1x16x1xf32, #tpu.memory_space<vmem>>, %arg3: memref<1x16x1xf32, #tpu.memory_space<vmem>>, %arg4: memref<1x1x16xf32, #tpu.memory_space<vmem>>, %arg5: memref<128x32xf32, #tpu.memory_space<vmem>>, %arg6: memref<16x32xf32, #tpu.memory_space<vmem>>, %arg7: memref<1x32xf32, #tpu.memory_space<vmem>>, %arg8: memref<1x32xf32, #tpu.memory_space<vmem>>, %arg9: memref<1x32xf32, #tpu.memory_space<vmem>>, %arg10: memref<1x32xf32, #tpu.memory_space<vmem>>, %arg11: memref<2x32x96xf32, #tpu.memory_space<vmem>>, %arg12: memref<2x1x96xf32, #tpu.memory_space<vmem>>, %arg13: memref<2x32x32xf32, #tpu.memory_space<vmem>>, %arg14: memref<2x1x32xf32, #tpu.memory_space<vmem>>, %arg15: memref<2x1x32xf32, #tpu.memory_space<vmem>>, %arg16: memref<2x1x32xf32, #tpu.memory_space<vmem>>, %arg17: memref<2x32x64xf32, #tpu.memory_space<vmem>>, %arg18: memref<2x1x64xf32, #tpu.memory_space<vmem>>, %arg19: memref<2x64x32xf32, #tpu.memory_space<vmem>>, %arg20: memref<2x1x32xf32, #tpu.memory_space<vmem>>, %arg21: memref<2x1x32xf32, #tpu.memory_space<vmem>>, %arg22: memref<2x1x32xf32, #tpu.memory_space<vmem>>, %arg23: memref<32x32xf32, #tpu.memory_space<vmem>>, %arg24: memref<1x32xf32, #tpu.memory_space<vmem>>, %arg25: memref<1x32xf32, #tpu.memory_space<vmem>>, %arg26: memref<1x32xf32, #tpu.memory_space<vmem>>, %arg27: memref<1x128xf32, #tpu.memory_space<vmem>>, %arg28: memref<1x16x128xf32, #tpu.memory_space<vmem>>) attributes {dimension_semantics = [#tpu.dimension_semantics<parallel>], iteration_bounds = array<i64: 2>, scalar_prefetch = 0 : i64, scratch_operands = 0 : i64, tpu.core_type = #tpu.core_type<tc>, window_params = [{transform_indices = @transform_0, window_bounds = array<i64: 1, 16, 1>}, {transform_indices = @transform_1, window_bounds = array<i64: 1, 16, 1>}, {transform_indices = @transform_2, window_bounds = array<i64: 1, 16, 1>}, {transform_indices = @transform_3, window_bounds = array<i64: 1, 1, 16>}, {pipeline_mode = #tpu.pipeline_mode<synchronous>, transform_indices = @transform_4, window_bounds = array<i64: 128, 32>}, {pipeline_mode = #tpu.pipeline_mode<synchronous>, transform_indices = @transform_5, window_bounds = array<i64: 16, 32>}, {pipeline_mode = #tpu.pipeline_mode<synchronous>, transform_indices = @transform_6, window_bounds = array<i64: 1, 32>}, {pipeline_mode = #tpu.pipeline_mode<synchronous>, transform_indices = @transform_7, window_bounds = array<i64: 1, 32>}, {pipeline_mode = #tpu.pipeline_mode<synchronous>, transform_indices = @transform_8, window_bounds = array<i64: 1, 32>}, {pipeline_mode = #tpu.pipeline_mode<synchronous>, transform_indices = @transform_9, window_bounds = array<i64: 1, 32>}, {pipeline_mode = #tpu.pipeline_mode<synchronous>, transform_indices = @transform_10, window_bounds = array<i64: 2, 32, 96>}, {pipeline_mode = #tpu.pipeline_mode<synchronous>, transform_indices = @transform_11, window_bounds = array<i64: 2, 1, 96>}, {pipeline_mode = #tpu.pipeline_mode<synchronous>, transform_indices = @transform_12, window_bounds = array<i64: 2, 32, 32>}, {pipeline_mode = #tpu.pipeline_mode<synchronous>, transform_indices = @transform_13, window_bounds = array<i64: 2, 1, 32>}, {pipeline_mode = #tpu.pipeline_mode<synchronous>, transform_indices = @transform_14, window_bounds = array<i64: 2, 1, 32>}, {pipeline_mode = #tpu.pipeline_mode<synchronous>, transform_indices = @transform_15, window_bounds = array<i64: 2, 1, 32>}, {pipeline_mode = #tpu.pipeline_mode<synchronous>, transform_indices = @transform_16, window_bounds = array<i64: 2, 32, 64>}, {pipeline_mode = #tpu.pipeline_mode<synchronous>, transform_indices = @transform_17, window_bounds = array<i64: 2, 1, 64>}, {pipeline_mode = #tpu.pipeline_mode<synchronous>, transform_indices = @transform_18, window_bounds = array<i64: 2, 64, 32>}, {pipeline_mode = #tpu.pipeline_mode<synchronous>, transform_indices = @transform_19, window_bounds = array<i64: 2, 1, 32>}, {pipeline_mode = #tpu.pipeline_mode<synchronous>, transform_indices = @transform_20, window_bounds = array<i64: 2, 1, 32>}, {pipeline_mode = #tpu.pipeline_mode<synchronous>, transform_indices = @transform_21, window_bounds = array<i64: 2, 1, 32>}, {pipeline_mode = #tpu.pipeline_mode<synchronous>, transform_indices = @transform_22, window_bounds = array<i64: 32, 32>}, {pipeline_mode = #tpu.pipeline_mode<synchronous>, transform_indices = @transform_23, window_bounds = array<i64: 1, 32>}, {pipeline_mode = #tpu.pipeline_mode<synchronous>, transform_indices = @transform_24, window_bounds = array<i64: 1, 32>}, {pipeline_mode = #tpu.pipeline_mode<synchronous>, transform_indices = @transform_25, window_bounds = array<i64: 1, 32>}, {pipeline_mode = #tpu.pipeline_mode<synchronous>, transform_indices = @transform_26, window_bounds = array<i64: 1, 128>}, {transform_indices = @transform_27, window_bounds = array<i64: 1, 16, 128>}]} {
    %c0 = arith.constant 0 : index
    %c0_0 = arith.constant 0 : index
    %c0_1 = arith.constant 0 : index
    %0 = vector.load %arg1[%c0, %c0_0, %c0_1] : memref<1x16x1xi32, #tpu.memory_space<vmem>>, vector<1x16x1xi32>
    %1 = vector.shape_cast %0 : vector<1x16x1xi32> to vector<16x1xi32>
    %c0_2 = arith.constant 0 : index
    %c0_3 = arith.constant 0 : index
    %c0_4 = arith.constant 0 : index
    %2 = vector.load %arg2[%c0_2, %c0_3, %c0_4] : memref<1x16x1xf32, #tpu.memory_space<vmem>>, vector<1x16x1xf32>
    %3 = vector.shape_cast %2 : vector<1x16x1xf32> to vector<16x1xf32>
    %4 = tpu.iota {dimensions = array<i32: 1>} : vector<16x128xi32>
    %5 = vector.broadcast %1 : vector<16x1xi32> to vector<16x128xi32>
    %6 = arith.cmpi eq, %4, %5 : vector<16x128xi32>
    %7 = arith.extui %6 : vector<16x128xi1> to vector<16x128xi32>
    %8 = arith.sitofp %7 : vector<16x128xi32> to vector<16x128xf32>
    %c0_5 = arith.constant 0 : index
    %c0_6 = arith.constant 0 : index
    %9 = vector.load %arg5[%c0_5, %c0_6] : memref<128x32xf32, #tpu.memory_space<vmem>>, vector<128x32xf32>
    %cst = arith.constant dense<0.000000e+00> : vector<16x32xf32>
    %10 = tpu.matmul %8, %9, %cst {dimension_numbers = #tpu.dot_dimension_numbers<[1], [0], [0], [1], [0, 0, 1, 1], [], []>} : vector<16x128xf32>, vector<128x32xf32>, vector<16x32xf32> -> vector<16x32xf32>
    %c0_7 = arith.constant 0 : index
    %c0_8 = arith.constant 0 : index
    %11 = vector.load %arg7[%c0_7, %c0_8] : memref<1x32xf32, #tpu.memory_space<vmem>>, vector<1x32xf32>
    %c0_9 = arith.constant 0 : index
    %c0_10 = arith.constant 0 : index
    %12 = vector.load %arg8[%c0_9, %c0_10] : memref<1x32xf32, #tpu.memory_space<vmem>>, vector<1x32xf32>
    %13 = arith.subf %12, %11 : vector<1x32xf32>
    %14 = vector.broadcast %3 : vector<16x1xf32> to vector<16x32xf32>
    %15 = vector.broadcast %13 : vector<1x32xf32> to vector<16x32xf32>
    %16 = arith.mulf %14, %15 : vector<16x32xf32>
    %17 = vector.broadcast %11 : vector<1x32xf32> to vector<16x32xf32>
    %18 = arith.addf %17, %16 : vector<16x32xf32>
    %c0_11 = arith.constant 0 : index
    %c0_12 = arith.constant 0 : index
    %19 = vector.load %arg6[%c0_11, %c0_12] : memref<16x32xf32, #tpu.memory_space<vmem>>, vector<16x32xf32>
    %20 = arith.addf %10, %19 : vector<16x32xf32>
    %21 = arith.addf %20, %18 : vector<16x32xf32>
    %c0_13 = arith.constant 0 : index
    %c0_14 = arith.constant 0 : index
    %22 = vector.load %arg9[%c0_13, %c0_14] : memref<1x32xf32, #tpu.memory_space<vmem>>, vector<1x32xf32>
    %c0_15 = arith.constant 0 : index
    %c0_16 = arith.constant 0 : index
    %23 = vector.load %arg10[%c0_15, %c0_16] : memref<1x32xf32, #tpu.memory_space<vmem>>, vector<1x32xf32>
    %cst_17 = arith.constant dense<0.000000e+00> : vector<16xf32>
    %24 = vector.multi_reduction <add>, %21, %cst_17 [1] : vector<16x32xf32> to vector<16xf32>
    %25 = vector.shape_cast %24 : vector<16xf32> to vector<16x1xf32>
    %cst_18 = arith.constant 3.200000e+01 : f32
    %26 = vector.broadcast %cst_18 : f32 to vector<16x1xf32>
    %27 = arith.divf %25, %26 : vector<16x1xf32>
    %28 = vector.broadcast %27 : vector<16x1xf32> to vector<16x32xf32>
    %29 = arith.subf %21, %28 : vector<16x32xf32>
    %30 = arith.mulf %29, %29 : vector<16x32xf32>
    %cst_19 = arith.constant dense<0.000000e+00> : vector<16xf32>
    %31 = vector.multi_reduction <add>, %30, %cst_19 [1] : vector<16x32xf32> to vector<16xf32>
    %32 = vector.shape_cast %31 : vector<16xf32> to vector<16x1xf32>
    %cst_20 = arith.constant 3.200000e+01 : f32
    %33 = vector.broadcast %cst_20 : f32 to vector<16x1xf32>
    %34 = arith.divf %32, %33 : vector<16x1xf32>
    %35 = vector.broadcast %27 : vector<16x1xf32> to vector<16x32xf32>
    %36 = arith.subf %21, %35 : vector<16x32xf32>
    %cst_21 = arith.constant 9.99999996E-13 : f32
    %37 = vector.broadcast %cst_21 : f32 to vector<16x1xf32>
    %38 = arith.addf %34, %37 : vector<16x1xf32>
    %39 = math.rsqrt %38 : vector<16x1xf32>
    %40 = vector.broadcast %39 : vector<16x1xf32> to vector<16x32xf32>
    %41 = arith.mulf %36, %40 : vector<16x32xf32>
    %42 = vector.broadcast %22 : vector<1x32xf32> to vector<16x32xf32>
    %43 = arith.mulf %41, %42 : vector<16x32xf32>
    %44 = vector.broadcast %23 : vector<1x32xf32> to vector<16x32xf32>
    %45 = arith.addf %43, %44 : vector<16x32xf32>
    %c0_22 = arith.constant 0 : index
    %c0_23 = arith.constant 0 : index
    %c0_24 = arith.constant 0 : index
    %46 = vector.load %arg4[%c0_22, %c0_23, %c0_24] : memref<1x1x16xf32, #tpu.memory_space<vmem>>, vector<1x1x16xf32>
    %47 = vector.shape_cast %46 : vector<1x1x16xf32> to vector<1x16xf32>
    %c0_25 = arith.constant 0 : index
    %c0_26 = arith.constant 0 : index
    %c0_27 = arith.constant 0 : index
    %48 = vector.load %arg3[%c0_25, %c0_26, %c0_27] : memref<1x16x1xf32, #tpu.memory_space<vmem>>, vector<1x16x1xf32>
    %49 = vector.shape_cast %48 : vector<1x16x1xf32> to vector<16x1xf32>
    %50 = vector.broadcast %47 : vector<1x16xf32> to vector<16x16xf32>
    %51 = vector.broadcast %49 : vector<16x1xf32> to vector<16x16xf32>
    %52 = arith.cmpf ole, %50, %51 : vector<16x16xf32>
    %cst_28 = arith.constant 0.000000e+00 : f32
    %cst_29 = arith.constant -1.000000e+04 : f32
    %53 = vector.broadcast %cst_28 : f32 to vector<16x16xf32>
    %54 = vector.broadcast %cst_29 : f32 to vector<16x16xf32>
    %55 = arith.select %52, %53, %54 : vector<16x16xi1>, vector<16x16xf32>
    %c0_30 = arith.constant 0 : index
    %c0_31 = arith.constant 0 : index
    %c0_32 = arith.constant 0 : index
    %56 = vector.load %arg11[%c0_30, %c0_31, %c0_32] : memref<2x32x96xf32, #tpu.memory_space<vmem>>, vector<1x32x96xf32>
    %57 = vector.shape_cast %56 : vector<1x32x96xf32> to vector<32x96xf32>
    %cst_33 = arith.constant dense<0.000000e+00> : vector<16x96xf32>
    %58 = tpu.matmul %45, %57, %cst_33 {dimension_numbers = #tpu.dot_dimension_numbers<[1], [0], [0], [1], [0, 0, 1, 1], [], []>} : vector<16x32xf32>, vector<32x96xf32>, vector<16x96xf32> -> vector<16x96xf32>
    %c0_34 = arith.constant 0 : index
    %c0_35 = arith.constant 0 : index
    %c0_36 = arith.constant 0 : index
    %59 = vector.load %arg12[%c0_34, %c0_35, %c0_36] : memref<2x1x96xf32, #tpu.memory_space<vmem>>, vector<1x1x96xf32>
    %60 = vector.shape_cast %59 : vector<1x1x96xf32> to vector<1x96xf32>
    %61 = vector.broadcast %60 : vector<1x96xf32> to vector<16x96xf32>
    %62 = arith.addf %58, %61 : vector<16x96xf32>
    %63 = vector.extract_strided_slice %62 {offsets = [0, 0], sizes = [16, 8], strides = [1, 1]} : vector<16x96xf32> to vector<16x8xf32>
    %cst_37 = arith.constant 0.353553385 : f32
    %64 = vector.broadcast %cst_37 : f32 to vector<16x8xf32>
    %65 = arith.mulf %63, %64 : vector<16x8xf32>
    %66 = vector.extract_strided_slice %62 {offsets = [0, 32], sizes = [16, 8], strides = [1, 1]} : vector<16x96xf32> to vector<16x8xf32>
    %67 = vector.extract_strided_slice %62 {offsets = [0, 64], sizes = [16, 8], strides = [1, 1]} : vector<16x96xf32> to vector<16x8xf32>
    %cst_38 = arith.constant dense<0.000000e+00> : vector<16x16xf32>
    %68 = tpu.matmul %65, %66, %cst_38 {dimension_numbers = #tpu.dot_dimension_numbers<[1], [1], [0], [0], [0, 0, 1, 0], [], []>} : vector<16x8xf32>, vector<16x8xf32>, vector<16x16xf32> -> vector<16x16xf32>
    %69 = arith.addf %68, %55 : vector<16x16xf32>
    %cst_39 = arith.constant dense<0xFF800000> : vector<16xf32>
    %70 = vector.multi_reduction <maximumf>, %69, %cst_39 [1] : vector<16x16xf32> to vector<16xf32>
    %71 = vector.shape_cast %70 : vector<16xf32> to vector<16x1xf32>
    %72 = vector.broadcast %71 : vector<16x1xf32> to vector<16x16xf32>
    %73 = arith.subf %69, %72 : vector<16x16xf32>
    %74 = math.exp %73 : vector<16x16xf32>
    %cst_40 = arith.constant dense<0.000000e+00> : vector<16xf32>
    %75 = vector.multi_reduction <add>, %74, %cst_40 [1] : vector<16x16xf32> to vector<16xf32>
    %76 = vector.shape_cast %75 : vector<16xf32> to vector<16x1xf32>
    %77 = tpu.reciprocal %76 {approx = true} : vector<16x1xf32> -> vector<16x1xf32>
    %78 = vector.broadcast %77 : vector<16x1xf32> to vector<16x16xf32>
    %79 = arith.mulf %74, %78 : vector<16x16xf32>
    %cst_41 = arith.constant dense<0.000000e+00> : vector<16x8xf32>
    %80 = tpu.matmul %79, %67, %cst_41 {dimension_numbers = #tpu.dot_dimension_numbers<[1], [0], [0], [1], [0, 0, 1, 1], [], []>} : vector<16x16xf32>, vector<16x8xf32>, vector<16x8xf32> -> vector<16x8xf32>
    %81 = vector.extract_strided_slice %62 {offsets = [0, 8], sizes = [16, 8], strides = [1, 1]} : vector<16x96xf32> to vector<16x8xf32>
    %cst_42 = arith.constant 0.353553385 : f32
    %82 = vector.broadcast %cst_42 : f32 to vector<16x8xf32>
    %83 = arith.mulf %81, %82 : vector<16x8xf32>
    %84 = vector.extract_strided_slice %62 {offsets = [0, 40], sizes = [16, 8], strides = [1, 1]} : vector<16x96xf32> to vector<16x8xf32>
    %85 = vector.extract_strided_slice %62 {offsets = [0, 72], sizes = [16, 8], strides = [1, 1]} : vector<16x96xf32> to vector<16x8xf32>
    %cst_43 = arith.constant dense<0.000000e+00> : vector<16x16xf32>
    %86 = tpu.matmul %83, %84, %cst_43 {dimension_numbers = #tpu.dot_dimension_numbers<[1], [1], [0], [0], [0, 0, 1, 0], [], []>} : vector<16x8xf32>, vector<16x8xf32>, vector<16x16xf32> -> vector<16x16xf32>
    %87 = arith.addf %86, %55 : vector<16x16xf32>
    %cst_44 = arith.constant dense<0xFF800000> : vector<16xf32>
    %88 = vector.multi_reduction <maximumf>, %87, %cst_44 [1] : vector<16x16xf32> to vector<16xf32>
    %89 = vector.shape_cast %88 : vector<16xf32> to vector<16x1xf32>
    %90 = vector.broadcast %89 : vector<16x1xf32> to vector<16x16xf32>
    %91 = arith.subf %87, %90 : vector<16x16xf32>
    %92 = math.exp %91 : vector<16x16xf32>
    %cst_45 = arith.constant dense<0.000000e+00> : vector<16xf32>
    %93 = vector.multi_reduction <add>, %92, %cst_45 [1] : vector<16x16xf32> to vector<16xf32>
    %94 = vector.shape_cast %93 : vector<16xf32> to vector<16x1xf32>
    %95 = tpu.reciprocal %94 {approx = true} : vector<16x1xf32> -> vector<16x1xf32>
    %96 = vector.broadcast %95 : vector<16x1xf32> to vector<16x16xf32>
    %97 = arith.mulf %92, %96 : vector<16x16xf32>
    %cst_46 = arith.constant dense<0.000000e+00> : vector<16x8xf32>
    %98 = tpu.matmul %97, %85, %cst_46 {dimension_numbers = #tpu.dot_dimension_numbers<[1], [0], [0], [1], [0, 0, 1, 1], [], []>} : vector<16x16xf32>, vector<16x8xf32>, vector<16x8xf32> -> vector<16x8xf32>
    %99 = vector.extract_strided_slice %62 {offsets = [0, 16], sizes = [16, 8], strides = [1, 1]} : vector<16x96xf32> to vector<16x8xf32>
    %cst_47 = arith.constant 0.353553385 : f32
    %100 = vector.broadcast %cst_47 : f32 to vector<16x8xf32>
    %101 = arith.mulf %99, %100 : vector<16x8xf32>
    %102 = vector.extract_strided_slice %62 {offsets = [0, 48], sizes = [16, 8], strides = [1, 1]} : vector<16x96xf32> to vector<16x8xf32>
    %103 = vector.extract_strided_slice %62 {offsets = [0, 80], sizes = [16, 8], strides = [1, 1]} : vector<16x96xf32> to vector<16x8xf32>
    %cst_48 = arith.constant dense<0.000000e+00> : vector<16x16xf32>
    %104 = tpu.matmul %101, %102, %cst_48 {dimension_numbers = #tpu.dot_dimension_numbers<[1], [1], [0], [0], [0, 0, 1, 0], [], []>} : vector<16x8xf32>, vector<16x8xf32>, vector<16x16xf32> -> vector<16x16xf32>
    %105 = arith.addf %104, %55 : vector<16x16xf32>
    %cst_49 = arith.constant dense<0xFF800000> : vector<16xf32>
    %106 = vector.multi_reduction <maximumf>, %105, %cst_49 [1] : vector<16x16xf32> to vector<16xf32>
    %107 = vector.shape_cast %106 : vector<16xf32> to vector<16x1xf32>
    %108 = vector.broadcast %107 : vector<16x1xf32> to vector<16x16xf32>
    %109 = arith.subf %105, %108 : vector<16x16xf32>
    %110 = math.exp %109 : vector<16x16xf32>
    %cst_50 = arith.constant dense<0.000000e+00> : vector<16xf32>
    %111 = vector.multi_reduction <add>, %110, %cst_50 [1] : vector<16x16xf32> to vector<16xf32>
    %112 = vector.shape_cast %111 : vector<16xf32> to vector<16x1xf32>
    %113 = tpu.reciprocal %112 {approx = true} : vector<16x1xf32> -> vector<16x1xf32>
    %114 = vector.broadcast %113 : vector<16x1xf32> to vector<16x16xf32>
    %115 = arith.mulf %110, %114 : vector<16x16xf32>
    %cst_51 = arith.constant dense<0.000000e+00> : vector<16x8xf32>
    %116 = tpu.matmul %115, %103, %cst_51 {dimension_numbers = #tpu.dot_dimension_numbers<[1], [0], [0], [1], [0, 0, 1, 1], [], []>} : vector<16x16xf32>, vector<16x8xf32>, vector<16x8xf32> -> vector<16x8xf32>
    %117 = vector.extract_strided_slice %62 {offsets = [0, 24], sizes = [16, 8], strides = [1, 1]} : vector<16x96xf32> to vector<16x8xf32>
    %cst_52 = arith.constant 0.353553385 : f32
    %118 = vector.broadcast %cst_52 : f32 to vector<16x8xf32>
    %119 = arith.mulf %117, %118 : vector<16x8xf32>
    %120 = vector.extract_strided_slice %62 {offsets = [0, 56], sizes = [16, 8], strides = [1, 1]} : vector<16x96xf32> to vector<16x8xf32>
    %121 = vector.extract_strided_slice %62 {offsets = [0, 88], sizes = [16, 8], strides = [1, 1]} : vector<16x96xf32> to vector<16x8xf32>
    %cst_53 = arith.constant dense<0.000000e+00> : vector<16x16xf32>
    %122 = tpu.matmul %119, %120, %cst_53 {dimension_numbers = #tpu.dot_dimension_numbers<[1], [1], [0], [0], [0, 0, 1, 0], [], []>} : vector<16x8xf32>, vector<16x8xf32>, vector<16x16xf32> -> vector<16x16xf32>
    %123 = arith.addf %122, %55 : vector<16x16xf32>
    %cst_54 = arith.constant dense<0xFF800000> : vector<16xf32>
    %124 = vector.multi_reduction <maximumf>, %123, %cst_54 [1] : vector<16x16xf32> to vector<16xf32>
    %125 = vector.shape_cast %124 : vector<16xf32> to vector<16x1xf32>
    %126 = vector.broadcast %125 : vector<16x1xf32> to vector<16x16xf32>
    %127 = arith.subf %123, %126 : vector<16x16xf32>
    %128 = math.exp %127 : vector<16x16xf32>
    %cst_55 = arith.constant dense<0.000000e+00> : vector<16xf32>
    %129 = vector.multi_reduction <add>, %128, %cst_55 [1] : vector<16x16xf32> to vector<16xf32>
    %130 = vector.shape_cast %129 : vector<16xf32> to vector<16x1xf32>
    %131 = tpu.reciprocal %130 {approx = true} : vector<16x1xf32> -> vector<16x1xf32>
    %132 = vector.broadcast %131 : vector<16x1xf32> to vector<16x16xf32>
    %133 = arith.mulf %128, %132 : vector<16x16xf32>
    %cst_56 = arith.constant dense<0.000000e+00> : vector<16x8xf32>
    %134 = tpu.matmul %133, %121, %cst_56 {dimension_numbers = #tpu.dot_dimension_numbers<[1], [0], [0], [1], [0, 0, 1, 1], [], []>} : vector<16x16xf32>, vector<16x8xf32>, vector<16x8xf32> -> vector<16x8xf32>
    %135 = tpu.concatenate %80, %98, %116, %134 in 1 : vector<16x8xf32>, vector<16x8xf32>, vector<16x8xf32>, vector<16x8xf32> -> vector<16x32xf32>
    %c0_57 = arith.constant 0 : index
    %c0_58 = arith.constant 0 : index
    %c0_59 = arith.constant 0 : index
    %136 = vector.load %arg13[%c0_57, %c0_58, %c0_59] : memref<2x32x32xf32, #tpu.memory_space<vmem>>, vector<1x32x32xf32>
    %137 = vector.shape_cast %136 : vector<1x32x32xf32> to vector<32x32xf32>
    %cst_60 = arith.constant dense<0.000000e+00> : vector<16x32xf32>
    %138 = tpu.matmul %135, %137, %cst_60 {dimension_numbers = #tpu.dot_dimension_numbers<[1], [0], [0], [1], [0, 0, 1, 1], [], []>} : vector<16x32xf32>, vector<32x32xf32>, vector<16x32xf32> -> vector<16x32xf32>
    %c0_61 = arith.constant 0 : index
    %c0_62 = arith.constant 0 : index
    %c0_63 = arith.constant 0 : index
    %139 = vector.load %arg14[%c0_61, %c0_62, %c0_63] : memref<2x1x32xf32, #tpu.memory_space<vmem>>, vector<1x1x32xf32>
    %140 = vector.shape_cast %139 : vector<1x1x32xf32> to vector<1x32xf32>
    %141 = vector.broadcast %140 : vector<1x32xf32> to vector<16x32xf32>
    %142 = arith.addf %138, %141 : vector<16x32xf32>
    %143 = arith.addf %142, %45 : vector<16x32xf32>
    %c0_64 = arith.constant 0 : index
    %c0_65 = arith.constant 0 : index
    %c0_66 = arith.constant 0 : index
    %144 = vector.load %arg15[%c0_64, %c0_65, %c0_66] : memref<2x1x32xf32, #tpu.memory_space<vmem>>, vector<1x1x32xf32>
    %145 = vector.shape_cast %144 : vector<1x1x32xf32> to vector<1x32xf32>
    %c0_67 = arith.constant 0 : index
    %c0_68 = arith.constant 0 : index
    %c0_69 = arith.constant 0 : index
    %146 = vector.load %arg16[%c0_67, %c0_68, %c0_69] : memref<2x1x32xf32, #tpu.memory_space<vmem>>, vector<1x1x32xf32>
    %147 = vector.shape_cast %146 : vector<1x1x32xf32> to vector<1x32xf32>
    %cst_70 = arith.constant dense<0.000000e+00> : vector<16xf32>
    %148 = vector.multi_reduction <add>, %143, %cst_70 [1] : vector<16x32xf32> to vector<16xf32>
    %149 = vector.shape_cast %148 : vector<16xf32> to vector<16x1xf32>
    %cst_71 = arith.constant 3.200000e+01 : f32
    %150 = vector.broadcast %cst_71 : f32 to vector<16x1xf32>
    %151 = arith.divf %149, %150 : vector<16x1xf32>
    %152 = vector.broadcast %151 : vector<16x1xf32> to vector<16x32xf32>
    %153 = arith.subf %143, %152 : vector<16x32xf32>
    %154 = arith.mulf %153, %153 : vector<16x32xf32>
    %cst_72 = arith.constant dense<0.000000e+00> : vector<16xf32>
    %155 = vector.multi_reduction <add>, %154, %cst_72 [1] : vector<16x32xf32> to vector<16xf32>
    %156 = vector.shape_cast %155 : vector<16xf32> to vector<16x1xf32>
    %cst_73 = arith.constant 3.200000e+01 : f32
    %157 = vector.broadcast %cst_73 : f32 to vector<16x1xf32>
    %158 = arith.divf %156, %157 : vector<16x1xf32>
    %159 = vector.broadcast %151 : vector<16x1xf32> to vector<16x32xf32>
    %160 = arith.subf %143, %159 : vector<16x32xf32>
    %cst_74 = arith.constant 9.99999996E-13 : f32
    %161 = vector.broadcast %cst_74 : f32 to vector<16x1xf32>
    %162 = arith.addf %158, %161 : vector<16x1xf32>
    %163 = math.rsqrt %162 : vector<16x1xf32>
    %164 = vector.broadcast %163 : vector<16x1xf32> to vector<16x32xf32>
    %165 = arith.mulf %160, %164 : vector<16x32xf32>
    %166 = vector.broadcast %145 : vector<1x32xf32> to vector<16x32xf32>
    %167 = arith.mulf %165, %166 : vector<16x32xf32>
    %168 = vector.broadcast %147 : vector<1x32xf32> to vector<16x32xf32>
    %169 = arith.addf %167, %168 : vector<16x32xf32>
    %c0_75 = arith.constant 0 : index
    %c0_76 = arith.constant 0 : index
    %c0_77 = arith.constant 0 : index
    %170 = vector.load %arg17[%c0_75, %c0_76, %c0_77] : memref<2x32x64xf32, #tpu.memory_space<vmem>>, vector<1x32x64xf32>
    %171 = vector.shape_cast %170 : vector<1x32x64xf32> to vector<32x64xf32>
    %cst_78 = arith.constant dense<0.000000e+00> : vector<16x64xf32>
    %172 = tpu.matmul %169, %171, %cst_78 {dimension_numbers = #tpu.dot_dimension_numbers<[1], [0], [0], [1], [0, 0, 1, 1], [], []>} : vector<16x32xf32>, vector<32x64xf32>, vector<16x64xf32> -> vector<16x64xf32>
    %c0_79 = arith.constant 0 : index
    %c0_80 = arith.constant 0 : index
    %c0_81 = arith.constant 0 : index
    %173 = vector.load %arg18[%c0_79, %c0_80, %c0_81] : memref<2x1x64xf32, #tpu.memory_space<vmem>>, vector<1x1x64xf32>
    %174 = vector.shape_cast %173 : vector<1x1x64xf32> to vector<1x64xf32>
    %175 = vector.broadcast %174 : vector<1x64xf32> to vector<16x64xf32>
    %176 = arith.addf %172, %175 : vector<16x64xf32>
    %cst_82 = arith.constant 5.000000e-01 : f32
    %177 = vector.broadcast %cst_82 : f32 to vector<16x64xf32>
    %178 = arith.mulf %177, %176 : vector<16x64xf32>
    %cst_83 = arith.constant 0.707106769 : f32
    %179 = vector.broadcast %cst_83 : f32 to vector<16x64xf32>
    %180 = arith.mulf %176, %179 : vector<16x64xf32>
    %181 = math.erf %180 : vector<16x64xf32>
    %cst_84 = arith.constant 1.000000e+00 : f32
    %182 = vector.broadcast %cst_84 : f32 to vector<16x64xf32>
    %183 = arith.addf %182, %181 : vector<16x64xf32>
    %184 = arith.mulf %178, %183 : vector<16x64xf32>
    %c0_85 = arith.constant 0 : index
    %c0_86 = arith.constant 0 : index
    %c0_87 = arith.constant 0 : index
    %185 = vector.load %arg19[%c0_85, %c0_86, %c0_87] : memref<2x64x32xf32, #tpu.memory_space<vmem>>, vector<1x64x32xf32>
    %186 = vector.shape_cast %185 : vector<1x64x32xf32> to vector<64x32xf32>
    %cst_88 = arith.constant dense<0.000000e+00> : vector<16x32xf32>
    %187 = tpu.matmul %184, %186, %cst_88 {dimension_numbers = #tpu.dot_dimension_numbers<[1], [0], [0], [1], [0, 0, 1, 1], [], []>} : vector<16x64xf32>, vector<64x32xf32>, vector<16x32xf32> -> vector<16x32xf32>
    %c0_89 = arith.constant 0 : index
    %c0_90 = arith.constant 0 : index
    %c0_91 = arith.constant 0 : index
    %188 = vector.load %arg20[%c0_89, %c0_90, %c0_91] : memref<2x1x32xf32, #tpu.memory_space<vmem>>, vector<1x1x32xf32>
    %189 = vector.shape_cast %188 : vector<1x1x32xf32> to vector<1x32xf32>
    %190 = vector.broadcast %189 : vector<1x32xf32> to vector<16x32xf32>
    %191 = arith.addf %187, %190 : vector<16x32xf32>
    %192 = arith.addf %191, %169 : vector<16x32xf32>
    %c0_92 = arith.constant 0 : index
    %c0_93 = arith.constant 0 : index
    %c0_94 = arith.constant 0 : index
    %193 = vector.load %arg21[%c0_92, %c0_93, %c0_94] : memref<2x1x32xf32, #tpu.memory_space<vmem>>, vector<1x1x32xf32>
    %194 = vector.shape_cast %193 : vector<1x1x32xf32> to vector<1x32xf32>
    %c0_95 = arith.constant 0 : index
    %c0_96 = arith.constant 0 : index
    %c0_97 = arith.constant 0 : index
    %195 = vector.load %arg22[%c0_95, %c0_96, %c0_97] : memref<2x1x32xf32, #tpu.memory_space<vmem>>, vector<1x1x32xf32>
    %196 = vector.shape_cast %195 : vector<1x1x32xf32> to vector<1x32xf32>
    %cst_98 = arith.constant dense<0.000000e+00> : vector<16xf32>
    %197 = vector.multi_reduction <add>, %192, %cst_98 [1] : vector<16x32xf32> to vector<16xf32>
    %198 = vector.shape_cast %197 : vector<16xf32> to vector<16x1xf32>
    %cst_99 = arith.constant 3.200000e+01 : f32
    %199 = vector.broadcast %cst_99 : f32 to vector<16x1xf32>
    %200 = arith.divf %198, %199 : vector<16x1xf32>
    %201 = vector.broadcast %200 : vector<16x1xf32> to vector<16x32xf32>
    %202 = arith.subf %192, %201 : vector<16x32xf32>
    %203 = arith.mulf %202, %202 : vector<16x32xf32>
    %cst_100 = arith.constant dense<0.000000e+00> : vector<16xf32>
    %204 = vector.multi_reduction <add>, %203, %cst_100 [1] : vector<16x32xf32> to vector<16xf32>
    %205 = vector.shape_cast %204 : vector<16xf32> to vector<16x1xf32>
    %cst_101 = arith.constant 3.200000e+01 : f32
    %206 = vector.broadcast %cst_101 : f32 to vector<16x1xf32>
    %207 = arith.divf %205, %206 : vector<16x1xf32>
    %208 = vector.broadcast %200 : vector<16x1xf32> to vector<16x32xf32>
    %209 = arith.subf %192, %208 : vector<16x32xf32>
    %cst_102 = arith.constant 9.99999996E-13 : f32
    %210 = vector.broadcast %cst_102 : f32 to vector<16x1xf32>
    %211 = arith.addf %207, %210 : vector<16x1xf32>
    %212 = math.rsqrt %211 : vector<16x1xf32>
    %213 = vector.broadcast %212 : vector<16x1xf32> to vector<16x32xf32>
    %214 = arith.mulf %209, %213 : vector<16x32xf32>
    %215 = vector.broadcast %194 : vector<1x32xf32> to vector<16x32xf32>
    %216 = arith.mulf %214, %215 : vector<16x32xf32>
    %217 = vector.broadcast %196 : vector<1x32xf32> to vector<16x32xf32>
    %218 = arith.addf %216, %217 : vector<16x32xf32>
    %c1 = arith.constant 1 : index
    %c0_103 = arith.constant 0 : index
    %c0_104 = arith.constant 0 : index
    %219 = vector.load %arg11[%c1, %c0_103, %c0_104] : memref<2x32x96xf32, #tpu.memory_space<vmem>>, vector<1x32x96xf32>
    %220 = vector.shape_cast %219 : vector<1x32x96xf32> to vector<32x96xf32>
    %cst_105 = arith.constant dense<0.000000e+00> : vector<16x96xf32>
    %221 = tpu.matmul %218, %220, %cst_105 {dimension_numbers = #tpu.dot_dimension_numbers<[1], [0], [0], [1], [0, 0, 1, 1], [], []>} : vector<16x32xf32>, vector<32x96xf32>, vector<16x96xf32> -> vector<16x96xf32>
    %c1_106 = arith.constant 1 : index
    %c0_107 = arith.constant 0 : index
    %c0_108 = arith.constant 0 : index
    %222 = vector.load %arg12[%c1_106, %c0_107, %c0_108] : memref<2x1x96xf32, #tpu.memory_space<vmem>>, vector<1x1x96xf32>
    %223 = vector.shape_cast %222 : vector<1x1x96xf32> to vector<1x96xf32>
    %224 = vector.broadcast %223 : vector<1x96xf32> to vector<16x96xf32>
    %225 = arith.addf %221, %224 : vector<16x96xf32>
    %226 = vector.extract_strided_slice %225 {offsets = [0, 0], sizes = [16, 8], strides = [1, 1]} : vector<16x96xf32> to vector<16x8xf32>
    %cst_109 = arith.constant 0.353553385 : f32
    %227 = vector.broadcast %cst_109 : f32 to vector<16x8xf32>
    %228 = arith.mulf %226, %227 : vector<16x8xf32>
    %229 = vector.extract_strided_slice %225 {offsets = [0, 32], sizes = [16, 8], strides = [1, 1]} : vector<16x96xf32> to vector<16x8xf32>
    %230 = vector.extract_strided_slice %225 {offsets = [0, 64], sizes = [16, 8], strides = [1, 1]} : vector<16x96xf32> to vector<16x8xf32>
    %cst_110 = arith.constant dense<0.000000e+00> : vector<16x16xf32>
    %231 = tpu.matmul %228, %229, %cst_110 {dimension_numbers = #tpu.dot_dimension_numbers<[1], [1], [0], [0], [0, 0, 1, 0], [], []>} : vector<16x8xf32>, vector<16x8xf32>, vector<16x16xf32> -> vector<16x16xf32>
    %232 = arith.addf %231, %55 : vector<16x16xf32>
    %cst_111 = arith.constant dense<0xFF800000> : vector<16xf32>
    %233 = vector.multi_reduction <maximumf>, %232, %cst_111 [1] : vector<16x16xf32> to vector<16xf32>
    %234 = vector.shape_cast %233 : vector<16xf32> to vector<16x1xf32>
    %235 = vector.broadcast %234 : vector<16x1xf32> to vector<16x16xf32>
    %236 = arith.subf %232, %235 : vector<16x16xf32>
    %237 = math.exp %236 : vector<16x16xf32>
    %cst_112 = arith.constant dense<0.000000e+00> : vector<16xf32>
    %238 = vector.multi_reduction <add>, %237, %cst_112 [1] : vector<16x16xf32> to vector<16xf32>
    %239 = vector.shape_cast %238 : vector<16xf32> to vector<16x1xf32>
    %240 = tpu.reciprocal %239 {approx = true} : vector<16x1xf32> -> vector<16x1xf32>
    %241 = vector.broadcast %240 : vector<16x1xf32> to vector<16x16xf32>
    %242 = arith.mulf %237, %241 : vector<16x16xf32>
    %cst_113 = arith.constant dense<0.000000e+00> : vector<16x8xf32>
    %243 = tpu.matmul %242, %230, %cst_113 {dimension_numbers = #tpu.dot_dimension_numbers<[1], [0], [0], [1], [0, 0, 1, 1], [], []>} : vector<16x16xf32>, vector<16x8xf32>, vector<16x8xf32> -> vector<16x8xf32>
    %244 = vector.extract_strided_slice %225 {offsets = [0, 8], sizes = [16, 8], strides = [1, 1]} : vector<16x96xf32> to vector<16x8xf32>
    %cst_114 = arith.constant 0.353553385 : f32
    %245 = vector.broadcast %cst_114 : f32 to vector<16x8xf32>
    %246 = arith.mulf %244, %245 : vector<16x8xf32>
    %247 = vector.extract_strided_slice %225 {offsets = [0, 40], sizes = [16, 8], strides = [1, 1]} : vector<16x96xf32> to vector<16x8xf32>
    %248 = vector.extract_strided_slice %225 {offsets = [0, 72], sizes = [16, 8], strides = [1, 1]} : vector<16x96xf32> to vector<16x8xf32>
    %cst_115 = arith.constant dense<0.000000e+00> : vector<16x16xf32>
    %249 = tpu.matmul %246, %247, %cst_115 {dimension_numbers = #tpu.dot_dimension_numbers<[1], [1], [0], [0], [0, 0, 1, 0], [], []>} : vector<16x8xf32>, vector<16x8xf32>, vector<16x16xf32> -> vector<16x16xf32>
    %250 = arith.addf %249, %55 : vector<16x16xf32>
    %cst_116 = arith.constant dense<0xFF800000> : vector<16xf32>
    %251 = vector.multi_reduction <maximumf>, %250, %cst_116 [1] : vector<16x16xf32> to vector<16xf32>
    %252 = vector.shape_cast %251 : vector<16xf32> to vector<16x1xf32>
    %253 = vector.broadcast %252 : vector<16x1xf32> to vector<16x16xf32>
    %254 = arith.subf %250, %253 : vector<16x16xf32>
    %255 = math.exp %254 : vector<16x16xf32>
    %cst_117 = arith.constant dense<0.000000e+00> : vector<16xf32>
    %256 = vector.multi_reduction <add>, %255, %cst_117 [1] : vector<16x16xf32> to vector<16xf32>
    %257 = vector.shape_cast %256 : vector<16xf32> to vector<16x1xf32>
    %258 = tpu.reciprocal %257 {approx = true} : vector<16x1xf32> -> vector<16x1xf32>
    %259 = vector.broadcast %258 : vector<16x1xf32> to vector<16x16xf32>
    %260 = arith.mulf %255, %259 : vector<16x16xf32>
    %cst_118 = arith.constant dense<0.000000e+00> : vector<16x8xf32>
    %261 = tpu.matmul %260, %248, %cst_118 {dimension_numbers = #tpu.dot_dimension_numbers<[1], [0], [0], [1], [0, 0, 1, 1], [], []>} : vector<16x16xf32>, vector<16x8xf32>, vector<16x8xf32> -> vector<16x8xf32>
    %262 = vector.extract_strided_slice %225 {offsets = [0, 16], sizes = [16, 8], strides = [1, 1]} : vector<16x96xf32> to vector<16x8xf32>
    %cst_119 = arith.constant 0.353553385 : f32
    %263 = vector.broadcast %cst_119 : f32 to vector<16x8xf32>
    %264 = arith.mulf %262, %263 : vector<16x8xf32>
    %265 = vector.extract_strided_slice %225 {offsets = [0, 48], sizes = [16, 8], strides = [1, 1]} : vector<16x96xf32> to vector<16x8xf32>
    %266 = vector.extract_strided_slice %225 {offsets = [0, 80], sizes = [16, 8], strides = [1, 1]} : vector<16x96xf32> to vector<16x8xf32>
    %cst_120 = arith.constant dense<0.000000e+00> : vector<16x16xf32>
    %267 = tpu.matmul %264, %265, %cst_120 {dimension_numbers = #tpu.dot_dimension_numbers<[1], [1], [0], [0], [0, 0, 1, 0], [], []>} : vector<16x8xf32>, vector<16x8xf32>, vector<16x16xf32> -> vector<16x16xf32>
    %268 = arith.addf %267, %55 : vector<16x16xf32>
    %cst_121 = arith.constant dense<0xFF800000> : vector<16xf32>
    %269 = vector.multi_reduction <maximumf>, %268, %cst_121 [1] : vector<16x16xf32> to vector<16xf32>
    %270 = vector.shape_cast %269 : vector<16xf32> to vector<16x1xf32>
    %271 = vector.broadcast %270 : vector<16x1xf32> to vector<16x16xf32>
    %272 = arith.subf %268, %271 : vector<16x16xf32>
    %273 = math.exp %272 : vector<16x16xf32>
    %cst_122 = arith.constant dense<0.000000e+00> : vector<16xf32>
    %274 = vector.multi_reduction <add>, %273, %cst_122 [1] : vector<16x16xf32> to vector<16xf32>
    %275 = vector.shape_cast %274 : vector<16xf32> to vector<16x1xf32>
    %276 = tpu.reciprocal %275 {approx = true} : vector<16x1xf32> -> vector<16x1xf32>
    %277 = vector.broadcast %276 : vector<16x1xf32> to vector<16x16xf32>
    %278 = arith.mulf %273, %277 : vector<16x16xf32>
    %cst_123 = arith.constant dense<0.000000e+00> : vector<16x8xf32>
    %279 = tpu.matmul %278, %266, %cst_123 {dimension_numbers = #tpu.dot_dimension_numbers<[1], [0], [0], [1], [0, 0, 1, 1], [], []>} : vector<16x16xf32>, vector<16x8xf32>, vector<16x8xf32> -> vector<16x8xf32>
    %280 = vector.extract_strided_slice %225 {offsets = [0, 24], sizes = [16, 8], strides = [1, 1]} : vector<16x96xf32> to vector<16x8xf32>
    %cst_124 = arith.constant 0.353553385 : f32
    %281 = vector.broadcast %cst_124 : f32 to vector<16x8xf32>
    %282 = arith.mulf %280, %281 : vector<16x8xf32>
    %283 = vector.extract_strided_slice %225 {offsets = [0, 56], sizes = [16, 8], strides = [1, 1]} : vector<16x96xf32> to vector<16x8xf32>
    %284 = vector.extract_strided_slice %225 {offsets = [0, 88], sizes = [16, 8], strides = [1, 1]} : vector<16x96xf32> to vector<16x8xf32>
    %cst_125 = arith.constant dense<0.000000e+00> : vector<16x16xf32>
    %285 = tpu.matmul %282, %283, %cst_125 {dimension_numbers = #tpu.dot_dimension_numbers<[1], [1], [0], [0], [0, 0, 1, 0], [], []>} : vector<16x8xf32>, vector<16x8xf32>, vector<16x16xf32> -> vector<16x16xf32>
    %286 = arith.addf %285, %55 : vector<16x16xf32>
    %cst_126 = arith.constant dense<0xFF800000> : vector<16xf32>
    %287 = vector.multi_reduction <maximumf>, %286, %cst_126 [1] : vector<16x16xf32> to vector<16xf32>
    %288 = vector.shape_cast %287 : vector<16xf32> to vector<16x1xf32>
    %289 = vector.broadcast %288 : vector<16x1xf32> to vector<16x16xf32>
    %290 = arith.subf %286, %289 : vector<16x16xf32>
    %291 = math.exp %290 : vector<16x16xf32>
    %cst_127 = arith.constant dense<0.000000e+00> : vector<16xf32>
    %292 = vector.multi_reduction <add>, %291, %cst_127 [1] : vector<16x16xf32> to vector<16xf32>
    %293 = vector.shape_cast %292 : vector<16xf32> to vector<16x1xf32>
    %294 = tpu.reciprocal %293 {approx = true} : vector<16x1xf32> -> vector<16x1xf32>
    %295 = vector.broadcast %294 : vector<16x1xf32> to vector<16x16xf32>
    %296 = arith.mulf %291, %295 : vector<16x16xf32>
    %cst_128 = arith.constant dense<0.000000e+00> : vector<16x8xf32>
    %297 = tpu.matmul %296, %284, %cst_128 {dimension_numbers = #tpu.dot_dimension_numbers<[1], [0], [0], [1], [0, 0, 1, 1], [], []>} : vector<16x16xf32>, vector<16x8xf32>, vector<16x8xf32> -> vector<16x8xf32>
    %298 = tpu.concatenate %243, %261, %279, %297 in 1 : vector<16x8xf32>, vector<16x8xf32>, vector<16x8xf32>, vector<16x8xf32> -> vector<16x32xf32>
    %c1_129 = arith.constant 1 : index
    %c0_130 = arith.constant 0 : index
    %c0_131 = arith.constant 0 : index
    %299 = vector.load %arg13[%c1_129, %c0_130, %c0_131] : memref<2x32x32xf32, #tpu.memory_space<vmem>>, vector<1x32x32xf32>
    %300 = vector.shape_cast %299 : vector<1x32x32xf32> to vector<32x32xf32>
    %cst_132 = arith.constant dense<0.000000e+00> : vector<16x32xf32>
    %301 = tpu.matmul %298, %300, %cst_132 {dimension_numbers = #tpu.dot_dimension_numbers<[1], [0], [0], [1], [0, 0, 1, 1], [], []>} : vector<16x32xf32>, vector<32x32xf32>, vector<16x32xf32> -> vector<16x32xf32>
    %c1_133 = arith.constant 1 : index
    %c0_134 = arith.constant 0 : index
    %c0_135 = arith.constant 0 : index
    %302 = vector.load %arg14[%c1_133, %c0_134, %c0_135] : memref<2x1x32xf32, #tpu.memory_space<vmem>>, vector<1x1x32xf32>
    %303 = vector.shape_cast %302 : vector<1x1x32xf32> to vector<1x32xf32>
    %304 = vector.broadcast %303 : vector<1x32xf32> to vector<16x32xf32>
    %305 = arith.addf %301, %304 : vector<16x32xf32>
    %306 = arith.addf %305, %218 : vector<16x32xf32>
    %c1_136 = arith.constant 1 : index
    %c0_137 = arith.constant 0 : index
    %c0_138 = arith.constant 0 : index
    %307 = vector.load %arg15[%c1_136, %c0_137, %c0_138] : memref<2x1x32xf32, #tpu.memory_space<vmem>>, vector<1x1x32xf32>
    %308 = vector.shape_cast %307 : vector<1x1x32xf32> to vector<1x32xf32>
    %c1_139 = arith.constant 1 : index
    %c0_140 = arith.constant 0 : index
    %c0_141 = arith.constant 0 : index
    %309 = vector.load %arg16[%c1_139, %c0_140, %c0_141] : memref<2x1x32xf32, #tpu.memory_space<vmem>>, vector<1x1x32xf32>
    %310 = vector.shape_cast %309 : vector<1x1x32xf32> to vector<1x32xf32>
    %cst_142 = arith.constant dense<0.000000e+00> : vector<16xf32>
    %311 = vector.multi_reduction <add>, %306, %cst_142 [1] : vector<16x32xf32> to vector<16xf32>
    %312 = vector.shape_cast %311 : vector<16xf32> to vector<16x1xf32>
    %cst_143 = arith.constant 3.200000e+01 : f32
    %313 = vector.broadcast %cst_143 : f32 to vector<16x1xf32>
    %314 = arith.divf %312, %313 : vector<16x1xf32>
    %315 = vector.broadcast %314 : vector<16x1xf32> to vector<16x32xf32>
    %316 = arith.subf %306, %315 : vector<16x32xf32>
    %317 = arith.mulf %316, %316 : vector<16x32xf32>
    %cst_144 = arith.constant dense<0.000000e+00> : vector<16xf32>
    %318 = vector.multi_reduction <add>, %317, %cst_144 [1] : vector<16x32xf32> to vector<16xf32>
    %319 = vector.shape_cast %318 : vector<16xf32> to vector<16x1xf32>
    %cst_145 = arith.constant 3.200000e+01 : f32
    %320 = vector.broadcast %cst_145 : f32 to vector<16x1xf32>
    %321 = arith.divf %319, %320 : vector<16x1xf32>
    %322 = vector.broadcast %314 : vector<16x1xf32> to vector<16x32xf32>
    %323 = arith.subf %306, %322 : vector<16x32xf32>
    %cst_146 = arith.constant 9.99999996E-13 : f32
    %324 = vector.broadcast %cst_146 : f32 to vector<16x1xf32>
    %325 = arith.addf %321, %324 : vector<16x1xf32>
    %326 = math.rsqrt %325 : vector<16x1xf32>
    %327 = vector.broadcast %326 : vector<16x1xf32> to vector<16x32xf32>
    %328 = arith.mulf %323, %327 : vector<16x32xf32>
    %329 = vector.broadcast %308 : vector<1x32xf32> to vector<16x32xf32>
    %330 = arith.mulf %328, %329 : vector<16x32xf32>
    %331 = vector.broadcast %310 : vector<1x32xf32> to vector<16x32xf32>
    %332 = arith.addf %330, %331 : vector<16x32xf32>
    %c1_147 = arith.constant 1 : index
    %c0_148 = arith.constant 0 : index
    %c0_149 = arith.constant 0 : index
    %333 = vector.load %arg17[%c1_147, %c0_148, %c0_149] : memref<2x32x64xf32, #tpu.memory_space<vmem>>, vector<1x32x64xf32>
    %334 = vector.shape_cast %333 : vector<1x32x64xf32> to vector<32x64xf32>
    %cst_150 = arith.constant dense<0.000000e+00> : vector<16x64xf32>
    %335 = tpu.matmul %332, %334, %cst_150 {dimension_numbers = #tpu.dot_dimension_numbers<[1], [0], [0], [1], [0, 0, 1, 1], [], []>} : vector<16x32xf32>, vector<32x64xf32>, vector<16x64xf32> -> vector<16x64xf32>
    %c1_151 = arith.constant 1 : index
    %c0_152 = arith.constant 0 : index
    %c0_153 = arith.constant 0 : index
    %336 = vector.load %arg18[%c1_151, %c0_152, %c0_153] : memref<2x1x64xf32, #tpu.memory_space<vmem>>, vector<1x1x64xf32>
    %337 = vector.shape_cast %336 : vector<1x1x64xf32> to vector<1x64xf32>
    %338 = vector.broadcast %337 : vector<1x64xf32> to vector<16x64xf32>
    %339 = arith.addf %335, %338 : vector<16x64xf32>
    %cst_154 = arith.constant 5.000000e-01 : f32
    %340 = vector.broadcast %cst_154 : f32 to vector<16x64xf32>
    %341 = arith.mulf %340, %339 : vector<16x64xf32>
    %cst_155 = arith.constant 0.707106769 : f32
    %342 = vector.broadcast %cst_155 : f32 to vector<16x64xf32>
    %343 = arith.mulf %339, %342 : vector<16x64xf32>
    %344 = math.erf %343 : vector<16x64xf32>
    %cst_156 = arith.constant 1.000000e+00 : f32
    %345 = vector.broadcast %cst_156 : f32 to vector<16x64xf32>
    %346 = arith.addf %345, %344 : vector<16x64xf32>
    %347 = arith.mulf %341, %346 : vector<16x64xf32>
    %c1_157 = arith.constant 1 : index
    %c0_158 = arith.constant 0 : index
    %c0_159 = arith.constant 0 : index
    %348 = vector.load %arg19[%c1_157, %c0_158, %c0_159] : memref<2x64x32xf32, #tpu.memory_space<vmem>>, vector<1x64x32xf32>
    %349 = vector.shape_cast %348 : vector<1x64x32xf32> to vector<64x32xf32>
    %cst_160 = arith.constant dense<0.000000e+00> : vector<16x32xf32>
    %350 = tpu.matmul %347, %349, %cst_160 {dimension_numbers = #tpu.dot_dimension_numbers<[1], [0], [0], [1], [0, 0, 1, 1], [], []>} : vector<16x64xf32>, vector<64x32xf32>, vector<16x32xf32> -> vector<16x32xf32>
    %c1_161 = arith.constant 1 : index
    %c0_162 = arith.constant 0 : index
    %c0_163 = arith.constant 0 : index
    %351 = vector.load %arg20[%c1_161, %c0_162, %c0_163] : memref<2x1x32xf32, #tpu.memory_space<vmem>>, vector<1x1x32xf32>
    %352 = vector.shape_cast %351 : vector<1x1x32xf32> to vector<1x32xf32>
    %353 = vector.broadcast %352 : vector<1x32xf32> to vector<16x32xf32>
    %354 = arith.addf %350, %353 : vector<16x32xf32>
    %355 = arith.addf %354, %332 : vector<16x32xf32>
    %c1_164 = arith.constant 1 : index
    %c0_165 = arith.constant 0 : index
    %c0_166 = arith.constant 0 : index
    %356 = vector.load %arg21[%c1_164, %c0_165, %c0_166] : memref<2x1x32xf32, #tpu.memory_space<vmem>>, vector<1x1x32xf32>
    %357 = vector.shape_cast %356 : vector<1x1x32xf32> to vector<1x32xf32>
    %c1_167 = arith.constant 1 : index
    %c0_168 = arith.constant 0 : index
    %c0_169 = arith.constant 0 : index
    %358 = vector.load %arg22[%c1_167, %c0_168, %c0_169] : memref<2x1x32xf32, #tpu.memory_space<vmem>>, vector<1x1x32xf32>
    %359 = vector.shape_cast %358 : vector<1x1x32xf32> to vector<1x32xf32>
    %cst_170 = arith.constant dense<0.000000e+00> : vector<16xf32>
    %360 = vector.multi_reduction <add>, %355, %cst_170 [1] : vector<16x32xf32> to vector<16xf32>
    %361 = vector.shape_cast %360 : vector<16xf32> to vector<16x1xf32>
    %cst_171 = arith.constant 3.200000e+01 : f32
    %362 = vector.broadcast %cst_171 : f32 to vector<16x1xf32>
    %363 = arith.divf %361, %362 : vector<16x1xf32>
    %364 = vector.broadcast %363 : vector<16x1xf32> to vector<16x32xf32>
    %365 = arith.subf %355, %364 : vector<16x32xf32>
    %366 = arith.mulf %365, %365 : vector<16x32xf32>
    %cst_172 = arith.constant dense<0.000000e+00> : vector<16xf32>
    %367 = vector.multi_reduction <add>, %366, %cst_172 [1] : vector<16x32xf32> to vector<16xf32>
    %368 = vector.shape_cast %367 : vector<16xf32> to vector<16x1xf32>
    %cst_173 = arith.constant 3.200000e+01 : f32
    %369 = vector.broadcast %cst_173 : f32 to vector<16x1xf32>
    %370 = arith.divf %368, %369 : vector<16x1xf32>
    %371 = vector.broadcast %363 : vector<16x1xf32> to vector<16x32xf32>
    %372 = arith.subf %355, %371 : vector<16x32xf32>
    %cst_174 = arith.constant 9.99999996E-13 : f32
    %373 = vector.broadcast %cst_174 : f32 to vector<16x1xf32>
    %374 = arith.addf %370, %373 : vector<16x1xf32>
    %375 = math.rsqrt %374 : vector<16x1xf32>
    %376 = vector.broadcast %375 : vector<16x1xf32> to vector<16x32xf32>
    %377 = arith.mulf %372, %376 : vector<16x32xf32>
    %378 = vector.broadcast %357 : vector<1x32xf32> to vector<16x32xf32>
    %379 = arith.mulf %377, %378 : vector<16x32xf32>
    %380 = vector.broadcast %359 : vector<1x32xf32> to vector<16x32xf32>
    %381 = arith.addf %379, %380 : vector<16x32xf32>
    %c0_175 = arith.constant 0 : index
    %c0_176 = arith.constant 0 : index
    %382 = vector.load %arg23[%c0_175, %c0_176] : memref<32x32xf32, #tpu.memory_space<vmem>>, vector<32x32xf32>
    %cst_177 = arith.constant dense<0.000000e+00> : vector<16x32xf32>
    %383 = tpu.matmul %381, %382, %cst_177 {dimension_numbers = #tpu.dot_dimension_numbers<[1], [0], [0], [1], [0, 0, 1, 1], [], []>} : vector<16x32xf32>, vector<32x32xf32>, vector<16x32xf32> -> vector<16x32xf32>
    %c0_178 = arith.constant 0 : index
    %c0_179 = arith.constant 0 : index
    %384 = vector.load %arg24[%c0_178, %c0_179] : memref<1x32xf32, #tpu.memory_space<vmem>>, vector<1x32xf32>
    %385 = vector.broadcast %384 : vector<1x32xf32> to vector<16x32xf32>
    %386 = arith.addf %383, %385 : vector<16x32xf32>
    %cst_180 = arith.constant 5.000000e-01 : f32
    %387 = vector.broadcast %cst_180 : f32 to vector<16x32xf32>
    %388 = arith.mulf %387, %386 : vector<16x32xf32>
    %cst_181 = arith.constant 0.707106769 : f32
    %389 = vector.broadcast %cst_181 : f32 to vector<16x32xf32>
    %390 = arith.mulf %386, %389 : vector<16x32xf32>
    %391 = math.erf %390 : vector<16x32xf32>
    %cst_182 = arith.constant 1.000000e+00 : f32
    %392 = vector.broadcast %cst_182 : f32 to vector<16x32xf32>
    %393 = arith.addf %392, %391 : vector<16x32xf32>
    %394 = arith.mulf %388, %393 : vector<16x32xf32>
    %c0_183 = arith.constant 0 : index
    %c0_184 = arith.constant 0 : index
    %395 = vector.load %arg25[%c0_183, %c0_184] : memref<1x32xf32, #tpu.memory_space<vmem>>, vector<1x32xf32>
    %c0_185 = arith.constant 0 : index
    %c0_186 = arith.constant 0 : index
    %396 = vector.load %arg26[%c0_185, %c0_186] : memref<1x32xf32, #tpu.memory_space<vmem>>, vector<1x32xf32>
    %cst_187 = arith.constant dense<0.000000e+00> : vector<16xf32>
    %397 = vector.multi_reduction <add>, %394, %cst_187 [1] : vector<16x32xf32> to vector<16xf32>
    %398 = vector.shape_cast %397 : vector<16xf32> to vector<16x1xf32>
    %cst_188 = arith.constant 3.200000e+01 : f32
    %399 = vector.broadcast %cst_188 : f32 to vector<16x1xf32>
    %400 = arith.divf %398, %399 : vector<16x1xf32>
    %401 = vector.broadcast %400 : vector<16x1xf32> to vector<16x32xf32>
    %402 = arith.subf %394, %401 : vector<16x32xf32>
    %403 = arith.mulf %402, %402 : vector<16x32xf32>
    %cst_189 = arith.constant dense<0.000000e+00> : vector<16xf32>
    %404 = vector.multi_reduction <add>, %403, %cst_189 [1] : vector<16x32xf32> to vector<16xf32>
    %405 = vector.shape_cast %404 : vector<16xf32> to vector<16x1xf32>
    %cst_190 = arith.constant 3.200000e+01 : f32
    %406 = vector.broadcast %cst_190 : f32 to vector<16x1xf32>
    %407 = arith.divf %405, %406 : vector<16x1xf32>
    %408 = vector.broadcast %400 : vector<16x1xf32> to vector<16x32xf32>
    %409 = arith.subf %394, %408 : vector<16x32xf32>
    %cst_191 = arith.constant 9.99999996E-13 : f32
    %410 = vector.broadcast %cst_191 : f32 to vector<16x1xf32>
    %411 = arith.addf %407, %410 : vector<16x1xf32>
    %412 = math.rsqrt %411 : vector<16x1xf32>
    %413 = vector.broadcast %412 : vector<16x1xf32> to vector<16x32xf32>
    %414 = arith.mulf %409, %413 : vector<16x32xf32>
    %415 = vector.broadcast %395 : vector<1x32xf32> to vector<16x32xf32>
    %416 = arith.mulf %414, %415 : vector<16x32xf32>
    %417 = vector.broadcast %396 : vector<1x32xf32> to vector<16x32xf32>
    %418 = arith.addf %416, %417 : vector<16x32xf32>
    %c0_192 = arith.constant 0 : index
    %c0_193 = arith.constant 0 : index
    %419 = vector.load %arg5[%c0_192, %c0_193] : memref<128x32xf32, #tpu.memory_space<vmem>>, vector<128x32xf32>
    %cst_194 = arith.constant dense<0.000000e+00> : vector<16x128xf32>
    %420 = tpu.matmul %418, %419, %cst_194 {dimension_numbers = #tpu.dot_dimension_numbers<[1], [1], [0], [0], [0, 0, 1, 0], [], []>} : vector<16x32xf32>, vector<128x32xf32>, vector<16x128xf32> -> vector<16x128xf32>
    %c0_195 = arith.constant 0 : index
    %c0_196 = arith.constant 0 : index
    %421 = vector.load %arg27[%c0_195, %c0_196] : memref<1x128xf32, #tpu.memory_space<vmem>>, vector<1x128xf32>
    %422 = vector.broadcast %421 : vector<1x128xf32> to vector<16x128xf32>
    %423 = arith.addf %420, %422 : vector<16x128xf32>
    %c0_197 = arith.constant 0 : index
    %c0_198 = arith.constant 0 : index
    %c0_199 = arith.constant 0 : index
    %424 = vector.load %arg28[%c0_197, %c0_198, %c0_199] : memref<1x16x128xf32, #tpu.memory_space<vmem>>, vector<1x16x128xf32>
    %425 = vector.shape_cast %424 : vector<1x16x128xf32> to vector<16x128xf32>
    %426 = vector.shape_cast %423 : vector<16x128xf32> to vector<1x16x128xf32>
    tpu.vector_store %arg28[%c0_197, %c0_198, %c0_199], %426 {strides = array<i32>} : memref<1x16x128xf32, #tpu.memory_space<vmem>>, vector<1x16x128xf32>,
    return
  }
  func.func @transform_0(%arg0: i32) -> (i32, i32, i32) {
    %c0_i32 = arith.constant 0 : i32
    %c0_i32_0 = arith.constant 0 : i32
    %c0_i32_1 = arith.constant 0 : i32
    return %arg0, %c0_i32, %c0_i32_0 : i32, i32, i32
  }
  func.func @transform_1(%arg0: i32) -> (i32, i32, i32) {
    %c0_i32 = arith.constant 0 : i32
    %c0_i32_0 = arith.constant 0 : i32
    %c0_i32_1 = arith.constant 0 : i32
    return %arg0, %c0_i32, %c0_i32_0 : i32, i32, i32
  }
  func.func @transform_2(%arg0: i32) -> (i32, i32, i32) {
    %c0_i32 = arith.constant 0 : i32
    %c0_i32_0 = arith.constant 0 : i32
    %c0_i32_1 = arith.constant 0 : i32
    return %arg0, %c0_i32, %c0_i32_0 : i32, i32, i32
  }
  func.func @transform_3(%arg0: i32) -> (i32, i32, i32) {
    %c0_i32 = arith.constant 0 : i32
    %c0_i32_0 = arith.constant 0 : i32
    %c0_i32_1 = arith.constant 0 : i32
    return %arg0, %c0_i32, %c0_i32_0 : i32, i32, i32
  }
  func.func @transform_4(%arg0: i32) -> (i32, i32) {
    %c0_i32 = arith.constant 0 : i32
    %c0_i32_0 = arith.constant 0 : i32
    %c0_i32_1 = arith.constant 0 : i32
    return %c0_i32, %c0_i32_0 : i32, i32
  }
  func.func @transform_5(%arg0: i32) -> (i32, i32) {
    %c0_i32 = arith.constant 0 : i32
    %c0_i32_0 = arith.constant 0 : i32
    %c0_i32_1 = arith.constant 0 : i32
    return %c0_i32, %c0_i32_0 : i32, i32
  }
  func.func @transform_6(%arg0: i32) -> (i32, i32) {
    %c0_i32 = arith.constant 0 : i32
    %c0_i32_0 = arith.constant 0 : i32
    %c0_i32_1 = arith.constant 0 : i32
    return %c0_i32, %c0_i32_0 : i32, i32
  }
  func.func @transform_7(%arg0: i32) -> (i32, i32) {
    %c0_i32 = arith.constant 0 : i32
    %c0_i32_0 = arith.constant 0 : i32
    %c0_i32_1 = arith.constant 0 : i32
    return %c0_i32, %c0_i32_0 : i32, i32
  }
  func.func @transform_8(%arg0: i32) -> (i32, i32) {
    %c0_i32 = arith.constant 0 : i32
    %c0_i32_0 = arith.constant 0 : i32
    %c0_i32_1 = arith.constant 0 : i32
    return %c0_i32, %c0_i32_0 : i32, i32
  }
  func.func @transform_9(%arg0: i32) -> (i32, i32) {
    %c0_i32 = arith.constant 0 : i32
    %c0_i32_0 = arith.constant 0 : i32
    %c0_i32_1 = arith.constant 0 : i32
    return %c0_i32, %c0_i32_0 : i32, i32
  }
  func.func @transform_10(%arg0: i32) -> (i32, i32, i32) {
    %c0_i32 = arith.constant 0 : i32
    %c0_i32_0 = arith.constant 0 : i32
    %c0_i32_1 = arith.constant 0 : i32
    %c0_i32_2 = arith.constant 0 : i32
    return %c0_i32, %c0_i32_0, %c0_i32_1 : i32, i32, i32
  }
  func.func @transform_11(%arg0: i32) -> (i32, i32, i32) {
    %c0_i32 = arith.constant 0 : i32
    %c0_i32_0 = arith.constant 0 : i32
    %c0_i32_1 = arith.constant 0 : i32
    %c0_i32_2 = arith.constant 0 : i32
    return %c0_i32, %c0_i32_0, %c0_i32_1 : i32, i32, i32
  }
  func.func @transform_12(%arg0: i32) -> (i32, i32, i32) {
    %c0_i32 = arith.constant 0 : i32
    %c0_i32_0 = arith.constant 0 : i32
    %c0_i32_1 = arith.constant 0 : i32
    %c0_i32_2 = arith.constant 0 : i32
    return %c0_i32, %c0_i32_0, %c0_i32_1 : i32, i32, i32
  }
  func.func @transform_13(%arg0: i32) -> (i32, i32, i32) {
    %c0_i32 = arith.constant 0 : i32
    %c0_i32_0 = arith.constant 0 : i32
    %c0_i32_1 = arith.constant 0 : i32
    %c0_i32_2 = arith.constant 0 : i32
    return %c0_i32, %c0_i32_0, %c0_i32_1 : i32, i32, i32
  }
  func.func @transform_14(%arg0: i32) -> (i32, i32, i32) {
    %c0_i32 = arith.constant 0 : i32
    %c0_i32_0 = arith.constant 0 : i32
    %c0_i32_1 = arith.constant 0 : i32
    %c0_i32_2 = arith.constant 0 : i32
    return %c0_i32, %c0_i32_0, %c0_i32_1 : i32, i32, i32
  }
  func.func @transform_15(%arg0: i32) -> (i32, i32, i32) {
    %c0_i32 = arith.constant 0 : i32
    %c0_i32_0 = arith.constant 0 : i32
    %c0_i32_1 = arith.constant 0 : i32
    %c0_i32_2 = arith.constant 0 : i32
    return %c0_i32, %c0_i32_0, %c0_i32_1 : i32, i32, i32
  }
  func.func @transform_16(%arg0: i32) -> (i32, i32, i32) {
    %c0_i32 = arith.constant 0 : i32
    %c0_i32_0 = arith.constant 0 : i32
    %c0_i32_1 = arith.constant 0 : i32
    %c0_i32_2 = arith.constant 0 : i32
    return %c0_i32, %c0_i32_0, %c0_i32_1 : i32, i32, i32
  }
  func.func @transform_17(%arg0: i32) -> (i32, i32, i32) {
    %c0_i32 = arith.constant 0 : i32
    %c0_i32_0 = arith.constant 0 : i32
    %c0_i32_1 = arith.constant 0 : i32
    %c0_i32_2 = arith.constant 0 : i32
    return %c0_i32, %c0_i32_0, %c0_i32_1 : i32, i32, i32
  }
  func.func @transform_18(%arg0: i32) -> (i32, i32, i32) {
    %c0_i32 = arith.constant 0 : i32
    %c0_i32_0 = arith.constant 0 : i32
    %c0_i32_1 = arith.constant 0 : i32
    %c0_i32_2 = arith.constant 0 : i32
    return %c0_i32, %c0_i32_0, %c0_i32_1 : i32, i32, i32
  }
  func.func @transform_19(%arg0: i32) -> (i32, i32, i32) {
    %c0_i32 = arith.constant 0 : i32
    %c0_i32_0 = arith.constant 0 : i32
    %c0_i32_1 = arith.constant 0 : i32
    %c0_i32_2 = arith.constant 0 : i32
    return %c0_i32, %c0_i32_0, %c0_i32_1 : i32, i32, i32
  }
  func.func @transform_20(%arg0: i32) -> (i32, i32, i32) {
    %c0_i32 = arith.constant 0 : i32
    %c0_i32_0 = arith.constant 0 : i32
    %c0_i32_1 = arith.constant 0 : i32
    %c0_i32_2 = arith.constant 0 : i32
    return %c0_i32, %c0_i32_0, %c0_i32_1 : i32, i32, i32
  }
  func.func @transform_21(%arg0: i32) -> (i32, i32, i32) {
    %c0_i32 = arith.constant 0 : i32
    %c0_i32_0 = arith.constant 0 : i32
    %c0_i32_1 = arith.constant 0 : i32
    %c0_i32_2 = arith.constant 0 : i32
    return %c0_i32, %c0_i32_0, %c0_i32_1 : i32, i32, i32
  }
  func.func @transform_22(%arg0: i32) -> (i32, i32) {
    %c0_i32 = arith.constant 0 : i32
    %c0_i32_0 = arith.constant 0 : i32
    %c0_i32_1 = arith.constant 0 : i32
    return %c0_i32, %c0_i32_0 : i32, i32
  }
  func.func @transform_23(%arg0: i32) -> (i32, i32) {
    %c0_i32 = arith.constant 0 : i32
    %c0_i32_0 = arith.constant 0 : i32
    %c0_i32_1 = arith.constant 0 : i32
    return %c0_i32, %c0_i32_0 : i32, i32
  }
  func.func @transform_24(%arg0: i32) -> (i32, i32) {
    %c0_i32 = arith.constant 0 : i32
    %c0_i32_0 = arith.constant 0 : i32
    %c0_i32_1 = arith.constant 0 : i32
    return %c0_i32, %c0_i32_0 : i32, i32
  }
  func.func @transform_25(%arg0: i32) -> (i32, i32) {
    %c0_i32 = arith.constant 0 : i32
    %c0_i32_0 = arith.constant 0 : i32
    %c0_i32_1 = arith.constant 0 : i32
    return %c0_i32, %c0_i32_0 : i32, i32
  }
  func.func @transform_26(%arg0: i32) -> (i32, i32) {
    %c0_i32 = arith.constant 0 : i32
    %c0_i32_0 = arith.constant 0 : i32
    %c0_i32_1 = arith.constant 0 : i32
    return %c0_i32, %c0_i32_0 : i32, i32
  }
  func.func @transform_27(%arg0: i32) -> (i32, i32, i32) {
    %c0_i32 = arith.constant 0 : i32
    %c0_i32_0 = arith.constant 0 : i32
    %c0_i32_1 = arith.constant 0 : i32
    return %arg0, %c0_i32, %c0_i32_0 : i32, i32, i32
  }
}

</mosaic_0001>

<llo_original>
// kernel: unilm_forward.1
$region0: #{unilm_forward.1}
  #allocation0 [shape = 'u32[]', space=smem, size = 0x4, offset = 0x4, fixed_abs, tag = 'smem constant byte address 0x4 - core index']
  #allocation1 [shape = 'u32[144,128]{1,0:T(1,128)}', space=vmem, size = 0x12000, scoped, tag = 'internal scratch']
  %s0 = inlined_call_operand.vmem [shape: s32[2,16,1], index: 0, kind: input, shape index: {}]
  %s1 = inlined_call_operand.vmem [shape: f32[2,16,1], index: 1, kind: input, shape index: {}]
  %s2 = inlined_call_operand.vmem [shape: f32[2,16,1], index: 2, kind: input, shape index: {}]
  %s3 = inlined_call_operand.vmem [shape: f32[2,1,16], index: 3, kind: input, shape index: {}]
  %s4 = inlined_call_operand.vmem [shape: f32[128,32], index: 4, kind: input, shape index: {}]
  %s5 = inlined_call_operand.vmem [shape: f32[16,32], index: 5, kind: input, shape index: {}]
  %s6 = inlined_call_operand.vmem [shape: f32[1,32], index: 6, kind: input, shape index: {}]
  %s7 = inlined_call_operand.vmem [shape: f32[1,32], index: 7, kind: input, shape index: {}]
  %s8 = inlined_call_operand.vmem [shape: f32[1,32], index: 8, kind: input, shape index: {}]
  %s9 = inlined_call_operand.vmem [shape: f32[1,32], index: 9, kind: input, shape index: {}]
  %s10 = inlined_call_operand.vmem [shape: f32[2,32,96], index: 10, kind: input, shape index: {}]
  %s11 = inlined_call_operand.vmem [shape: f32[2,1,96], index: 11, kind: input, shape index: {}]
  %s12 = inlined_call_operand.vmem [shape: f32[2,32,32], index: 12, kind: input, shape index: {}]
  %s13 = inlined_call_operand.vmem [shape: f32[2,1,32], index: 13, kind: input, shape index: {}]
  %s14 = inlined_call_operand.vmem [shape: f32[2,1,32], index: 14, kind: input, shape index: {}]
  %s15 = inlined_call_operand.vmem [shape: f32[2,1,32], index: 15, kind: input, shape index: {}]
  %s16 = inlined_call_operand.vmem [shape: f32[2,32,64], index: 16, kind: input, shape index: {}]
  %s17 = inlined_call_operand.vmem [shape: f32[2,1,64], index: 17, kind: input, shape index: {}]
  %s18 = inlined_call_operand.vmem [shape: f32[2,64,32], index: 18, kind: input, shape index: {}]
  %s19 = inlined_call_operand.vmem [shape: f32[2,1,32], index: 19, kind: input, shape index: {}]
  %s20 = inlined_call_operand.vmem [shape: f32[2,1,32], index: 20, kind: input, shape index: {}]
  %s21 = inlined_call_operand.vmem [shape: f32[2,1,32], index: 21, kind: input, shape index: {}]
  %s22 = inlined_call_operand.vmem [shape: f32[32,32], index: 22, kind: input, shape index: {}]
  %s23 = inlined_call_operand.vmem [shape: f32[1,32], index: 23, kind: input, shape index: {}]
  %s24 = inlined_call_operand.vmem [shape: f32[1,32], index: 24, kind: input, shape index: {}]
  %s25 = inlined_call_operand.vmem [shape: f32[1,32], index: 25, kind: input, shape index: {}]
  %s26 = inlined_call_operand.vmem [shape: f32[1,128], index: 26, kind: input, shape index: {}]
  %s27 = inlined_call_operand.hbm [shape: f32[2,16,128], index: 27, kind: output, shape index: {}]
  %s28 = sld [smem:[#allocation0]]
  $region141: #{unilm_forward.1} parent=0
    _
  %s30 = ssub.s32 1, %s28
  %s31 = scalar_select 0, %s30, %s28
  $region1: #{unilm_forward.1} parent=0
    #allocation2 [shape = 'u8[16384]{0}', space=vmem, size = 0x4000, scoped, tag = 'output window, operand 0']
    #allocation3 [shape = 's32[2]{0}', space=sflag, size = 0x8, scoped, tag = 'scoped memory for unilm_forward.1']
    %32 = vsyncpa [#allocation3], 0
    %s33 = scalar_lea.sflag [#allocation3], 1
    %34 = vsyncpa %s33, 0
    loop: start=0, step=1, limit=4
    $region2: #{unilm_forward.1} parent=1 // loop_pre_header
      _
    $region3: #{unilm_forward.1} parent=1 // loop_header
      %s36 = sphi 0, %s40
      %p37 = scmp.ge.s32.totalorder %s36, 4
      %s46 = sphi 0, %s48
      %s49 = sphi 0, %s46
      %s50 = sphi 0, %s49
      %s66 = sphi 0, %s50
      %s72 = sphi 0, %s74
      %s75 = sphi 0, %s72
      %s76 = sphi 0, %s75
      %s92 = sphi 0, %s76
      %s98 = sphi 0, %s100
      %s101 = sphi 0, %s98
      %s102 = sphi 0, %s101
      %s118 = sphi 0, %s102
      %s124 = sphi 0, %s126
      %s127 = sphi 0, %s124
      %s128 = sphi 0, %s127
      %s144 = sphi 0, %s128
      %s148 = sphi 0, %s148
      %s150 = sphi 0, %s148
      %s151 = sphi 0, %s150
      %s165 = sphi 0, %s151
      %s169 = sphi 0, %s169
      %s171 = sphi 0, %s169
      %s172 = sphi 0, %s171
      %s186 = sphi 0, %s172
      %s190 = sphi 0, %s190
      %s192 = sphi 0, %s190
      %s193 = sphi 0, %s192
      %s207 = sphi 0, %s193
      %s211 = sphi 0, %s211
      %s213 = sphi 0, %s211
      %s214 = sphi 0, %s213
      %s228 = sphi 0, %s214
      %s232 = sphi 0, %s232
      %s234 = sphi 0, %s232
      %s235 = sphi 0, %s234
      %s249 = sphi 0, %s235
      %s253 = sphi 0, %s253
      %s255 = sphi 0, %s253
      %s256 = sphi 0, %s255
      %s270 = sphi 0, %s256
      %s274 = sphi 0, %s274
      %s276 = sphi 0, %s274
      %s277 = sphi 0, %s276
      %s291 = sphi 0, %s277
      %s295 = sphi 0, %s295
      %s297 = sphi 0, %s295
      %s298 = sphi 0, %s297
      %s312 = sphi 0, %s298
      %s316 = sphi 0, %s316
      %s318 = sphi 0, %s316
      %s319 = sphi 0, %s318
      %s333 = sphi 0, %s319
      %s337 = sphi 0, %s337
      %s339 = sphi 0, %s337
      %s340 = sphi 0, %s339
      %s354 = sphi 0, %s340
      %s358 = sphi 0, %s358
      %s360 = sphi 0, %s358
      %s361 = sphi 0, %s360
      %s375 = sphi 0, %s361
      %s379 = sphi 0, %s379
      %s381 = sphi 0, %s379
      %s382 = sphi 0, %s381
      %s396 = sphi 0, %s382
      %s400 = sphi 0, %s400
      %s402 = sphi 0, %s400
      %s403 = sphi 0, %s402
      %s417 = sphi 0, %s403
      %s421 = sphi 0, %s421
      %s423 = sphi 0, %s421
      %s424 = sphi 0, %s423
      %s438 = sphi 0, %s424
      %s442 = sphi 0, %s442
      %s444 = sphi 0, %s442
      %s445 = sphi 0, %s444
      %s459 = sphi 0, %s445
      %s463 = sphi 0, %s463
      %s465 = sphi 0, %s463
      %s466 = sphi 0, %s465
      %s480 = sphi 0, %s466
      %s484 = sphi 0, %s484
      %s486 = sphi 0, %s484
      %s487 = sphi 0, %s486
      %s501 = sphi 0, %s487
      %s505 = sphi 0, %s505
      %s507 = sphi 0, %s505
      %s508 = sphi 0, %s507
      %s522 = sphi 0, %s508
      %s526 = sphi 0, %s526
      %s528 = sphi 0, %s526
      %s529 = sphi 0, %s528
      %s543 = sphi 0, %s529
      %s547 = sphi 0, %s547
      %s549 = sphi 0, %s547
      %s550 = sphi 0, %s549
      %s564 = sphi 0, %s550
      %s568 = sphi 0, %s568
      %s570 = sphi 0, %s568
      %s571 = sphi 0, %s570
      %s585 = sphi 0, %s571
      %s589 = sphi 0, %s589
      %s591 = sphi 0, %s589
      %s592 = sphi 0, %s591
      %s606 = sphi 0, %s592
      %s610 = sphi 0, %s610
      %s612 = sphi 0, %s610
      %s613 = sphi 0, %s612
      %s627 = sphi 0, %s613
      %s633 = sphi 0, %s635
      %s636 = sphi 0, %s633
      %s637 = sphi 0, %s636
      %s653 = sphi 0, %s637
    $region4: #{unilm_forward.1} parent=1 // loop_header_branch
      %39 = sbr.rel (%p37) target = $region8
    $region5: #{unilm_forward.1} parent=1 // loop_body
      %s41 = ssub.s32 %s36, 1
      %s42 = ssub.s32 %s36, 2
      %s43 = sadd.s32 %s36, 1
      %s44 = ssub.s32 %s36, %s43
      %p45 = scmp.eq.s32.totalorder %s44, 0
      %s47 = sadd.s32 %s46, 1
      %s48 = scalar_select %p45, %s46, %s47
      %p51 = pneg %p45
      %p52 = scmp.eq.s32.totalorder %s36, 1
      %p53 = por %p51, %p52
      %p54 = scmp.ne.s32.totalorder %s46, %s49
      %p55 = scmp.eq.s32.totalorder %s36, 0
      %p56 = por %p54, %p55
      %p57 = scmp.ne.s32.totalorder %s46, %s49
      %p58 = scmp.eq.s32.totalorder %s41, 1
      %p59 = por %p57, %p58
      %p60 = scmp.ne.s32.totalorder %s49, %s50
      %p61 = scmp.eq.s32.totalorder %s41, 0
      %p62 = por %p60, %p61
      %p63 = scmp.ne.s32.totalorder %s49, %s50
      %p64 = scmp.eq.s32.totalorder %s42, 1
      %p65 = por %p63, %p64
      %p67 = scmp.ne.s32.totalorder %s50, %s66
      %p68 = scmp.eq.s32.totalorder %s42, 0
      %p69 = por %p67, %p68
      %s70 = ssub.s32 %s36, %s43
      %p71 = scmp.eq.s32.totalorder %s70, 0
      %s73 = sadd.s32 %s72, 1
      %s74 = scalar_select %p71, %s72, %s73
      %p77 = pneg %p71
      %p78 = scmp.eq.s32.totalorder %s36, 1
      %p79 = por %p77, %p78
      %p80 = scmp.ne.s32.totalorder %s72, %s75
      %p81 = scmp.eq.s32.totalorder %s36, 0
      %p82 = por %p80, %p81
      %p83 = scmp.ne.s32.totalorder %s72, %s75
      %p84 = scmp.eq.s32.totalorder %s41, 1
      %p85 = por %p83, %p84
      %p86 = scmp.ne.s32.totalorder %s75, %s76
      %p87 = scmp.eq.s32.totalorder %s41, 0
      %p88 = por %p86, %p87
      %p89 = scmp.ne.s32.totalorder %s75, %s76
      %p90 = scmp.eq.s32.totalorder %s42, 1
      %p91 = por %p89, %p90
      %p93 = scmp.ne.s32.totalorder %s76, %s92
      %p94 = scmp.eq.s32.totalorder %s42, 0
      %p95 = por %p93, %p94
      %s96 = ssub.s32 %s36, %s43
      %p97 = scmp.eq.s32.totalorder %s96, 0
      %s99 = sadd.s32 %s98, 1
      %s100 = scalar_select %p97, %s98, %s99
      %p103 = pneg %p97
      %p104 = scmp.eq.s32.totalorder %s36, 1
      %p105 = por %p103, %p104
      %p106 = scmp.ne.s32.totalorder %s98, %s101
      %p107 = scmp.eq.s32.totalorder %s36, 0
      %p108 = por %p106, %p107
      %p109 = scmp.ne.s32.totalorder %s98, %s101
      %p110 = scmp.eq.s32.totalorder %s41, 1
      %p111 = por %p109, %p110
      %p112 = scmp.ne.s32.totalorder %s101, %s102
      %p113 = scmp.eq.s32.totalorder %s41, 0
      %p114 = por %p112, %p113
      %p115 = scmp.ne.s32.totalorder %s101, %s102
      %p116 = scmp.eq.s32.totalorder %s42, 1
      %p117 = por %p115, %p116
      %p119 = scmp.ne.s32.totalorder %s102, %s118
      %p120 = scmp.eq.s32.totalorder %s42, 0
      %p121 = por %p119, %p120
      %s122 = ssub.s32 %s36, %s43
      %p123 = scmp.eq.s32.totalorder %s122, 0
      %s125 = sadd.s32 %s124, 1
      %s126 = scalar_select %p123, %s124, %s125
      %p129 = pneg %p123
      %p130 = scmp.eq.s32.totalorder %s36, 1
      %p131 = por %p129, %p130
      %p132 = scmp.ne.s32.totalorder %s124, %s127
      %p133 = scmp.eq.s32.totalorder %s36, 0
      %p134 = por %p132, %p133
      %p135 = scmp.ne.s32.totalorder %s124, %s127
      %p136 = scmp.eq.s32.totalorder %s41, 1
      %p137 = por %p135, %p136
      %p138 = scmp.ne.s32.totalorder %s127, %s128
      %p139 = scmp.eq.s32.totalorder %s41, 0
      %p140 = por %p138, %p139
      %p141 = scmp.ne.s32.totalorder %s127, %s128
      %p142 = scmp.eq.s32.totalorder %s42, 1
      %p143 = por %p141, %p142
      %p145 = scmp.ne.s32.totalorder %s128, %s144
      %p146 = scmp.eq.s32.totalorder %s42, 0
      %p147 = por %p145, %p146
      %s149 = sadd.s32 %s148, 1
      %p152 = scmp.eq.s32.totalorder %s36, 1
      %p153 = scmp.ne.s32.totalorder %s148, %s150
      %p154 = scmp.eq.s32.totalorder %s36, 0
      %p155 = por %p153, %p154
      %p156 = scmp.ne.s32.totalorder %s148, %s150
      %p157 = scmp.eq.s32.totalorder %s41, 1
      %p158 = por %p156, %p157
      %p159 = scmp.ne.s32.totalorder %s150, %s151
      %p160 = scmp.eq.s32.totalorder %s41, 0
      %p161 = por %p159, %p160
      %p162 = scmp.ne.s32.totalorder %s150, %s151
      %p163 = scmp.eq.s32.totalorder %s42, 1
      %p164 = por %p162, %p163
      %p166 = scmp.ne.s32.totalorder %s151, %s165
      %p167 = scmp.eq.s32.totalorder %s42, 0
      %p168 = por %p166, %p167
      %s170 = sadd.s32 %s169, 1
      %p173 = scmp.eq.s32.totalorder %s36, 1
      %p174 = scmp.ne.s32.totalorder %s169, %s171
      %p175 = scmp.eq.s32.totalorder %s36, 0
      %p176 = por %p174, %p175
      %p177 = scmp.ne.s32.totalorder %s169, %s171
      %p178 = scmp.eq.s32.totalorder %s41, 1
      %p179 = por %p177, %p178
      %p180 = scmp.ne.s32.totalorder %s171, %s172
      %p181 = scmp.eq.s32.totalorder %s41, 0
      %p182 = por %p180, %p181
      %p183 = scmp.ne.s32.totalorder %s171, %s172
      %p184 = scmp.eq.s32.totalorder %s42, 1
      %p185 = por %p183, %p184
      %p187 = scmp.ne.s32.totalorder %s172, %s186
      %p188 = scmp.eq.s32.totalorder %s42, 0
      %p189 = por %p187, %p188
      %s191 = sadd.s32 %s190, 1
      %p194 = scmp.eq.s32.totalorder %s36, 1
      %p195 = scmp.ne.s32.totalorder %s190, %s192
      %p196 = scmp.eq.s32.totalorder %s36, 0
      %p197 = por %p195, %p196
      %p198 = scmp.ne.s32.totalorder %s190, %s192
      %p199 = scmp.eq.s32.totalorder %s41, 1
      %p200 = por %p198, %p199
      %p201 = scmp.ne.s32.totalorder %s192, %s193
      %p202 = scmp.eq.s32.totalorder %s41, 0
      %p203 = por %p201, %p202
      %p204 = scmp.ne.s32.totalorder %s192, %s193
      %p205 = scmp.eq.s32.totalorder %s42, 1
      %p206 = por %p204, %p205
      %p208 = scmp.ne.s32.totalorder %s193, %s207
      %p209 = scmp.eq.s32.totalorder %s42, 0
      %p210 = por %p208, %p209
      %s212 = sadd.s32 %s211, 1
      %p215 = scmp.eq.s32.totalorder %s36, 1
      %p216 = scmp.ne.s32.totalorder %s211, %s213
      %p217 = scmp.eq.s32.totalorder %s36, 0
      %p218 = por %p216, %p217
      %p219 = scmp.ne.s32.totalorder %s211, %s213
      %p220 = scmp.eq.s32.totalorder %s41, 1
      %p221 = por %p219, %p220
      %p222 = scmp.ne.s32.totalorder %s213, %s214
      %p223 = scmp.eq.s32.totalorder %s41, 0
      %p224 = por %p222, %p223
      %p225 = scmp.ne.s32.totalorder %s213, %s214
      %p226 = scmp.eq.s32.totalorder %s42, 1
      %p227 = por %p225, %p226
      %p229 = scmp.ne.s32.totalorder %s214, %s228
      %p230 = scmp.eq.s32.totalorder %s42, 0
      %p231 = por %p229, %p230
      %s233 = sadd.s32 %s232, 1
      %p236 = scmp.eq.s32.totalorder %s36, 1
      %p237 = scmp.ne.s32.totalorder %s232, %s234
      %p238 = scmp.eq.s32.totalorder %s36, 0
      %p239 = por %p237, %p238
      %p240 = scmp.ne.s32.totalorder %s232, %s234
      %p241 = scmp.eq.s32.totalorder %s41, 1
      %p242 = por %p240, %p241
      %p243 = scmp.ne.s32.totalorder %s234, %s235
      %p244 = scmp.eq.s32.totalorder %s41, 0
      %p245 = por %p243, %p244
      %p246 = scmp.ne.s32.totalorder %s234, %s235
      %p247 = scmp.eq.s32.totalorder %s42, 1
      %p248 = por %p246, %p247
      %p250 = scmp.ne.s32.totalorder %s235, %s249
      %p251 = scmp.eq.s32.totalorder %s42, 0
      %p252 = por %p250, %p251
      %s254 = sadd.s32 %s253, 1
      %p257 = scmp.eq.s32.totalorder %s36, 1
      %p258 = scmp.ne.s32.totalorder %s253, %s255
      %p259 = scmp.eq.s32.totalorder %s36, 0
      %p260 = por %p258, %p259
      %p261 = scmp.ne.s32.totalorder %s253, %s255
      %p262 = scmp.eq.s32.totalorder %s41, 1
      %p263 = por %p261, %p262
      %p264 = scmp.ne.s32.totalorder %s255, %s256
      %p265 = scmp.eq.s32.totalorder %s41, 0
      %p266 = por %p264, %p265
      %p267 = scmp.ne.s32.totalorder %s255, %s256
      %p268 = scmp.eq.s32.totalorder %s42, 1
      %p269 = por %p267, %p268
      %p271 = scmp.ne.s32.totalorder %s256, %s270
      %p272 = scmp.eq.s32.totalorder %s42, 0
      %p273 = por %p271, %p272
      %s275 = sadd.s32 %s274, 1
      %p278 = scmp.eq.s32.totalorder %s36, 1
      %p279 = scmp.ne.s32.totalorder %s274, %s276
      %p280 = scmp.eq.s32.totalorder %s36, 0
      %p281 = por %p279, %p280
      %p282 = scmp.ne.s32.totalorder %s274, %s276
      %p283 = scmp.eq.s32.totalorder %s41, 1
      %p284 = por %p282, %p283
      %p285 = scmp.ne.s32.totalorder %s276, %s277
      %p286 = scmp.eq.s32.totalorder %s41, 0
      %p287 = por %p285, %p286
      %p288 = scmp.ne.s32.totalorder %s276, %s277
      %p289 = scmp.eq.s32.totalorder %s42, 1
      %p290 = por %p288, %p289
      %p292 = scmp.ne.s32.totalorder %s277, %s291
      %p293 = scmp.eq.s32.totalorder %s42, 0
      %p294 = por %p292, %p293
      %s296 = sadd.s32 %s295, 1
      %p299 = scmp.eq.s32.totalorder %s36, 1
      %p300 = scmp.ne.s32.totalorder %s295, %s297
      %p301 = scmp.eq.s32.totalorder %s36, 0
      %p302 = por %p300, %p301
      %p303 = scmp.ne.s32.totalorder %s295, %s297
      %p304 = scmp.eq.s32.totalorder %s41, 1
      %p305 = por %p303, %p304
      %p306 = scmp.ne.s32.totalorder %s297, %s298
      %p307 = scmp.eq.s32.totalorder %s41, 0
      %p308 = por %p306, %p307
      %p309 = scmp.ne.s32.totalorder %s297, %s298
      %p310 = scmp.eq.s32.totalorder %s42, 1
      %p311 = por %p309, %p310
      %p313 = scmp.ne.s32.totalorder %s298, %s312
      %p314 = scmp.eq.s32.totalorder %s42, 0
      %p315 = por %p313, %p314
      %s317 = sadd.s32 %s316, 1
      %p320 = scmp.eq.s32.totalorder %s36, 1
      %p321 = scmp.ne.s32.totalorder %s316, %s318
      %p322 = scmp.eq.s32.totalorder %s36, 0
      %p323 = por %p321, %p322
      %p324 = scmp.ne.s32.totalorder %s316, %s318
      %p325 = scmp.eq.s32.totalorder %s41, 1
      %p326 = por %p324, %p325
      %p327 = scmp.ne.s32.totalorder %s318, %s319
      %p328 = scmp.eq.s32.totalorder %s41, 0
      %p329 = por %p327, %p328
      %p330 = scmp.ne.s32.totalorder %s318, %s319
      %p331 = scmp.eq.s32.totalorder %s42, 1
      %p332 = por %p330, %p331
      %p334 = scmp.ne.s32.totalorder %s319, %s333
      %p335 = scmp.eq.s32.totalorder %s42, 0
      %p336 = por %p334, %p335
      %s338 = sadd.s32 %s337, 1
      %p341 = scmp.eq.s32.totalorder %s36, 1
      %p342 = scmp.ne.s32.totalorder %s337, %s339
      %p343 = scmp.eq.s32.totalorder %s36, 0
      %p344 = por %p342, %p343
      %p345 = scmp.ne.s32.totalorder %s337, %s339
      %p346 = scmp.eq.s32.totalorder %s41, 1
      %p347 = por %p345, %p346
      %p348 = scmp.ne.s32.totalorder %s339, %s340
      %p349 = scmp.eq.s32.totalorder %s41, 0
      %p350 = por %p348, %p349
      %p351 = scmp.ne.s32.totalorder %s339, %s340
      %p352 = scmp.eq.s32.totalorder %s42, 1
      %p353 = por %p351, %p352
      %p355 = scmp.ne.s32.totalorder %s340, %s354
      %p356 = scmp.eq.s32.totalorder %s42, 0
      %p357 = por %p355, %p356
      %s359 = sadd.s32 %s358, 1
      %p362 = scmp.eq.s32.totalorder %s36, 1
      %p363 = scmp.ne.s32.totalorder %s358, %s360
      %p364 = scmp.eq.s32.totalorder %s36, 0
      %p365 = por %p363, %p364
      %p366 = scmp.ne.s32.totalorder %s358, %s360
      %p367 = scmp.eq.s32.totalorder %s41, 1
      %p368 = por %p366, %p367
      %p369 = scmp.ne.s32.totalorder %s360, %s361
      %p370 = scmp.eq.s32.totalorder %s41, 0
      %p371 = por %p369, %p370
      %p372 = scmp.ne.s32.totalorder %s360, %s361
      %p373 = scmp.eq.s32.totalorder %s42, 1
      %p374 = por %p372, %p373
      %p376 = scmp.ne.s32.totalorder %s361, %s375
      %p377 = scmp.eq.s32.totalorder %s42, 0
      %p378 = por %p376, %p377
      %s380 = sadd.s32 %s379, 1
      %p383 = scmp.eq.s32.totalorder %s36, 1
      %p384 = scmp.ne.s32.totalorder %s379, %s381
      %p385 = scmp.eq.s32.totalorder %s36, 0
      %p386 = por %p384, %p385
      %p387 = scmp.ne.s32.totalorder %s379, %s381
      %p388 = scmp.eq.s32.totalorder %s41, 1
      %p389 = por %p387, %p388
      %p390 = scmp.ne.s32.totalorder %s381, %s382
      %p391 = scmp.eq.s32.totalorder %s41, 0
      %p392 = por %p390, %p391
      %p393 = scmp.ne.s32.totalorder %s381, %s382
      %p394 = scmp.eq.s32.totalorder %s42, 1
      %p395 = por %p393, %p394
      %p397 = scmp.ne.s32.totalorder %s382, %s396
      %p398 = scmp.eq.s32.totalorder %s42, 0
      %p399 = por %p397, %p398
      %s401 = sadd.s32 %s400, 1
      %p404 = scmp.eq.s32.totalorder %s36, 1
      %p405 = scmp.ne.s32.totalorder %s400, %s402
      %p406 = scmp.eq.s32.totalorder %s36, 0
      %p407 = por %p405, %p406
      %p408 = scmp.ne.s32.totalorder %s400, %s402
      %p409 = scmp.eq.s32.totalorder %s41, 1
      %p410 = por %p408, %p409
      %p411 = scmp.ne.s32.totalorder %s402, %s403
      %p412 = scmp.eq.s32.totalorder %s41, 0
      %p413 = por %p411, %p412
      %p414 = scmp.ne.s32.totalorder %s402, %s403
      %p415 = scmp.eq.s32.totalorder %s42, 1
      %p416 = por %p414, %p415
      %p418 = scmp.ne.s32.totalorder %s403, %s417
      %p419 = scmp.eq.s32.totalorder %s42, 0
      %p420 = por %p418, %p419
      %s422 = sadd.s32 %s421, 1
      %p425 = scmp.eq.s32.totalorder %s36, 1
      %p426 = scmp.ne.s32.totalorder %s421, %s423
      %p427 = scmp.eq.s32.totalorder %s36, 0
      %p428 = por %p426, %p427
      %p429 = scmp.ne.s32.totalorder %s421, %s423
      %p430 = scmp.eq.s32.totalorder %s41, 1
      %p431 = por %p429, %p430
      %p432 = scmp.ne.s32.totalorder %s423, %s424
      %p433 = scmp.eq.s32.totalorder %s41, 0
      %p434 = por %p432, %p433
      %p435 = scmp.ne.s32.totalorder %s423, %s424
      %p436 = scmp.eq.s32.totalorder %s42, 1
      %p437 = por %p435, %p436
      %p439 = scmp.ne.s32.totalorder %s424, %s438
      %p440 = scmp.eq.s32.totalorder %s42, 0
      %p441 = por %p439, %p440
      %s443 = sadd.s32 %s442, 1
      %p446 = scmp.eq.s32.totalorder %s36, 1
      %p447 = scmp.ne.s32.totalorder %s442, %s444
      %p448 = scmp.eq.s32.totalorder %s36, 0
      %p449 = por %p447, %p448
      %p450 = scmp.ne.s32.totalorder %s442, %s444
      %p451 = scmp.eq.s32.totalorder %s41, 1
      %p452 = por %p450, %p451
      %p453 = scmp.ne.s32.totalorder %s444, %s445
      %p454 = scmp.eq.s32.totalorder %s41, 0
      %p455 = por %p453, %p454
      %p456 = scmp.ne.s32.totalorder %s444, %s445
      %p457 = scmp.eq.s32.totalorder %s42, 1
      %p458 = por %p456, %p457
      %p460 = scmp.ne.s32.totalorder %s445, %s459
      %p461 = scmp.eq.s32.totalorder %s42, 0
      %p462 = por %p460, %p461
      %s464 = sadd.s32 %s463, 1
      %p467 = scmp.eq.s32.totalorder %s36, 1
      %p468 = scmp.ne.s32.totalorder %s463, %s465
      %p469 = scmp.eq.s32.totalorder %s36, 0
      %p470 = por %p468, %p469
      %p471 = scmp.ne.s32.totalorder %s463, %s465
      %p472 = scmp.eq.s32.totalorder %s41, 1
      %p473 = por %p471, %p472
      %p474 = scmp.ne.s32.totalorder %s465, %s466
      %p475 = scmp.eq.s32.totalorder %s41, 0
      %p476 = por %p474, %p475
      %p477 = scmp.ne.s32.totalorder %s465, %s466
      %p478 = scmp.eq.s32.totalorder %s42, 1
      %p479 = por %p477, %p478
      %p481 = scmp.ne.s32.totalorder %s466, %s480
      %p482 = scmp.eq.s32.totalorder %s42, 0
      %p483 = por %p481, %p482
      %s485 = sadd.s32 %s484, 1
      %p488 = scmp.eq.s32.totalorder %s36, 1
      %p489 = scmp.ne.s32.totalorder %s484, %s486
      %p490 = scmp.eq.s32.totalorder %s36, 0
      %p491 = por %p489, %p490
      %p492 = scmp.ne.s32.totalorder %s484, %s486
      %p493 = scmp.eq.s32.totalorder %s41, 1
      %p494 = por %p492, %p493
      %p495 = scmp.ne.s32.totalorder %s486, %s487
      %p496 = scmp.eq.s32.totalorder %s41, 0
      %p497 = por %p495, %p496
      %p498 = scmp.ne.s32.totalorder %s486, %s487
      %p499 = scmp.eq.s32.totalorder %s42, 1
      %p500 = por %p498, %p499
      %p502 = scmp.ne.s32.totalorder %s487, %s501
      %p503 = scmp.eq.s32.totalorder %s42, 0
      %p504 = por %p502, %p503
      %s506 = sadd.s32 %s505, 1
      %p509 = scmp.eq.s32.totalorder %s36, 1
      %p510 = scmp.ne.s32.totalorder %s505, %s507
      %p511 = scmp.eq.s32.totalorder %s36, 0
      %p512 = por %p510, %p511
      %p513 = scmp.ne.s32.totalorder %s505, %s507
      %p514 = scmp.eq.s32.totalorder %s41, 1
      %p515 = por %p513, %p514
      %p516 = scmp.ne.s32.totalorder %s507, %s508
      %p517 = scmp.eq.s32.totalorder %s41, 0
      %p518 = por %p516, %p517
      %p519 = scmp.ne.s32.totalorder %s507, %s508
      %p520 = scmp.eq.s32.totalorder %s42, 1
      %p521 = por %p519, %p520
      %p523 = scmp.ne.s32.totalorder %s508, %s522
      %p524 = scmp.eq.s32.totalorder %s42, 0
      %p525 = por %p523, %p524
      %s527 = sadd.s32 %s526, 1
      %p530 = scmp.eq.s32.totalorder %s36, 1
      %p531 = scmp.ne.s32.totalorder %s526, %s528
      %p532 = scmp.eq.s32.totalorder %s36, 0
      %p533 = por %p531, %p532
      %p534 = scmp.ne.s32.totalorder %s526, %s528
      %p535 = scmp.eq.s32.totalorder %s41, 1
      %p536 = por %p534, %p535
      %p537 = scmp.ne.s32.totalorder %s528, %s529
      %p538 = scmp.eq.s32.totalorder %s41, 0
      %p539 = por %p537, %p538
      %p540 = scmp.ne.s32.totalorder %s528, %s529
      %p541 = scmp.eq.s32.totalorder %s42, 1
      %p542 = por %p540, %p541
      %p544 = scmp.ne.s32.totalorder %s529, %s543
      %p545 = scmp.eq.s32.totalorder %s42, 0
      %p546 = por %p544, %p545
      %s548 = sadd.s32 %s547, 1
      %p551 = scmp.eq.s32.totalorder %s36, 1
      %p552 = scmp.ne.s32.totalorder %s547, %s549
      %p553 = scmp.eq.s32.totalorder %s36, 0
      %p554 = por %p552, %p553
      %p555 = scmp.ne.s32.totalorder %s547, %s549
      %p556 = scmp.eq.s32.totalorder %s41, 1
      %p557 = por %p555, %p556
      %p558 = scmp.ne.s32.totalorder %s549, %s550
      %p559 = scmp.eq.s32.totalorder %s41, 0
      %p560 = por %p558, %p559
      %p561 = scmp.ne.s32.totalorder %s549, %s550
      %p562 = scmp.eq.s32.totalorder %s42, 1
      %p563 = por %p561, %p562
      %p565 = scmp.ne.s32.totalorder %s550, %s564
      %p566 = scmp.eq.s32.totalorder %s42, 0
      %p567 = por %p565, %p566
      %s569 = sadd.s32 %s568, 1
      %p572 = scmp.eq.s32.totalorder %s36, 1
      %p573 = scmp.ne.s32.totalorder %s568, %s570
      %p574 = scmp.eq.s32.totalorder %s36, 0
      %p575 = por %p573, %p574
      %p576 = scmp.ne.s32.totalorder %s568, %s570
      %p577 = scmp.eq.s32.totalorder %s41, 1
      %p578 = por %p576, %p577
      %p579 = scmp.ne.s32.totalorder %s570, %s571
      %p580 = scmp.eq.s32.totalorder %s41, 0
      %p581 = por %p579, %p580
      %p582 = scmp.ne.s32.totalorder %s570, %s571
      %p583 = scmp.eq.s32.totalorder %s42, 1
      %p584 = por %p582, %p583
      %p586 = scmp.ne.s32.totalorder %s571, %s585
      %p587 = scmp.eq.s32.totalorder %s42, 0
      %p588 = por %p586, %p587
      %s590 = sadd.s32 %s589, 1
      %p593 = scmp.eq.s32.totalorder %s36, 1
      %p594 = scmp.ne.s32.totalorder %s589, %s591
      %p595 = scmp.eq.s32.totalorder %s36, 0
      %p596 = por %p594, %p595
      %p597 = scmp.ne.s32.totalorder %s589, %s591
      %p598 = scmp.eq.s32.totalorder %s41, 1
      %p599 = por %p597, %p598
      %p600 = scmp.ne.s32.totalorder %s591, %s592
      %p601 = scmp.eq.s32.totalorder %s41, 0
      %p602 = por %p600, %p601
      %p603 = scmp.ne.s32.totalorder %s591, %s592
      %p604 = scmp.eq.s32.totalorder %s42, 1
      %p605 = por %p603, %p604
      %p607 = scmp.ne.s32.totalorder %s592, %s606
      %p608 = scmp.eq.s32.totalorder %s42, 0
      %p609 = por %p607, %p608
      %s611 = sadd.s32 %s610, 1
      %p614 = scmp.eq.s32.totalorder %s36, 1
      %p615 = scmp.ne.s32.totalorder %s610, %s612
      %p616 = scmp.eq.s32.totalorder %s36, 0
      %p617 = por %p615, %p616
      %p618 = scmp.ne.s32.totalorder %s610, %s612
      %p619 = scmp.eq.s32.totalorder %s41, 1
      %p620 = por %p618, %p619
      %p621 = scmp.ne.s32.totalorder %s612, %s613
      %p622 = scmp.eq.s32.totalorder %s41, 0
      %p623 = por %p621, %p622
      %p624 = scmp.ne.s32.totalorder %s612, %s613
      %p625 = scmp.eq.s32.totalorder %s42, 1
      %p626 = por %p624, %p625
      %p628 = scmp.ne.s32.totalorder %s613, %s627
      %p629 = scmp.eq.s32.totalorder %s42, 0
      %p630 = por %p628, %p629
      %s631 = ssub.s32 %s36, %s43
      %p632 = scmp.eq.s32.totalorder %s631, 0
      %s634 = sadd.s32 %s633, 1
      %s635 = scalar_select %p632, %s633, %s634
      %p638 = pneg %p632
      %p639 = scmp.eq.s32.totalorder %s36, 1
      %p640 = por %p638, %p639
      %p641 = scmp.ne.s32.totalorder %s633, %s636
      %p642 = scmp.eq.s32.totalorder %s36, 0
      %p643 = por %p641, %p642
      %p644 = scmp.ne.s32.totalorder %s633, %s636
      %p645 = scmp.eq.s32.totalorder %s41, 1
      %p646 = por %p644, %p645
      %p647 = scmp.ne.s32.totalorder %s636, %s637
      %p648 = scmp.eq.s32.totalorder %s41, 0
      %p649 = por %p647, %p648
      %p650 = scmp.ne.s32.totalorder %s636, %s637
      %p651 = scmp.eq.s32.totalorder %s42, 1
      %p652 = por %p650, %p651
      %p654 = scmp.ne.s32.totalorder %s637, %s653
      %p655 = scmp.eq.s32.totalorder %s42, 0
      %p656 = por %p654, %p655
      %p657 = scmp.le.s32.totalorder 1, %s36
      %p658 = scmp.lt.s32.totalorder %s36, 3
      %p659 = pnand %p657, %p658
      %p660 = pneg %p659
      // Predicated region
      $region9: #{unilm_forward.1} parent=5 // pred_check
        _
      $region10: #{unilm_forward.1} parent=5 // pred_check_branch
        %662 = sbr.rel (%p659) target = $region12
      $region11: #{unilm_forward.1} parent=5 // pred_region
        %s663 = ssub.s32 %s36, 1
        // Predicated region
        $region13: #{unilm_forward.1} parent=11 // pred_check
          %p664 = pneg %p161
        $region14: #{unilm_forward.1} parent=11 // pred_check_branch
          %666 = sbr.rel (%p664) target = $region16
        $region15: #{unilm_forward.1} parent=11 // pred_region
          _
        $region16: #{unilm_forward.1} parent=11 // pred_fallthru
          _
        // Predicated region
        $region17: #{unilm_forward.1} parent=11 // pred_check
          %p667 = pneg %p182
        $region18: #{unilm_forward.1} parent=11 // pred_check_branch
          %669 = sbr.rel (%p667) target = $region20
        $region19: #{unilm_forward.1} parent=11 // pred_region
          _
        $region20: #{unilm_forward.1} parent=11 // pred_fallthru
          _
        // Predicated region
        $region21: #{unilm_forward.1} parent=11 // pred_check
          %p670 = pneg %p203
        $region22: #{unilm_forward.1} parent=11 // pred_check_branch
          %672 = sbr.rel (%p670) target = $region24
        $region23: #{unilm_forward.1} parent=11 // pred_region
          _
        $region24: #{unilm_forward.1} parent=11 // pred_fallthru
          _
        // Predicated region
        $region25: #{unilm_forward.1} parent=11 // pred_check
          %p673 = pneg %p224
        $region26: #{unilm_forward.1} parent=11 // pred_check_branch
          %675 = sbr.rel (%p673) target = $region28
        $region27: #{unilm_forward.1} parent=11 // pred_region
          _
        $region28: #{unilm_forward.1} parent=11 // pred_fallthru
          _
        // Predicated region
        $region29: #{unilm_forward.1} parent=11 // pred_check
          %p676 = pneg %p245
        $region30: #{unilm_forward.1} parent=11 // pred_check_branch
          %678 = sbr.rel (%p676) target = $region32
        $region31: #{unilm_forward.1} parent=11 // pred_region
          _
        $region32: #{unilm_forward.1} parent=11 // pred_fallthru
          _
        // Predicated region
        $region33: #{unilm_forward.1} parent=11 // pred_check
          %p679 = pneg %p266
        $region34: #{unilm_forward.1} parent=11 // pred_check_branch
          %681 = sbr.rel (%p679) target = $region36
        $region35: #{unilm_forward.1} parent=11 // pred_region
          _
        $region36: #{unilm_forward.1} parent=11 // pred_fallthru
          _
        // Predicated region
        $region37: #{unilm_forward.1} parent=11 // pred_check
          %p682 = pneg %p287
        $region38: #{unilm_forward.1} parent=11 // pred_check_branch
          %684 = sbr.rel (%p682) target = $region40
        $region39: #{unilm_forward.1} parent=11 // pred_region
          _
        $region40: #{unilm_forward.1} parent=11 // pred_fallthru
          _
        // Predicated region
        $region41: #{unilm_forward.1} parent=11 // pred_check
          %p685 = pneg %p308
        $region42: #{unilm_forward.1} parent=11 // pred_check_branch
          %687 = sbr.rel (%p685) target = $region44
        $region43: #{unilm_forward.1} parent=11 // pred_region
          _
        $region44: #{unilm_forward.1} parent=11 // pred_fallthru
          _
        // Predicated region
        $region45: #{unilm_forward.1} parent=11 // pred_check
          %p688 = pneg %p329
        $region46: #{unilm_forward.1} parent=11 // pred_check_branch
          %690 = sbr.rel (%p688) target = $region48
        $region47: #{unilm_forward.1} parent=11 // pred_region
          _
        $region48: #{unilm_forward.1} parent=11 // pred_fallthru
          _
        // Predicated region
        $region49: #{unilm_forward.1} parent=11 // pred_check
          %p691 = pneg %p350
        $region50: #{unilm_forward.1} parent=11 // pred_check_branch
          %693 = sbr.rel (%p691) target = $region52
        $region51: #{unilm_forward.1} parent=11 // pred_region
          _
        $region52: #{unilm_forward.1} parent=11 // pred_fallthru
          _
        // Predicated region
        $region53: #{unilm_forward.1} parent=11 // pred_check
          %p694 = pneg %p371
        $region54: #{unilm_forward.1} parent=11 // pred_check_branch
          %696 = sbr.rel (%p694) target = $region56
        $region55: #{unilm_forward.1} parent=11 // pred_region
          _
        $region56: #{unilm_forward.1} parent=11 // pred_fallthru
          _
        // Predicated region
        $region57: #{unilm_forward.1} parent=11 // pred_check
          %p697 = pneg %p392
        $region58: #{unilm_forward.1} parent=11 // pred_check_branch
          %699 = sbr.rel (%p697) target = $region60
        $region59: #{unilm_forward.1} parent=11 // pred_region
          _
        $region60: #{unilm_forward.1} parent=11 // pred_fallthru
          _
        // Predicated region
        $region61: #{unilm_forward.1} parent=11 // pred_check
          %p700 = pneg %p413
        $region62: #{unilm_forward.1} parent=11 // pred_check_branch
          %702 = sbr.rel (%p700) target = $region64
        $region63: #{unilm_forward.1} parent=11 // pred_region
          _
        $region64: #{unilm_forward.1} parent=11 // pred_fallthru
          _
        // Predicated region
        $region65: #{unilm_forward.1} parent=11 // pred_check
          %p703 = pneg %p434
        $region66: #{unilm_forward.1} parent=11 // pred_check_branch
          %705 = sbr.rel (%p703) target = $region68
        $region67: #{unilm_forward.1} parent=11 // pred_region
          _
        $region68: #{unilm_forward.1} parent=11 // pred_fallthru
          _
        // Predicated region
        $region69: #{unilm_forward.1} parent=11 // pred_check
          %p706 = pneg %p455
        $region70: #{unilm_forward.1} parent=11 // pred_check_branch
          %708 = sbr.rel (%p706) target = $region72
        $region71: #{unilm_forward.1} parent=11 // pred_region
          _
        $region72: #{unilm_forward.1} parent=11 // pred_fallthru
          _
        // Predicated region
        $region73: #{unilm_forward.1} parent=11 // pred_check
          %p709 = pneg %p476
        $region74: #{unilm_forward.1} parent=11 // pred_check_branch
          %711 = sbr.rel (%p709) target = $region76
        $region75: #{unilm_forward.1} parent=11 // pred_region
          _
        $region76: #{unilm_forward.1} parent=11 // pred_fallthru
          _
        // Predicated region
        $region77: #{unilm_forward.1} parent=11 // pred_check
          %p712 = pneg %p497
        $region78: #{unilm_forward.1} parent=11 // pred_check_branch
          %714 = sbr.rel (%p712) target = $region80
        $region79: #{unilm_forward.1} parent=11 // pred_region
          _
        $region80: #{unilm_forward.1} parent=11 // pred_fallthru
          _
        // Predicated region
        $region81: #{unilm_forward.1} parent=11 // pred_check
          %p715 = pneg %p518
        $region82: #{unilm_forward.1} parent=11 // pred_check_branch
          %717 = sbr.rel (%p715) target = $region84
        $region83: #{unilm_forward.1} parent=11 // pred_region
          _
        $region84: #{unilm_forward.1} parent=11 // pred_fallthru
          _
        // Predicated region
        $region85: #{unilm_forward.1} parent=11 // pred_check
          %p718 = pneg %p539
        $region86: #{unilm_forward.1} parent=11 // pred_check_branch
          %720 = sbr.rel (%p718) target = $region88
        $region87: #{unilm_forward.1} parent=11 // pred_region
          _
        $region88: #{unilm_forward.1} parent=11 // pred_fallthru
          _
        // Predicated region
        $region89: #{unilm_forward.1} parent=11 // pred_check
          %p721 = pneg %p560
        $region90: #{unilm_forward.1} parent=11 // pred_check_branch
          %723 = sbr.rel (%p721) target = $region92
        $region91: #{unilm_forward.1} parent=11 // pred_region
          _
        $region92: #{unilm_forward.1} parent=11 // pred_fallthru
          _
        // Predicated region
        $region93: #{unilm_forward.1} parent=11 // pred_check
          %p724 = pneg %p581
        $region94: #{unilm_forward.1} parent=11 // pred_check_branch
          %726 = sbr.rel (%p724) target = $region96
        $region95: #{unilm_forward.1} parent=11 // pred_region
          _
        $region96: #{unilm_forward.1} parent=11 // pred_fallthru
          _
        // Predicated region
        $region97: #{unilm_forward.1} parent=11 // pred_check
          %p727 = pneg %p602
        $region98: #{unilm_forward.1} parent=11 // pred_check_branch
          %729 = sbr.rel (%p727) target = $region100
        $region99: #{unilm_forward.1} parent=11 // pred_region
          _
        $region100: #{unilm_forward.1} parent=11 // pred_fallthru
          _
        // Predicated region
        $region101: #{unilm_forward.1} parent=11 // pred_check
          %p730 = pneg %p623
        $region102: #{unilm_forward.1} parent=11 // pred_check_branch
          %732 = sbr.rel (%p730) target = $region104
        $region103: #{unilm_forward.1} parent=11 // pred_region
          _
        $region104: #{unilm_forward.1} parent=11 // pred_fallthru
          _
      $region12: #{unilm_forward.1} parent=5 // pred_fallthru
        _
      %p733 = scmp.lt.s32.totalorder %s36, 2
      // Predicated region
      $region105: #{unilm_forward.1} parent=5 // pred_check
        %p734 = pneg %p733
      $region106: #{unilm_forward.1} parent=5 // pred_check_branch
        %736 = sbr.rel (%p734) target = $region108
      $region107: #{unilm_forward.1} parent=5 // pred_region
        // Predicated region
        $region109: #{unilm_forward.1} parent=107 // pred_check
          %p737 = pneg %p56
        $region110: #{unilm_forward.1} parent=107 // pred_check_branch
          %739 = sbr.rel (%p737) target = $region112
        $region111: #{unilm_forward.1} parent=107 // pred_region
          %p740 = scmp.lt.s32.totalorder %s36, 1
          %s741 = scalar_select %p740, %s36, 1
          %s742 = smul.addr %s741, 2
          %s743 = smul.addr %s742, 8
          %s744 = scalar_lea.vmem %s0, %s743
        $region112: #{unilm_forward.1} parent=107 // pred_fallthru
          _
        // Predicated region
        $region113: #{unilm_forward.1} parent=107 // pred_check
          %p745 = pneg %p82
        $region114: #{unilm_forward.1} parent=107 // pred_check_branch
          %747 = sbr.rel (%p745) target = $region116
        $region115: #{unilm_forward.1} parent=107 // pred_region
          %p748 = scmp.lt.s32.totalorder %s36, 1
          %s749 = scalar_select %p748, %s36, 1
          %s750 = smul.addr %s749, 2
          %s751 = smul.addr %s750, 8
          %s752 = scalar_lea.vmem %s1, %s751
        $region116: #{unilm_forward.1} parent=107 // pred_fallthru
          _
        // Predicated region
        $region117: #{unilm_forward.1} parent=107 // pred_check
          %p753 = pneg %p108
        $region118: #{unilm_forward.1} parent=107 // pred_check_branch
          %755 = sbr.rel (%p753) target = $region120
        $region119: #{unilm_forward.1} parent=107 // pred_region
          %p756 = scmp.lt.s32.totalorder %s36, 1
          %s757 = scalar_select %p756, %s36, 1
          %s758 = smul.addr %s757, 2
          %s759 = smul.addr %s758, 8
          %s760 = scalar_lea.vmem %s2, %s759
        $region120: #{unilm_forward.1} parent=107 // pred_fallthru
          _
        // Predicated region
        $region121: #{unilm_forward.1} parent=107 // pred_check
          %p761 = pneg %p134
        $region122: #{unilm_forward.1} parent=107 // pred_check_branch
          %763 = sbr.rel (%p761) target = $region124
        $region123: #{unilm_forward.1} parent=107 // pred_region
          %p764 = scmp.lt.s32.totalorder %s36, 1
          %s765 = scalar_select %p764, %s36, 1
          %s766 = scalar_lea.vmem %s3, %s765
        $region124: #{unilm_forward.1} parent=107 // pred_fallthru
          _
      $region108: #{unilm_forward.1} parent=5 // pred_fallthru
        _
      %p767 = scmp.le.s32.totalorder 1, %s36
      %p768 = scmp.lt.s32.totalorder %s36, 3
      %p769 = pnand %p767, %p768
      %p770 = pneg %p769
      // Predicated region
      $region125: #{unilm_forward.1} parent=5 // pred_check
        _
      $region126: #{unilm_forward.1} parent=5 // pred_check_branch
        %772 = sbr.rel (%p769) target = $region128
      $region127: #{unilm_forward.1} parent=5 // pred_region
        %s773 = ssub.s32 %s36, 1
        %p774 = scmp.lt.s32.totalorder %s41, 1
        %s775 = scalar_select %p774, %s41, 1
        %s776 = smul.addr %s775, 2
        %s777 = smul.addr %s776, 8
        %s778 = scalar_lea.vmem %s0, %s777
        %p779 = pneg %p62
        %p780 = pneg %p59
        %p781 = scmp.lt.s32.totalorder %s41, 1
        %s782 = scalar_select %p781, %s41, 1
        %s783 = smul.addr %s782, 2
        %s784 = smul.addr %s783, 8
        %s785 = scalar_lea.vmem %s1, %s784
        %p786 = pneg %p88
        %p787 = pneg %p85
        %p788 = scmp.lt.s32.totalorder %s41, 1
        %s789 = scalar_select %p788, %s41, 1
        %s790 = smul.addr %s789, 2
        %s791 = smul.addr %s790, 8
        %s792 = scalar_lea.vmem %s2, %s791
        %p793 = pneg %p114
        %p794 = pneg %p111
        %p795 = scmp.lt.s32.totalorder %s41, 1
        %s796 = scalar_select %p795, %s41, 1
        %s797 = scalar_lea.vmem %s3, %s796
        %p798 = pneg %p140
        %p799 = pneg %p137
        %p800 = pneg %p161
        %p801 = pneg %p158
        %p802 = pneg %p182
        %p803 = pneg %p179
        %p804 = pneg %p203
        %p805 = pneg %p200
        %p806 = pneg %p224
        %p807 = pneg %p221
        %p808 = pneg %p245
        %p809 = pneg %p242
        %p810 = pneg %p266
        %p811 = pneg %p263
        %p812 = pneg %p287
        %p813 = pneg %p284
        %p814 = pneg %p308
        %p815 = pneg %p305
        %p816 = pneg %p329
        %p817 = pneg %p326
        %p818 = pneg %p350
        %p819 = pneg %p347
        %p820 = pneg %p371
        %p821 = pneg %p368
        %p822 = pneg %p392
        %p823 = pneg %p389
        %p824 = pneg %p413
        %p825 = pneg %p410
        %p826 = pneg %p434
        %p827 = pneg %p431
        %p828 = pneg %p455
        %p829 = pneg %p452
        %p830 = pneg %p476
        %p831 = pneg %p473
        %p832 = pneg %p497
        %p833 = pneg %p494
        %p834 = pneg %p518
        %p835 = pneg %p515
        %p836 = pneg %p539
        %p837 = pneg %p536
        %p838 = pneg %p560
        %p839 = pneg %p557
        %p840 = pneg %p581
        %p841 = pneg %p578
        %p842 = pneg %p602
        %p843 = pneg %p599
        %p844 = pneg %p623
        %p845 = pneg %p620
        %p846 = pneg %p649
        %p847 = pneg %p646
        %s848 = sand.u32 %s636, 1
        %s849 = scalar_lea.sflag [#allocation3], %s848
        %s850 = sand.u32 %s636, 1
        %s851 = smul.addr %s850, 16
        %s852 = scalar_lea.vmem [#allocation2], %s851
        %p853 = scmp.lt.s32.totalorder %s41, 1
        %s854 = scalar_select %p853, %s41, 1
        %s855 = smul.addr %s854, 2
        %s856 = smul.addr %s855, 8
        %s857 = scalar_lea.vmem %s0, %s856
        %p858 = scmp.lt.s32.totalorder %s41, 1
        %s859 = scalar_select %p858, %s41, 1
        %s860 = smul.addr %s859, 2
        %s861 = smul.addr %s860, 8
        %s862 = scalar_lea.vmem %s1, %s861
        %p863 = scmp.lt.s32.totalorder %s41, 1
        %s864 = scalar_select %p863, %s41, 1
        %s865 = smul.addr %s864, 2
        %s866 = smul.addr %s865, 8
        %s867 = scalar_lea.vmem %s2, %s866
        %p868 = scmp.lt.s32.totalorder %s41, 1
        %s869 = scalar_select %p868, %s41, 1
        %s870 = scalar_lea.vmem %s3, %s869
        %v871 = vld [vmem:[%s857] sm:$0xff]
        %v872 = vld [vmem:[%s857 + $0x8] sm:$0xff]
        %v873 = vld [vmem:[%s862] sm:$0xff]
        %v874 = vld [vmem:[%s862 + $0x8] sm:$0xff]
        %v875 = vlaneseq
        %v876 = vand.u32 %v875, 127
        %877 = vset.pattern.permute.xlu0 0
        %878 = vperm.xlu0 %877, %v871
        %v879 = vpop.permute.xlu0 %878
        %880 = vset.pattern.permute.xlu0 0
        %881 = vperm.xlu0 %880, %v872
        %v882 = vpop.permute.xlu0 %881
        %vm883 = vcmp.eq.s32.totalorder %v876, %v879
        %vm884 = vcmp.eq.s32.totalorder %v876, %v882
        %v885 = vsel %vm883, 1, 0
        %v886 = vsel %vm884, 1, 0
        %v887 = vcvt.s32.f32 %v885
        %v888 = vcvt.s32.f32 %v886
        %v889 = vld [vmem:[%s4] sm:$0xff]
        %v890 = vld [vmem:[%s4 + $0x8] sm:$0xff]
        %v891 = vld [vmem:[%s4 + $0x10] sm:$0xff]
        %v892 = vld [vmem:[%s4 + $0x18] sm:$0xff]
        %v893 = vld [vmem:[%s4 + $0x20] sm:$0xff]
        %v894 = vld [vmem:[%s4 + $0x28] sm:$0xff]
        %v895 = vld [vmem:[%s4 + $0x30] sm:$0xff]
        %v896 = vld [vmem:[%s4 + $0x38] sm:$0xff]
        %v897 = vld [vmem:[%s4 + $0x40] sm:$0xff]
        %v898 = vld [vmem:[%s4 + $0x48] sm:$0xff]
        %v899 = vld [vmem:[%s4 + $0x50] sm:$0xff]
        %v900 = vld [vmem:[%s4 + $0x58] sm:$0xff]
        %v901 = vld [vmem:[%s4 + $0x60] sm:$0xff]
        %v902 = vld [vmem:[%s4 + $0x68] sm:$0xff]
        %v903 = vld [vmem:[%s4 + $0x70] sm:$0xff]
        %v904 = vld [vmem:[%s4 + $0x78] sm:$0xff]
        %v905 = vld [vmem:[%s6] sm:$0x1]
        %v906 = vld [vmem:[%s7] sm:$0x1]
        %v907 = vsub.f32 %v906, %v905
        %909 = vset.pattern.permute.xlu0 0
        %910 = vperm.xlu0 %909, %v873
        %v911 = vpop.permute.xlu0 %910
        %914 = vset.pattern.permute.xlu0 0
        %915 = vperm.xlu0 %914, %v874
        %v916 = vpop.permute.xlu0 %915
        %v919 = vlaneseq
        %v920 = vshrl.u32 %v919, 7
        %v921 = vsub.s32 0, %v920
        %v922 = vrot.slane %v907, %v921
        %v924 = vmul.f32 %v911, %v922
        %v925 = vmul.f32 %v916, %v922
        %v927 = vlaneseq
        %v928 = vshrl.u32 %v927, 7
        %v929 = vsub.s32 0, %v928
        %v930 = vrot.slane %v905, %v929
        %v932 = vadd.f32 %v930, %v924
        %v933 = vadd.f32 %v930, %v925
        %v934 = vld [vmem:[%s5] sm:$0xff]
        %v935 = vld [vmem:[%s5 + $0x8] sm:$0xff]
        %936 = vmatprep.subr.mxu0 0.0
        %937 = vmatpush1.msra.mxu0 %v904
        %938 = vmatprep.subr.mxu0 0.0
        %939 = vmatpush1.msra.mxu0 %v903
        %940 = vmatprep.subr.mxu0 0.0
        %941 = vmatpush1.msra.mxu0 %v902
        %942 = vmatprep.subr.mxu0 0.0
        %943 = vmatpush1.msra.mxu0 %v901
        %944 = vmatprep.subr.mxu0 0.0
        %945 = vmatpush1.msra.mxu0 %v900
        %946 = vmatprep.subr.mxu0 0.0
        %947 = vmatpush1.msra.mxu0 %v899
        %948 = vmatprep.subr.mxu0 0.0
        %949 = vmatpush1.msra.mxu0 %v898
        %950 = vmatprep.subr.mxu0 0.0
        %951 = vmatpush1.msra.mxu0 %v897
        %952 = vmatprep.subr.mxu0 0.0
        %953 = vmatpush1.msra.mxu0 %v896
        %954 = vmatprep.subr.mxu0 0.0
        %955 = vmatpush1.msra.mxu0 %v895
        %956 = vmatprep.subr.mxu0 0.0
        %957 = vmatpush1.msra.mxu0 %v894
        %958 = vmatprep.subr.mxu0 0.0
        %959 = vmatpush1.msra.mxu0 %v893
        %960 = vmatprep.subr.mxu0 0.0
        %961 = vmatpush1.msra.mxu0 %v892
        %962 = vmatprep.subr.mxu0 0.0
        %963 = vmatpush1.msra.mxu0 %v891
        %964 = vmatprep.subr.mxu0 0.0
        %965 = vmatpush1.msra.mxu0 %v890
        %966 = vmatprep.subr.mxu0 0.0
        %967 = vmatpush1.msra.mxu0 %v889
        %968 = vmatprep.subr.mxu0 0.0
        %969 = vmatpush2.msra.mxu0 0.0
        %970 = vmatprep.subr.mxu0 0.0
        %971 = vmatpush2.msra.mxu0 0.0
        %972 = vmatprep.subr.mxu0 0.0
        %973 = vmatpush2.msra.mxu0 0.0
        %974 = vmatprep.subr.mxu0 0.0
        %975 = vmatpush2.msra.mxu0 0.0
        %976 = vmatprep.subr.mxu0 0.0
        %977 = vmatpush2.msra.mxu0 0.0
        %978 = vmatprep.subr.mxu0 0.0
        %979 = vmatpush2.msra.mxu0 0.0
        %980 = vmatprep.subr.mxu0 0.0
        %981 = vmatpush2.msra.mxu0 0.0
        %982 = vmatprep.subr.mxu0 0.0
        %983 = vmatpush2.msra.mxu0 0.0
        %984 = vmatprep.subr.mxu0 0.0
        %985 = vmatpush2.msra.mxu0 0.0
        %986 = vmatprep.subr.mxu0 0.0
        %987 = vmatpush2.msra.mxu0 0.0
        %988 = vmatprep.subr.mxu0 0.0
        %989 = vmatpush2.msra.mxu0 0.0
        %990 = vmatprep.subr.mxu0 0.0
        %991 = vmatpush2.msra.mxu0 0.0
        %992 = vmatprep.subr.mxu0 0.0
        %993 = vmatpush2.msra.mxu0 0.0
        %994 = vmatprep.subr.mxu0 0.0
        %995 = vmatpush2.msra.mxu0 0.0
        %996 = vmatprep.subr.mxu0 0.0
        %997 = vmatpush2.msra.mxu0 0.0
        %998 = vmatprep.subr.mxu0 0.0
        %999 = vmatpush2.msra.mxu0 0.0
        %1000 = vmatprep.mubr.f32.mxu0 0.0
        %1001 = vmatmul.mubr.f32.gmra.mxu0 %v887
        %v1002 = vpop.f32.mrf.mxu0
        %v1003 = vadd.f32 %v934, %v1002
        %v1004 = vpop.f32.mrf.mxu0
        %1005 = vmatprep.mubr.f32.mxu0 0.0
        %1006 = vmatmul.mubr.f32.gmra.mxu0 %v888
        %v1007 = vpop.f32.mrf.mxu0
        %v1008 = vadd.f32 %v935, %v1007
        %v1009 = vpop.f32.mrf.mxu0
        %1010 = vdwg.mxu0
        %v1011 = vadd.f32 %v1003, %v932
        %v1012 = vadd.f32 %v1008, %v933
        %v1013 = vld [vmem:[%s8] sm:$0x1]
        %v1014 = vld [vmem:[%s9] sm:$0x1]
        %vm1015 = vcmask 261120
        %v1016 = vsel %vm1015, %v1011, 0.0
        %1017 = vadd.xlane.f32.xlu0 %v1016
        %v1018 = vpop.xlane.xlu0 %1017
        %v1019 = vsel %vm1015, %v1012, 0.0
        %1020 = vadd.xlane.f32.xlu0 %v1019
        %v1021 = vpop.xlane.xlu0 %1020
        %v1022 = vrcp.pop 32.0
        %v1023 = vmul.f32 %v1018, %v1022
        %v1024 = vmul.f32 %v1021, %v1022
        %v1025 = vsub.f32 %v1011, %v1023
        %v1026 = vsub.f32 %v1012, %v1024
        %v1027 = vmul.f32 %v1025, %v1025
        %v1028 = vmul.f32 %v1026, %v1026
        %v1029 = vsel %vm1015, %v1027, 0.0
        %1030 = vadd.xlane.f32.xlu0 %v1029
        %v1031 = vpop.xlane.xlu0 %1030
        %v1032 = vsel %vm1015, %v1028, 0.0
        %1033 = vadd.xlane.f32.xlu0 %v1032
        %v1034 = vpop.xlane.xlu0 %1033
        %v1035 = vmul.f32 %v1031, %v1022
        %v1036 = vmul.f32 %v1034, %v1022
        %v1037 = vadd.f32 %v1035, 1e-12
        %v1038 = vadd.f32 %v1036, 1e-12
        %v1039 = vrsqrt.pop %v1037
        %v1040 = vrsqrt.pop %v1038
        %v1041 = vmul.f32 %v1025, %v1039
        %v1042 = vmul.f32 %v1026, %v1040
        %v1044 = vlaneseq
        %v1045 = vshrl.u32 %v1044, 7
        %v1046 = vsub.s32 0, %v1045
        %v1047 = vrot.slane %v1013, %v1046
        %v1049 = vmul.f32 %v1041, %v1047
        %v1050 = vmul.f32 %v1042, %v1047
        %v1052 = vlaneseq
        %v1053 = vshrl.u32 %v1052, 7
        %v1054 = vsub.s32 0, %v1053
        %v1055 = vrot.slane %v1014, %v1054
        %v1057 = vadd.f32 %v1049, %v1055
        %v1058 = vadd.f32 %v1050, %v1055
        %v1059 = vld [vmem:[%s870] sm:$0x1]
        %v1060 = vld [vmem:[%s867] sm:$0xff]
        %v1061 = vld [vmem:[%s867 + $0x8] sm:$0xff]
        %v1063 = vlaneseq
        %v1064 = vshrl.u32 %v1063, 7
        %v1065 = vsub.s32 0, %v1064
        %v1066 = vrot.slane %v1059, %v1065
        %1069 = vset.pattern.permute.xlu0 0
        %1070 = vperm.xlu0 %1069, %v1060
        %v1071 = vpop.permute.xlu0 %1070
        %1074 = vset.pattern.permute.xlu0 0
        %1075 = vperm.xlu0 %1074, %v1061
        %v1076 = vpop.permute.xlu0 %1075
        %vm1078 = vcmp.le.f32.partialorder %v1066, %v1071
        %vm1079 = vcmp.le.f32.partialorder %v1066, %v1076
        %v1080 = vsel %vm1078, 0.0, -10000.0
        %v1081 = vsel %vm1079, 0.0, -10000.0
        %v1082 = vld [vmem:[%s10] sm:$0xff]
        %v1083 = vld [vmem:[%s10 + $0x8] sm:$0xff]
        %v1084 = vld [vmem:[%s10 + $0x10] sm:$0xff]
        %v1085 = vld [vmem:[%s10 + $0x18] sm:$0xff]
        %v1086 = vld [vmem:[%s11] sm:$0x1]
        %v1088 = vlaneseq
        %v1089 = vshrl.u32 %v1088, 7
        %v1090 = vsub.s32 0, %v1089
        %v1091 = vrot.slane %v1086, %v1090
        %v1094 = vsel %vm1015, %v1057, 0
        %v1097 = vsel %vm1015, %v1058, 0
        %1099 = vmatprep.subr.mxu0 0.0
        %1100 = vmatpush1.msra.mxu0 0.0
        %1101 = vmatprep.subr.mxu0 0.0
        %1102 = vmatpush1.msra.mxu0 0.0
        %1103 = vmatprep.subr.mxu0 0.0
        %1104 = vmatpush1.msra.mxu0 0.0
        %1105 = vmatprep.subr.mxu0 0.0
        %1106 = vmatpush1.msra.mxu0 0.0
        %1107 = vmatprep.subr.mxu0 0.0
        %1108 = vmatpush1.msra.mxu0 0.0
        %1109 = vmatprep.subr.mxu0 0.0
        %1110 = vmatpush1.msra.mxu0 0.0
        %1111 = vmatprep.subr.mxu0 0.0
        %1112 = vmatpush1.msra.mxu0 0.0
        %1113 = vmatprep.subr.mxu0 0.0
        %1114 = vmatpush1.msra.mxu0 0.0
        %1115 = vmatprep.subr.mxu0 0.0
        %1116 = vmatpush1.msra.mxu0 0.0
        %1117 = vmatprep.subr.mxu0 0.0
        %1118 = vmatpush1.msra.mxu0 0.0
        %1119 = vmatprep.subr.mxu0 0.0
        %1120 = vmatpush1.msra.mxu0 0.0
        %1121 = vmatprep.subr.mxu0 0.0
        %1122 = vmatpush1.msra.mxu0 0.0
        %1123 = vmatprep.subr.mxu0 0.0
        %1124 = vmatpush1.msra.mxu0 %v1085
        %1125 = vmatprep.subr.mxu0 0.0
        %1126 = vmatpush1.msra.mxu0 %v1084
        %1127 = vmatprep.subr.mxu0 0.0
        %1128 = vmatpush1.msra.mxu0 %v1083
        %1129 = vmatprep.subr.mxu0 0.0
        %1130 = vmatpush1.msra.mxu0 %v1082
        %1131 = vmatprep.subr.mxu0 0.0
        %1132 = vmatpush2.msra.mxu0 0.0
        %1133 = vmatprep.subr.mxu0 0.0
        %1134 = vmatpush2.msra.mxu0 0.0
        %1135 = vmatprep.subr.mxu0 0.0
        %1136 = vmatpush2.msra.mxu0 0.0
        %1137 = vmatprep.subr.mxu0 0.0
        %1138 = vmatpush2.msra.mxu0 0.0
        %1139 = vmatprep.subr.mxu0 0.0
        %1140 = vmatpush2.msra.mxu0 0.0
        %1141 = vmatprep.subr.mxu0 0.0
        %1142 = vmatpush2.msra.mxu0 0.0
        %1143 = vmatprep.subr.mxu0 0.0
        %1144 = vmatpush2.msra.mxu0 0.0
        %1145 = vmatprep.subr.mxu0 0.0
        %1146 = vmatpush2.msra.mxu0 0.0
        %1147 = vmatprep.subr.mxu0 0.0
        %1148 = vmatpush2.msra.mxu0 0.0
        %1149 = vmatprep.subr.mxu0 0.0
        %1150 = vmatpush2.msra.mxu0 0.0
        %1151 = vmatprep.subr.mxu0 0.0
        %1152 = vmatpush2.msra.mxu0 0.0
        %1153 = vmatprep.subr.mxu0 0.0
        %1154 = vmatpush2.msra.mxu0 0.0
        %1155 = vmatprep.subr.mxu0 0.0
        %1156 = vmatpush2.msra.mxu0 0.0
        %1157 = vmatprep.subr.mxu0 0.0
        %1158 = vmatpush2.msra.mxu0 0.0
        %1159 = vmatprep.subr.mxu0 0.0
        %1160 = vmatpush2.msra.mxu0 0.0
        %1161 = vmatprep.subr.mxu0 0.0
        %1162 = vmatpush2.msra.mxu0 0.0
        %1163 = vmatprep.mubr.f32.mxu0 0.0
        %1164 = vmatmul.mubr.f32.gmra.mxu0 %v1094
        %v1165 = vpop.f32.mrf.mxu0
        %v1166 = vadd.f32 %v1091, %v1165
        %v1167 = vpop.f32.mrf.mxu0
        %1168 = vmatprep.mubr.f32.mxu0 0.0
        %1169 = vmatmul.mubr.f32.gmra.mxu0 %v1097
        %v1170 = vpop.f32.mrf.mxu0
        %v1171 = vadd.f32 %v1091, %v1170
        %v1172 = vpop.f32.mrf.mxu0
        %1173 = vdwg.mxu0
        %v1174 = vmul.f32 %v1166, 0.35355338
        %v1175 = vmul.f32 %v1171, 0.35355338
        %1178 = vrot.lane.b32.xlu0 %v1166, 96
        %v1179 = vpop.permute.xlu0 %1178
        %1180 = vrot.lane.b32.xlu0 %v1171, 96
        %v1181 = vpop.permute.xlu0 %1180
        %vm1182 = vcmask 64512
        %v1184 = vsel %vm1182, %v1174, 0
        %v1187 = vsel %vm1182, %v1175, 0
        %v1189 = vsel %vm1182, %v1179, 0
        %v1191 = vsel %vm1182, %v1181, 0
        %1193 = vmatprep.subr.mxu0 0.0
        %1194 = vmatpush1.xpose.msra.mxu0 0.0
        %1195 = vmatprep.subr.mxu0 0.0
        %1196 = vmatpush1.xpose.msra.mxu0 0.0
        %1197 = vmatprep.subr.mxu0 0.0
        %1198 = vmatpush1.xpose.msra.mxu0 0.0
        %1199 = vmatprep.subr.mxu0 0.0
        %1200 = vmatpush1.xpose.msra.mxu0 0.0
        %1201 = vmatprep.subr.mxu0 0.0
        %1202 = vmatpush1.xpose.msra.mxu0 0.0
        %1203 = vmatprep.subr.mxu0 0.0
        %1204 = vmatpush1.xpose.msra.mxu0 0.0
        %1205 = vmatprep.subr.mxu0 0.0
        %1206 = vmatpush1.xpose.msra.mxu0 0.0
        %1207 = vmatprep.subr.mxu0 0.0
        %1208 = vmatpush1.xpose.msra.mxu0 0.0
        %1209 = vmatprep.subr.mxu0 0.0
        %1210 = vmatpush1.xpose.msra.mxu0 0.0
        %1211 = vmatprep.subr.mxu0 0.0
        %1212 = vmatpush1.xpose.msra.mxu0 0.0
        %1213 = vmatprep.subr.mxu0 0.0
        %1214 = vmatpush1.xpose.msra.mxu0 0.0
        %1215 = vmatprep.subr.mxu0 0.0
        %1216 = vmatpush1.xpose.msra.mxu0 0.0
        %1217 = vmatprep.subr.mxu0 0.0
        %1218 = vmatpush1.xpose.msra.mxu0 0.0
        %1219 = vmatprep.subr.mxu0 0.0
        %1220 = vmatpush1.xpose.msra.mxu0 0.0
        %1221 = vmatprep.subr.mxu0 0.0
        %1222 = vmatpush1.xpose.msra.mxu0 %v1191
        %1223 = vmatprep.subr.mxu0 0.0
        %1224 = vmatpush1.xpose.msra.mxu0 %v1189
        %1225 = vmatprep.subr.mxu0 0.0
        %1226 = vmatpush2.xpose.msra.mxu0 0.0
        %1227 = vmatprep.subr.mxu0 0.0
        %1228 = vmatpush2.xpose.msra.mxu0 0.0
        %1229 = vmatprep.subr.mxu0 0.0
        %1230 = vmatpush2.xpose.msra.mxu0 0.0
        %1231 = vmatprep.subr.mxu0 0.0
        %1232 = vmatpush2.xpose.msra.mxu0 0.0
        %1233 = vmatprep.subr.mxu0 0.0
        %1234 = vmatpush2.xpose.msra.mxu0 0.0
        %1235 = vmatprep.subr.mxu0 0.0
        %1236 = vmatpush2.xpose.msra.mxu0 0.0
        %1237 = vmatprep.subr.mxu0 0.0
        %1238 = vmatpush2.xpose.msra.mxu0 0.0
        %1239 = vmatprep.subr.mxu0 0.0
        %1240 = vmatpush2.xpose.msra.mxu0 0.0
        %1241 = vmatprep.subr.mxu0 0.0
        %1242 = vmatpush2.xpose.msra.mxu0 0.0
        %1243 = vmatprep.subr.mxu0 0.0
        %1244 = vmatpush2.xpose.msra.mxu0 0.0
        %1245 = vmatprep.subr.mxu0 0.0
        %1246 = vmatpush2.xpose.msra.mxu0 0.0
        %1247 = vmatprep.subr.mxu0 0.0
        %1248 = vmatpush2.xpose.msra.mxu0 0.0
        %1249 = vmatprep.subr.mxu0 0.0
        %1250 = vmatpush2.xpose.msra.mxu0 0.0
        %1251 = vmatprep.subr.mxu0 0.0
        %1252 = vmatpush2.xpose.msra.mxu0 0.0
        %1253 = vmatprep.subr.mxu0 0.0
        %1254 = vmatpush2.xpose.msra.mxu0 0.0
        %1255 = vmatprep.subr.mxu0 0.0
        %1256 = vmatpush2.xpose.msra.mxu0 0.0
        %1257 = vmatprep.mubr.f32.mxu0 0.0
        %1258 = vmatmul.mubr.f32.gmra.mxu0 %v1184
        %v1259 = vpop.f32.mrf.mxu0
        %v1260 = vadd.f32 %v1080, %v1259
        %v1261 = vpop.f32.mrf.mxu0
        %1262 = vmatprep.mubr.f32.mxu0 0.0
        %1263 = vmatmul.mubr.f32.gmra.mxu0 %v1187
        %v1264 = vpop.f32.mrf.mxu0
        %v1265 = vadd.f32 %v1081, %v1264
        %v1266 = vpop.f32.mrf.mxu0
        %1267 = vdwg.mxu0
        %vm1268 = vcmask 130048
        %v1269 = vsel %vm1268, %v1260, -inf
        %1270 = vmax.xlane.f32.xlu0 %v1269
        %v1271 = vpop.xlane.xlu0 %1270
        %v1272 = vsel %vm1268, %v1265, -inf
        %1273 = vmax.xlane.f32.xlu0 %v1272
        %v1274 = vpop.xlane.xlu0 %1273
        %v1275 = vsub.f32 %v1260, %v1271
        %v1276 = vsub.f32 %v1265, %v1274
        %v1277 = vmul.f32 %v1275, 1.442695
        %v1278 = vpow.pop %v1277
        %v1279 = vmul.f32 %v1276, 1.442695
        %v1280 = vpow.pop %v1279
        %v1281 = vsel %vm1268, %v1278, 0.0
        %1282 = vadd.xlane.f32.xlu0 %v1281
        %v1283 = vpop.xlane.xlu0 %1282
        %v1284 = vsel %vm1268, %v1280, 0.0
        %1285 = vadd.xlane.f32.xlu0 %v1284
        %v1286 = vpop.xlane.xlu0 %1285
        %v1287 = vrcp.pop %v1283
        %v1288 = vrcp.pop %v1286
        %v1289 = vmul.f32 %v1278, %v1287
        %v1290 = vmul.f32 %v1280, %v1288
        %1291 = vrot.lane.b32.xlu0 %v1166, 64
        %v1292 = vpop.permute.xlu0 %1291
        %1293 = vrot.lane.b32.xlu0 %v1171, 64
        %v1294 = vpop.permute.xlu0 %1293
        %v1298 = vsel %vm1268, %v1289, 0
        %v1301 = vsel %vm1268, %v1290, 0
        %1303 = vmatprep.subr.mxu0 0.0
        %1304 = vmatpush1.msra.mxu0 0.0
        %1305 = vmatprep.subr.mxu0 0.0
        %1306 = vmatpush1.msra.mxu0 0.0
        %1307 = vmatprep.subr.mxu0 0.0
        %1308 = vmatpush1.msra.mxu0 0.0
        %1309 = vmatprep.subr.mxu0 0.0
        %1310 = vmatpush1.msra.mxu0 0.0
        %1311 = vmatprep.subr.mxu0 0.0
        %1312 = vmatpush1.msra.mxu0 0.0
        %1313 = vmatprep.subr.mxu0 0.0
        %1314 = vmatpush1.msra.mxu0 0.0
        %1315 = vmatprep.subr.mxu0 0.0
        %1316 = vmatpush1.msra.mxu0 0.0
        %1317 = vmatprep.subr.mxu0 0.0
        %1318 = vmatpush1.msra.mxu0 0.0
        %1319 = vmatprep.subr.mxu0 0.0
        %1320 = vmatpush1.msra.mxu0 0.0
        %1321 = vmatprep.subr.mxu0 0.0
        %1322 = vmatpush1.msra.mxu0 0.0
        %1323 = vmatprep.subr.mxu0 0.0
        %1324 = vmatpush1.msra.mxu0 0.0
        %1325 = vmatprep.subr.mxu0 0.0
        %1326 = vmatpush1.msra.mxu0 0.0
        %1327 = vmatprep.subr.mxu0 0.0
        %1328 = vmatpush1.msra.mxu0 0.0
        %1329 = vmatprep.subr.mxu0 0.0
        %1330 = vmatpush1.msra.mxu0 0.0
        %1331 = vmatprep.subr.mxu0 0.0
        %1332 = vmatpush1.msra.mxu0 %v1294
        %1333 = vmatprep.subr.mxu0 0.0
        %1334 = vmatpush1.msra.mxu0 %v1292
        %1335 = vmatprep.subr.mxu0 0.0
        %1336 = vmatpush2.msra.mxu0 0.0
        %1337 = vmatprep.subr.mxu0 0.0
        %1338 = vmatpush2.msra.mxu0 0.0
        %1339 = vmatprep.subr.mxu0 0.0
        %1340 = vmatpush2.msra.mxu0 0.0
        %1341 = vmatprep.subr.mxu0 0.0
        %1342 = vmatpush2.msra.mxu0 0.0
        %1343 = vmatprep.subr.mxu0 0.0
        %1344 = vmatpush2.msra.mxu0 0.0
        %1345 = vmatprep.subr.mxu0 0.0
        %1346 = vmatpush2.msra.mxu0 0.0
        %1347 = vmatprep.subr.mxu0 0.0
        %1348 = vmatpush2.msra.mxu0 0.0
        %1349 = vmatprep.subr.mxu0 0.0
        %1350 = vmatpush2.msra.mxu0 0.0
        %1351 = vmatprep.subr.mxu0 0.0
        %1352 = vmatpush2.msra.mxu0 0.0
        %1353 = vmatprep.subr.mxu0 0.0
        %1354 = vmatpush2.msra.mxu0 0.0
        %1355 = vmatprep.subr.mxu0 0.0
        %1356 = vmatpush2.msra.mxu0 0.0
        %1357 = vmatprep.subr.mxu0 0.0
        %1358 = vmatpush2.msra.mxu0 0.0
        %1359 = vmatprep.subr.mxu0 0.0
        %1360 = vmatpush2.msra.mxu0 0.0
        %1361 = vmatprep.subr.mxu0 0.0
        %1362 = vmatpush2.msra.mxu0 0.0
        %1363 = vmatprep.subr.mxu0 0.0
        %1364 = vmatpush2.msra.mxu0 0.0
        %1365 = vmatprep.subr.mxu0 0.0
        %1366 = vmatpush2.msra.mxu0 0.0
        %1367 = vmatprep.mubr.f32.mxu0 0.0
        %1368 = vmatmul.mubr.f32.gmra.mxu0 %v1298
        %v1369 = vpop.f32.mrf.mxu0
        %v1370 = vadd.f32 0.0, %v1369
        %v1371 = vpop.f32.mrf.mxu0
        %1372 = vmatprep.mubr.f32.mxu0 0.0
        %1373 = vmatmul.mubr.f32.gmra.mxu0 %v1301
        %v1374 = vpop.f32.mrf.mxu0
        %v1375 = vadd.f32 0.0, %v1374
        %v1376 = vpop.f32.mrf.mxu0
        %1377 = vdwg.mxu0
        %1378 = vrot.lane.b32.xlu0 %v1174, 120
        %v1379 = vpop.permute.xlu0 %1378
        %1380 = vrot.lane.b32.xlu0 %v1175, 120
        %v1381 = vpop.permute.xlu0 %1380
        %1382 = vrot.lane.b32.xlu0 %v1166, 88
        %v1383 = vpop.permute.xlu0 %1382
        %1384 = vrot.lane.b32.xlu0 %v1171, 88
        %v1385 = vpop.permute.xlu0 %1384
        %v1386 = vsel %vm1182, %v1379, 0
        %v1388 = vsel %vm1182, %v1381, 0
        %v1390 = vsel %vm1182, %v1383, 0
        %v1392 = vsel %vm1182, %v1385, 0
        %1394 = vmatprep.subr.mxu0 0.0
        %1395 = vmatpush1.xpose.msra.mxu0 0.0
        %1396 = vmatprep.subr.mxu0 0.0
        %1397 = vmatpush1.xpose.msra.mxu0 0.0
        %1398 = vmatprep.subr.mxu0 0.0
        %1399 = vmatpush1.xpose.msra.mxu0 0.0
        %1400 = vmatprep.subr.mxu0 0.0
        %1401 = vmatpush1.xpose.msra.mxu0 0.0
        %1402 = vmatprep.subr.mxu0 0.0
        %1403 = vmatpush1.xpose.msra.mxu0 0.0
        %1404 = vmatprep.subr.mxu0 0.0
        %1405 = vmatpush1.xpose.msra.mxu0 0.0
        %1406 = vmatprep.subr.mxu0 0.0
        %1407 = vmatpush1.xpose.msra.mxu0 0.0
        %1408 = vmatprep.subr.mxu0 0.0
        %1409 = vmatpush1.xpose.msra.mxu0 0.0
        %1410 = vmatprep.subr.mxu0 0.0
        %1411 = vmatpush1.xpose.msra.mxu0 0.0
        %1412 = vmatprep.subr.mxu0 0.0
        %1413 = vmatpush1.xpose.msra.mxu0 0.0
        %1414 = vmatprep.subr.mxu0 0.0
        %1415 = vmatpush1.xpose.msra.mxu0 0.0
        %1416 = vmatprep.subr.mxu0 0.0
        %1417 = vmatpush1.xpose.msra.mxu0 0.0
        %1418 = vmatprep.subr.mxu0 0.0
        %1419 = vmatpush1.xpose.msra.mxu0 0.0
        %1420 = vmatprep.subr.mxu0 0.0
        %1421 = vmatpush1.xpose.msra.mxu0 0.0
        %1422 = vmatprep.subr.mxu0 0.0
        %1423 = vmatpush1.xpose.msra.mxu0 %v1392
        %1424 = vmatprep.subr.mxu0 0.0
        %1425 = vmatpush1.xpose.msra.mxu0 %v1390
        %1426 = vmatprep.subr.mxu0 0.0
        %1427 = vmatpush2.xpose.msra.mxu0 0.0
        %1428 = vmatprep.subr.mxu0 0.0
        %1429 = vmatpush2.xpose.msra.mxu0 0.0
        %1430 = vmatprep.subr.mxu0 0.0
        %1431 = vmatpush2.xpose.msra.mxu0 0.0
        %1432 = vmatprep.subr.mxu0 0.0
        %1433 = vmatpush2.xpose.msra.mxu0 0.0
        %1434 = vmatprep.subr.mxu0 0.0
        %1435 = vmatpush2.xpose.msra.mxu0 0.0
        %1436 = vmatprep.subr.mxu0 0.0
        %1437 = vmatpush2.xpose.msra.mxu0 0.0
        %1438 = vmatprep.subr.mxu0 0.0
        %1439 = vmatpush2.xpose.msra.mxu0 0.0
        %1440 = vmatprep.subr.mxu0 0.0
        %1441 = vmatpush2.xpose.msra.mxu0 0.0
        %1442 = vmatprep.subr.mxu0 0.0
        %1443 = vmatpush2.xpose.msra.mxu0 0.0
        %1444 = vmatprep.subr.mxu0 0.0
        %1445 = vmatpush2.xpose.msra.mxu0 0.0
        %1446 = vmatprep.subr.mxu0 0.0
        %1447 = vmatpush2.xpose.msra.mxu0 0.0
        %1448 = vmatprep.subr.mxu0 0.0
        %1449 = vmatpush2.xpose.msra.mxu0 0.0
        %1450 = vmatprep.subr.mxu0 0.0
        %1451 = vmatpush2.xpose.msra.mxu0 0.0
        %1452 = vmatprep.subr.mxu0 0.0
        %1453 = vmatpush2.xpose.msra.mxu0 0.0
        %1454 = vmatprep.subr.mxu0 0.0
        %1455 = vmatpush2.xpose.msra.mxu0 0.0
        %1456 = vmatprep.subr.mxu0 0.0
        %1457 = vmatpush2.xpose.msra.mxu0 0.0
        %1458 = vmatprep.mubr.f32.mxu0 0.0
        %1459 = vmatmul.mubr.f32.gmra.mxu0 %v1386
        %v1460 = vpop.f32.mrf.mxu0
        %v1461 = vadd.f32 %v1080, %v1460
        %v1462 = vpop.f32.mrf.mxu0
        %1463 = vmatprep.mubr.f32.mxu0 0.0
        %1464 = vmatmul.mubr.f32.gmra.mxu0 %v1388
        %v1465 = vpop.f32.mrf.mxu0
        %v1466 = vadd.f32 %v1081, %v1465
        %v1467 = vpop.f32.mrf.mxu0
        %1468 = vdwg.mxu0
        %v1469 = vsel %vm1268, %v1461, -inf
        %1470 = vmax.xlane.f32.xlu0 %v1469
        %v1471 = vpop.xlane.xlu0 %1470
        %v1472 = vsel %vm1268, %v1466, -inf
        %1473 = vmax.xlane.f32.xlu0 %v1472
        %v1474 = vpop.xlane.xlu0 %1473
        %v1475 = vsub.f32 %v1461, %v1471
        %v1476 = vsub.f32 %v1466, %v1474
        %v1477 = vmul.f32 %v1475, 1.442695
        %v1478 = vpow.pop %v1477
        %v1479 = vmul.f32 %v1476, 1.442695
        %v1480 = vpow.pop %v1479
        %v1481 = vsel %vm1268, %v1478, 0.0
        %1482 = vadd.xlane.f32.xlu0 %v1481
        %v1483 = vpop.xlane.xlu0 %1482
        %v1484 = vsel %vm1268, %v1480, 0.0
        %1485 = vadd.xlane.f32.xlu0 %v1484
        %v1486 = vpop.xlane.xlu0 %1485
        %v1487 = vrcp.pop %v1483
        %v1488 = vrcp.pop %v1486
        %v1489 = vmul.f32 %v1478, %v1487
        %v1490 = vmul.f32 %v1480, %v1488
        %1491 = vrot.lane.b32.xlu0 %v1166, 56
        %v1492 = vpop.permute.xlu0 %1491
        %1493 = vrot.lane.b32.xlu0 %v1171, 56
        %v1494 = vpop.permute.xlu0 %1493
        %v1498 = vsel %vm1268, %v1489, 0
        %v1501 = vsel %vm1268, %v1490, 0
        %1503 = vmatprep.subr.mxu0 0.0
        %1504 = vmatpush1.msra.mxu0 0.0
        %1505 = vmatprep.subr.mxu0 0.0
        %1506 = vmatpush1.msra.mxu0 0.0
        %1507 = vmatprep.subr.mxu0 0.0
        %1508 = vmatpush1.msra.mxu0 0.0
        %1509 = vmatprep.subr.mxu0 0.0
        %1510 = vmatpush1.msra.mxu0 0.0
        %1511 = vmatprep.subr.mxu0 0.0
        %1512 = vmatpush1.msra.mxu0 0.0
        %1513 = vmatprep.subr.mxu0 0.0
        %1514 = vmatpush1.msra.mxu0 0.0
        %1515 = vmatprep.subr.mxu0 0.0
        %1516 = vmatpush1.msra.mxu0 0.0
        %1517 = vmatprep.subr.mxu0 0.0
        %1518 = vmatpush1.msra.mxu0 0.0
        %1519 = vmatprep.subr.mxu0 0.0
        %1520 = vmatpush1.msra.mxu0 0.0
        %1521 = vmatprep.subr.mxu0 0.0
        %1522 = vmatpush1.msra.mxu0 0.0
        %1523 = vmatprep.subr.mxu0 0.0
        %1524 = vmatpush1.msra.mxu0 0.0
        %1525 = vmatprep.subr.mxu0 0.0
        %1526 = vmatpush1.msra.mxu0 0.0
        %1527 = vmatprep.subr.mxu0 0.0
        %1528 = vmatpush1.msra.mxu0 0.0
        %1529 = vmatprep.subr.mxu0 0.0
        %1530 = vmatpush1.msra.mxu0 0.0
        %1531 = vmatprep.subr.mxu0 0.0
        %1532 = vmatpush1.msra.mxu0 %v1494
        %1533 = vmatprep.subr.mxu0 0.0
        %1534 = vmatpush1.msra.mxu0 %v1492
        %1535 = vmatprep.subr.mxu0 0.0
        %1536 = vmatpush2.msra.mxu0 0.0
        %1537 = vmatprep.subr.mxu0 0.0
        %1538 = vmatpush2.msra.mxu0 0.0
        %1539 = vmatprep.subr.mxu0 0.0
        %1540 = vmatpush2.msra.mxu0 0.0
        %1541 = vmatprep.subr.mxu0 0.0
        %1542 = vmatpush2.msra.mxu0 0.0
        %1543 = vmatprep.subr.mxu0 0.0
        %1544 = vmatpush2.msra.mxu0 0.0
        %1545 = vmatprep.subr.mxu0 0.0
        %1546 = vmatpush2.msra.mxu0 0.0
        %1547 = vmatprep.subr.mxu0 0.0
        %1548 = vmatpush2.msra.mxu0 0.0
        %1549 = vmatprep.subr.mxu0 0.0
        %1550 = vmatpush2.msra.mxu0 0.0
        %1551 = vmatprep.subr.mxu0 0.0
        %1552 = vmatpush2.msra.mxu0 0.0
        %1553 = vmatprep.subr.mxu0 0.0
        %1554 = vmatpush2.msra.mxu0 0.0
        %1555 = vmatprep.subr.mxu0 0.0
        %1556 = vmatpush2.msra.mxu0 0.0
        %1557 = vmatprep.subr.mxu0 0.0
        %1558 = vmatpush2.msra.mxu0 0.0
        %1559 = vmatprep.subr.mxu0 0.0
        %1560 = vmatpush2.msra.mxu0 0.0
        %1561 = vmatprep.subr.mxu0 0.0
        %1562 = vmatpush2.msra.mxu0 0.0
        %1563 = vmatprep.subr.mxu0 0.0
        %1564 = vmatpush2.msra.mxu0 0.0
        %1565 = vmatprep.subr.mxu0 0.0
        %1566 = vmatpush2.msra.mxu0 0.0
        %1567 = vmatprep.mubr.f32.mxu0 0.0
        %1568 = vmatmul.mubr.f32.gmra.mxu0 %v1498
        %v1569 = vpop.f32.mrf.mxu0
        %v1570 = vadd.f32 0.0, %v1569
        %v1571 = vpop.f32.mrf.mxu0
        %1572 = vmatprep.mubr.f32.mxu0 0.0
        %1573 = vmatmul.mubr.f32.gmra.mxu0 %v1501
        %v1574 = vpop.f32.mrf.mxu0
        %v1575 = vadd.f32 0.0, %v1574
        %v1576 = vpop.f32.mrf.mxu0
        %1577 = vdwg.mxu0
        %1578 = vrot.lane.b32.xlu0 %v1174, 112
        %v1579 = vpop.permute.xlu0 %1578
        %1580 = vrot.lane.b32.xlu0 %v1175, 112
        %v1581 = vpop.permute.xlu0 %1580
        %1582 = vrot.lane.b32.xlu0 %v1166, 80
        %v1583 = vpop.permute.xlu0 %1582
        %1584 = vrot.lane.b32.xlu0 %v1171, 80
        %v1585 = vpop.permute.xlu0 %1584
        %v1586 = vsel %vm1182, %v1579, 0
        %v1588 = vsel %vm1182, %v1581, 0
        %v1590 = vsel %vm1182, %v1583, 0
        %v1592 = vsel %vm1182, %v1585, 0
        %1594 = vmatprep.subr.mxu0 0.0
        %1595 = vmatpush1.xpose.msra.mxu0 0.0
        %1596 = vmatprep.subr.mxu0 0.0
        %1597 = vmatpush1.xpose.msra.mxu0 0.0
        %1598 = vmatprep.subr.mxu0 0.0
        %1599 = vmatpush1.xpose.msra.mxu0 0.0
        %1600 = vmatprep.subr.mxu0 0.0
        %1601 = vmatpush1.xpose.msra.mxu0 0.0
        %1602 = vmatprep.subr.mxu0 0.0
        %1603 = vmatpush1.xpose.msra.mxu0 0.0
        %1604 = vmatprep.subr.mxu0 0.0
        %1605 = vmatpush1.xpose.msra.mxu0 0.0
        %1606 = vmatprep.subr.mxu0 0.0
        %1607 = vmatpush1.xpose.msra.mxu0 0.0
        %1608 = vmatprep.subr.mxu0 0.0
        %1609 = vmatpush1.xpose.msra.mxu0 0.0
        %1610 = vmatprep.subr.mxu0 0.0
        %1611 = vmatpush1.xpose.msra.mxu0 0.0
        %1612 = vmatprep.subr.mxu0 0.0
        %1613 = vmatpush1.xpose.msra.mxu0 0.0
        %1614 = vmatprep.subr.mxu0 0.0
        %1615 = vmatpush1.xpose.msra.mxu0 0.0
        %1616 = vmatprep.subr.mxu0 0.0
        %1617 = vmatpush1.xpose.msra.mxu0 0.0
        %1618 = vmatprep.subr.mxu0 0.0
        %1619 = vmatpush1.xpose.msra.mxu0 0.0
        %1620 = vmatprep.subr.mxu0 0.0
        %1621 = vmatpush1.xpose.msra.mxu0 0.0
        %1622 = vmatprep.subr.mxu0 0.0
        %1623 = vmatpush1.xpose.msra.mxu0 %v1592
        %1624 = vmatprep.subr.mxu0 0.0
        %1625 = vmatpush1.xpose.msra.mxu0 %v1590
        %1626 = vmatprep.subr.mxu0 0.0
        %1627 = vmatpush2.xpose.msra.mxu0 0.0
        %1628 = vmatprep.subr.mxu0 0.0
        %1629 = vmatpush2.xpose.msra.mxu0 0.0
        %1630 = vmatprep.subr.mxu0 0.0
        %1631 = vmatpush2.xpose.msra.mxu0 0.0
        %1632 = vmatprep.subr.mxu0 0.0
        %1633 = vmatpush2.xpose.msra.mxu0 0.0
        %1634 = vmatprep.subr.mxu0 0.0
        %1635 = vmatpush2.xpose.msra.mxu0 0.0
        %1636 = vmatprep.subr.mxu0 0.0
        %1637 = vmatpush2.xpose.msra.mxu0 0.0
        %1638 = vmatprep.subr.mxu0 0.0
        %1639 = vmatpush2.xpose.msra.mxu0 0.0
        %1640 = vmatprep.subr.mxu0 0.0
        %1641 = vmatpush2.xpose.msra.mxu0 0.0
        %1642 = vmatprep.subr.mxu0 0.0
        %1643 = vmatpush2.xpose.msra.mxu0 0.0
        %1644 = vmatprep.subr.mxu0 0.0
        %1645 = vmatpush2.xpose.msra.mxu0 0.0
        %1646 = vmatprep.subr.mxu0 0.0
        %1647 = vmatpush2.xpose.msra.mxu0 0.0
        %1648 = vmatprep.subr.mxu0 0.0
        %1649 = vmatpush2.xpose.msra.mxu0 0.0
        %1650 = vmatprep.subr.mxu0 0.0
        %1651 = vmatpush2.xpose.msra.mxu0 0.0
        %1652 = vmatprep.subr.mxu0 0.0
        %1653 = vmatpush2.xpose.msra.mxu0 0.0
        %1654 = vmatprep.subr.mxu0 0.0
        %1655 = vmatpush2.xpose.msra.mxu0 0.0
        %1656 = vmatprep.subr.mxu0 0.0
        %1657 = vmatpush2.xpose.msra.mxu0 0.0
        %1658 = vmatprep.mubr.f32.mxu0 0.0
        %1659 = vmatmul.mubr.f32.gmra.mxu0 %v1586
        %v1660 = vpop.f32.mrf.mxu0
        %v1661 = vadd.f32 %v1080, %v1660
        %v1662 = vpop.f32.mrf.mxu0
        %1663 = vmatprep.mubr.f32.mxu0 0.0
        %1664 = vmatmul.mubr.f32.gmra.mxu0 %v1588
        %v1665 = vpop.f32.mrf.mxu0
        %v1666 = vadd.f32 %v1081, %v1665
        %v1667 = vpop.f32.mrf.mxu0
        %1668 = vdwg.mxu0
        %v1669 = vsel %vm1268, %v1661, -inf
        %1670 = vmax.xlane.f32.xlu0 %v1669
        %v1671 = vpop.xlane.xlu0 %1670
        %v1672 = vsel %vm1268, %v1666, -inf
        %1673 = vmax.xlane.f32.xlu0 %v1672
        %v1674 = vpop.xlane.xlu0 %1673
        %v1675 = vsub.f32 %v1661, %v1671
        %v1676 = vsub.f32 %v1666, %v1674
        %v1677 = vmul.f32 %v1675, 1.442695
        %v1678 = vpow.pop %v1677
        %v1679 = vmul.f32 %v1676, 1.442695
        %v1680 = vpow.pop %v1679
        %v1681 = vsel %vm1268, %v1678, 0.0
        %1682 = vadd.xlane.f32.xlu0 %v1681
        %v1683 = vpop.xlane.xlu0 %1682
        %v1684 = vsel %vm1268, %v1680, 0.0
        %1685 = vadd.xlane.f32.xlu0 %v1684
        %v1686 = vpop.xlane.xlu0 %1685
        %v1687 = vrcp.pop %v1683
        %v1688 = vrcp.pop %v1686
        %v1689 = vmul.f32 %v1678, %v1687
        %v1690 = vmul.f32 %v1680, %v1688
        %1691 = vrot.lane.b32.xlu0 %v1166, 48
        %v1692 = vpop.permute.xlu0 %1691
        %1693 = vrot.lane.b32.xlu0 %v1171, 48
        %v1694 = vpop.permute.xlu0 %1693
        %v1698 = vsel %vm1268, %v1689, 0
        %v1701 = vsel %vm1268, %v1690, 0
        %1703 = vmatprep.subr.mxu0 0.0
        %1704 = vmatpush1.msra.mxu0 0.0
        %1705 = vmatprep.subr.mxu0 0.0
        %1706 = vmatpush1.msra.mxu0 0.0
        %1707 = vmatprep.subr.mxu0 0.0
        %1708 = vmatpush1.msra.mxu0 0.0
        %1709 = vmatprep.subr.mxu0 0.0
        %1710 = vmatpush1.msra.mxu0 0.0
        %1711 = vmatprep.subr.mxu0 0.0
        %1712 = vmatpush1.msra.mxu0 0.0
        %1713 = vmatprep.subr.mxu0 0.0
        %1714 = vmatpush1.msra.mxu0 0.0
        %1715 = vmatprep.subr.mxu0 0.0
        %1716 = vmatpush1.msra.mxu0 0.0
        %1717 = vmatprep.subr.mxu0 0.0
        %1718 = vmatpush1.msra.mxu0 0.0
        %1719 = vmatprep.subr.mxu0 0.0
        %1720 = vmatpush1.msra.mxu0 0.0
        %1721 = vmatprep.subr.mxu0 0.0
        %1722 = vmatpush1.msra.mxu0 0.0
        %1723 = vmatprep.subr.mxu0 0.0
        %1724 = vmatpush1.msra.mxu0 0.0
        %1725 = vmatprep.subr.mxu0 0.0
        %1726 = vmatpush1.msra.mxu0 0.0
        %1727 = vmatprep.subr.mxu0 0.0
        %1728 = vmatpush1.msra.mxu0 0.0
        %1729 = vmatprep.subr.mxu0 0.0
        %1730 = vmatpush1.msra.mxu0 0.0
        %1731 = vmatprep.subr.mxu0 0.0
        %1732 = vmatpush1.msra.mxu0 %v1694
        %1733 = vmatprep.subr.mxu0 0.0
        %1734 = vmatpush1.msra.mxu0 %v1692
        %1735 = vmatprep.subr.mxu0 0.0
        %1736 = vmatpush2.msra.mxu0 0.0
        %1737 = vmatprep.subr.mxu0 0.0
        %1738 = vmatpush2.msra.mxu0 0.0
        %1739 = vmatprep.subr.mxu0 0.0
        %1740 = vmatpush2.msra.mxu0 0.0
        %1741 = vmatprep.subr.mxu0 0.0
        %1742 = vmatpush2.msra.mxu0 0.0
        %1743 = vmatprep.subr.mxu0 0.0
        %1744 = vmatpush2.msra.mxu0 0.0
        %1745 = vmatprep.subr.mxu0 0.0
        %1746 = vmatpush2.msra.mxu0 0.0
        %1747 = vmatprep.subr.mxu0 0.0
        %1748 = vmatpush2.msra.mxu0 0.0
        %1749 = vmatprep.subr.mxu0 0.0
        %1750 = vmatpush2.msra.mxu0 0.0
        %1751 = vmatprep.subr.mxu0 0.0
        %1752 = vmatpush2.msra.mxu0 0.0
        %1753 = vmatprep.subr.mxu0 0.0
        %1754 = vmatpush2.msra.mxu0 0.0
        %1755 = vmatprep.subr.mxu0 0.0
        %1756 = vmatpush2.msra.mxu0 0.0
        %1757 = vmatprep.subr.mxu0 0.0
        %1758 = vmatpush2.msra.mxu0 0.0
        %1759 = vmatprep.subr.mxu0 0.0
        %1760 = vmatpush2.msra.mxu0 0.0
        %1761 = vmatprep.subr.mxu0 0.0
        %1762 = vmatpush2.msra.mxu0 0.0
        %1763 = vmatprep.subr.mxu0 0.0
        %1764 = vmatpush2.msra.mxu0 0.0
        %1765 = vmatprep.subr.mxu0 0.0
        %1766 = vmatpush2.msra.mxu0 0.0
        %1767 = vmatprep.mubr.f32.mxu0 0.0
        %1768 = vmatmul.mubr.f32.gmra.mxu0 %v1698
        %v1769 = vpop.f32.mrf.mxu0
        %v1770 = vadd.f32 0.0, %v1769
        %v1771 = vpop.f32.mrf.mxu0
        %1772 = vmatprep.mubr.f32.mxu0 0.0
        %1773 = vmatmul.mubr.f32.gmra.mxu0 %v1701
        %v1774 = vpop.f32.mrf.mxu0
        %v1775 = vadd.f32 0.0, %v1774
        %v1776 = vpop.f32.mrf.mxu0
        %1777 = vdwg.mxu0
        %1778 = vrot.lane.b32.xlu0 %v1174, 104
        %v1779 = vpop.permute.xlu0 %1778
        %1780 = vrot.lane.b32.xlu0 %v1175, 104
        %v1781 = vpop.permute.xlu0 %1780
        %1782 = vrot.lane.b32.xlu0 %v1166, 72
        %v1783 = vpop.permute.xlu0 %1782
        %1784 = vrot.lane.b32.xlu0 %v1171, 72
        %v1785 = vpop.permute.xlu0 %1784
        %v1786 = vsel %vm1182, %v1779, 0
        %v1788 = vsel %vm1182, %v1781, 0
        %v1790 = vsel %vm1182, %v1783, 0
        %v1792 = vsel %vm1182, %v1785, 0
        %1794 = vmatprep.subr.mxu0 0.0
        %1795 = vmatpush1.xpose.msra.mxu0 0.0
        %1796 = vmatprep.subr.mxu0 0.0
        %1797 = vmatpush1.xpose.msra.mxu0 0.0
        %1798 = vmatprep.subr.mxu0 0.0
        %1799 = vmatpush1.xpose.msra.mxu0 0.0
        %1800 = vmatprep.subr.mxu0 0.0
        %1801 = vmatpush1.xpose.msra.mxu0 0.0
        %1802 = vmatprep.subr.mxu0 0.0
        %1803 = vmatpush1.xpose.msra.mxu0 0.0
        %1804 = vmatprep.subr.mxu0 0.0
        %1805 = vmatpush1.xpose.msra.mxu0 0.0
        %1806 = vmatprep.subr.mxu0 0.0
        %1807 = vmatpush1.xpose.msra.mxu0 0.0
        %1808 = vmatprep.subr.mxu0 0.0
        %1809 = vmatpush1.xpose.msra.mxu0 0.0
        %1810 = vmatprep.subr.mxu0 0.0
        %1811 = vmatpush1.xpose.msra.mxu0 0.0
        %1812 = vmatprep.subr.mxu0 0.0
        %1813 = vmatpush1.xpose.msra.mxu0 0.0
        %1814 = vmatprep.subr.mxu0 0.0
        %1815 = vmatpush1.xpose.msra.mxu0 0.0
        %1816 = vmatprep.subr.mxu0 0.0
        %1817 = vmatpush1.xpose.msra.mxu0 0.0
        %1818 = vmatprep.subr.mxu0 0.0
        %1819 = vmatpush1.xpose.msra.mxu0 0.0
        %1820 = vmatprep.subr.mxu0 0.0
        %1821 = vmatpush1.xpose.msra.mxu0 0.0
        %1822 = vmatprep.subr.mxu0 0.0
        %1823 = vmatpush1.xpose.msra.mxu0 %v1792
        %1824 = vmatprep.subr.mxu0 0.0
        %1825 = vmatpush1.xpose.msra.mxu0 %v1790
        %1826 = vmatprep.subr.mxu0 0.0
        %1827 = vmatpush2.xpose.msra.mxu0 0.0
        %1828 = vmatprep.subr.mxu0 0.0
        %1829 = vmatpush2.xpose.msra.mxu0 0.0
        %1830 = vmatprep.subr.mxu0 0.0
        %1831 = vmatpush2.xpose.msra.mxu0 0.0
        %1832 = vmatprep.subr.mxu0 0.0
        %1833 = vmatpush2.xpose.msra.mxu0 0.0
        %1834 = vmatprep.subr.mxu0 0.0
        %1835 = vmatpush2.xpose.msra.mxu0 0.0
        %1836 = vmatprep.subr.mxu0 0.0
        %1837 = vmatpush2.xpose.msra.mxu0 0.0
        %1838 = vmatprep.subr.mxu0 0.0
        %1839 = vmatpush2.xpose.msra.mxu0 0.0
        %1840 = vmatprep.subr.mxu0 0.0
        %1841 = vmatpush2.xpose.msra.mxu0 0.0
        %1842 = vmatprep.subr.mxu0 0.0
        %1843 = vmatpush2.xpose.msra.mxu0 0.0
        %1844 = vmatprep.subr.mxu0 0.0
        %1845 = vmatpush2.xpose.msra.mxu0 0.0
        %1846 = vmatprep.subr.mxu0 0.0
        %1847 = vmatpush2.xpose.msra.mxu0 0.0
        %1848 = vmatprep.subr.mxu0 0.0
        %1849 = vmatpush2.xpose.msra.mxu0 0.0
        %1850 = vmatprep.subr.mxu0 0.0
        %1851 = vmatpush2.xpose.msra.mxu0 0.0
        %1852 = vmatprep.subr.mxu0 0.0
        %1853 = vmatpush2.xpose.msra.mxu0 0.0
        %1854 = vmatprep.subr.mxu0 0.0
        %1855 = vmatpush2.xpose.msra.mxu0 0.0
        %1856 = vmatprep.subr.mxu0 0.0
        %1857 = vmatpush2.xpose.msra.mxu0 0.0
        %1858 = vmatprep.mubr.f32.mxu0 0.0
        %1859 = vmatmul.mubr.f32.gmra.mxu0 %v1786
        %v1860 = vpop.f32.mrf.mxu0
        %v1861 = vadd.f32 %v1080, %v1860
        %v1862 = vpop.f32.mrf.mxu0
        %1863 = vmatprep.mubr.f32.mxu0 0.0
        %1864 = vmatmul.mubr.f32.gmra.mxu0 %v1788
        %v1865 = vpop.f32.mrf.mxu0
        %v1866 = vadd.f32 %v1081, %v1865
        %v1867 = vpop.f32.mrf.mxu0
        %1868 = vdwg.mxu0
        %v1869 = vsel %vm1268, %v1861, -inf
        %1870 = vmax.xlane.f32.xlu0 %v1869
        %v1871 = vpop.xlane.xlu0 %1870
        %v1872 = vsel %vm1268, %v1866, -inf
        %1873 = vmax.xlane.f32.xlu0 %v1872
        %v1874 = vpop.xlane.xlu0 %1873
        %v1875 = vsub.f32 %v1861, %v1871
        %v1876 = vsub.f32 %v1866, %v1874
        %v1877 = vmul.f32 %v1875, 1.442695
        %v1878 = vpow.pop %v1877
        %v1879 = vmul.f32 %v1876, 1.442695
        %v1880 = vpow.pop %v1879
        %v1881 = vsel %vm1268, %v1878, 0.0
        %1882 = vadd.xlane.f32.xlu0 %v1881
        %v1883 = vpop.xlane.xlu0 %1882
        %v1884 = vsel %vm1268, %v1880, 0.0
        %1885 = vadd.xlane.f32.xlu0 %v1884
        %v1886 = vpop.xlane.xlu0 %1885
        %v1887 = vrcp.pop %v1883
        %v1888 = vrcp.pop %v1886
        %v1889 = vmul.f32 %v1878, %v1887
        %v1890 = vmul.f32 %v1880, %v1888
        %1891 = vrot.lane.b32.xlu0 %v1166, 40
        %v1892 = vpop.permute.xlu0 %1891
        %1893 = vrot.lane.b32.xlu0 %v1171, 40
        %v1894 = vpop.permute.xlu0 %1893
        %v1898 = vsel %vm1268, %v1889, 0
        %v1901 = vsel %vm1268, %v1890, 0
        %1903 = vmatprep.subr.mxu0 0.0
        %1904 = vmatpush1.msra.mxu0 0.0
        %1905 = vmatprep.subr.mxu0 0.0
        %1906 = vmatpush1.msra.mxu0 0.0
        %1907 = vmatprep.subr.mxu0 0.0
        %1908 = vmatpush1.msra.mxu0 0.0
        %1909 = vmatprep.subr.mxu0 0.0
        %1910 = vmatpush1.msra.mxu0 0.0
        %1911 = vmatprep.subr.mxu0 0.0
        %1912 = vmatpush1.msra.mxu0 0.0
        %1913 = vmatprep.subr.mxu0 0.0
        %1914 = vmatpush1.msra.mxu0 0.0
        %1915 = vmatprep.subr.mxu0 0.0
        %1916 = vmatpush1.msra.mxu0 0.0
        %1917 = vmatprep.subr.mxu0 0.0
        %1918 = vmatpush1.msra.mxu0 0.0
        %1919 = vmatprep.subr.mxu0 0.0
        %1920 = vmatpush1.msra.mxu0 0.0
        %1921 = vmatprep.subr.mxu0 0.0
        %1922 = vmatpush1.msra.mxu0 0.0
        %1923 = vmatprep.subr.mxu0 0.0
        %1924 = vmatpush1.msra.mxu0 0.0
        %1925 = vmatprep.subr.mxu0 0.0
        %1926 = vmatpush1.msra.mxu0 0.0
        %1927 = vmatprep.subr.mxu0 0.0
        %1928 = vmatpush1.msra.mxu0 0.0
        %1929 = vmatprep.subr.mxu0 0.0
        %1930 = vmatpush1.msra.mxu0 0.0
        %1931 = vmatprep.subr.mxu0 0.0
        %1932 = vmatpush1.msra.mxu0 %v1894
        %1933 = vmatprep.subr.mxu0 0.0
        %1934 = vmatpush1.msra.mxu0 %v1892
        %1935 = vmatprep.subr.mxu0 0.0
        %1936 = vmatpush2.msra.mxu0 0.0
        %1937 = vmatprep.subr.mxu0 0.0
        %1938 = vmatpush2.msra.mxu0 0.0
        %1939 = vmatprep.subr.mxu0 0.0
        %1940 = vmatpush2.msra.mxu0 0.0
        %1941 = vmatprep.subr.mxu0 0.0
        %1942 = vmatpush2.msra.mxu0 0.0
        %1943 = vmatprep.subr.mxu0 0.0
        %1944 = vmatpush2.msra.mxu0 0.0
        %1945 = vmatprep.subr.mxu0 0.0
        %1946 = vmatpush2.msra.mxu0 0.0
        %1947 = vmatprep.subr.mxu0 0.0
        %1948 = vmatpush2.msra.mxu0 0.0
        %1949 = vmatprep.subr.mxu0 0.0
        %1950 = vmatpush2.msra.mxu0 0.0
        %1951 = vmatprep.subr.mxu0 0.0
        %1952 = vmatpush2.msra.mxu0 0.0
        %1953 = vmatprep.subr.mxu0 0.0
        %1954 = vmatpush2.msra.mxu0 0.0
        %1955 = vmatprep.subr.mxu0 0.0
        %1956 = vmatpush2.msra.mxu0 0.0
        %1957 = vmatprep.subr.mxu0 0.0
        %1958 = vmatpush2.msra.mxu0 0.0
        %1959 = vmatprep.subr.mxu0 0.0
        %1960 = vmatpush2.msra.mxu0 0.0
        %1961 = vmatprep.subr.mxu0 0.0
        %1962 = vmatpush2.msra.mxu0 0.0
        %1963 = vmatprep.subr.mxu0 0.0
        %1964 = vmatpush2.msra.mxu0 0.0
        %1965 = vmatprep.subr.mxu0 0.0
        %1966 = vmatpush2.msra.mxu0 0.0
        %1967 = vmatprep.mubr.f32.mxu0 0.0
        %1968 = vmatmul.mubr.f32.gmra.mxu0 %v1898
        %v1969 = vpop.f32.mrf.mxu0
        %v1970 = vadd.f32 0.0, %v1969
        %v1971 = vpop.f32.mrf.mxu0
        %1972 = vmatprep.mubr.f32.mxu0 0.0
        %1973 = vmatmul.mubr.f32.gmra.mxu0 %v1901
        %v1974 = vpop.f32.mrf.mxu0
        %v1975 = vadd.f32 0.0, %v1974
        %v1976 = vpop.f32.mrf.mxu0
        %1977 = vdwg.mxu0
        %1980 = vrot.lane.b32.xlu0 %v1570, 8
        %v1981 = vpop.permute.xlu0 %1980
        %1982 = vrot.lane.b32.xlu0 %v1575, 8
        %v1983 = vpop.permute.xlu0 %1982
        %1988 = vrot.lane.b32.xlu0 %v1770, 16
        %v1989 = vpop.permute.xlu0 %1988
        %1990 = vrot.lane.b32.xlu0 %v1775, 16
        %v1991 = vpop.permute.xlu0 %1990
        %1996 = vrot.lane.b32.xlu0 %v1970, 24
        %v1997 = vpop.permute.xlu0 %1996
        %1998 = vrot.lane.b32.xlu0 %v1975, 24
        %v1999 = vpop.permute.xlu0 %1998
        %v2002 = vsel %vm1182, %v1370, %v1981
        %v2003 = vsel %vm1182, %v1375, %v1983
        %v2004 = vsel %vm1268, %v2002, %v1989
        %v2005 = vsel %vm1268, %v2003, %v1991
        %vm2006 = vcmask 195584
        %v2007 = vsel %vm2006, %v2004, %v1997
        %v2008 = vsel %vm2006, %v2005, %v1999
        %v2009 = vld [vmem:[%s12] sm:$0xff]
        %v2010 = vld [vmem:[%s12 + $0x8] sm:$0xff]
        %v2011 = vld [vmem:[%s12 + $0x10] sm:$0xff]
        %v2012 = vld [vmem:[%s12 + $0x18] sm:$0xff]
        %v2013 = vld [vmem:[%s13] sm:$0x1]
        %v2015 = vlaneseq
        %v2016 = vshrl.u32 %v2015, 7
        %v2017 = vsub.s32 0, %v2016
        %v2018 = vrot.slane %v2013, %v2017
        %v2021 = vsel %vm1015, %v2007, 0
        %v2024 = vsel %vm1015, %v2008, 0
        %2026 = vmatprep.subr.mxu0 0.0
        %2027 = vmatpush1.msra.mxu0 0.0
        %2028 = vmatprep.subr.mxu0 0.0
        %2029 = vmatpush1.msra.mxu0 0.0
        %2030 = vmatprep.subr.mxu0 0.0
        %2031 = vmatpush1.msra.mxu0 0.0
        %2032 = vmatprep.subr.mxu0 0.0
        %2033 = vmatpush1.msra.mxu0 0.0
        %2034 = vmatprep.subr.mxu0 0.0
        %2035 = vmatpush1.msra.mxu0 0.0
        %2036 = vmatprep.subr.mxu0 0.0
        %2037 = vmatpush1.msra.mxu0 0.0
        %2038 = vmatprep.subr.mxu0 0.0
        %2039 = vmatpush1.msra.mxu0 0.0
        %2040 = vmatprep.subr.mxu0 0.0
        %2041 = vmatpush1.msra.mxu0 0.0
        %2042 = vmatprep.subr.mxu0 0.0
        %2043 = vmatpush1.msra.mxu0 0.0
        %2044 = vmatprep.subr.mxu0 0.0
        %2045 = vmatpush1.msra.mxu0 0.0
        %2046 = vmatprep.subr.mxu0 0.0
        %2047 = vmatpush1.msra.mxu0 0.0
        %2048 = vmatprep.subr.mxu0 0.0
        %2049 = vmatpush1.msra.mxu0 0.0
        %2050 = vmatprep.subr.mxu0 0.0
        %2051 = vmatpush1.msra.mxu0 %v2012
        %2052 = vmatprep.subr.mxu0 0.0
        %2053 = vmatpush1.msra.mxu0 %v2011
        %2054 = vmatprep.subr.mxu0 0.0
        %2055 = vmatpush1.msra.mxu0 %v2010
        %2056 = vmatprep.subr.mxu0 0.0
        %2057 = vmatpush1.msra.mxu0 %v2009
        %2058 = vmatprep.subr.mxu0 0.0
        %2059 = vmatpush2.msra.mxu0 0.0
        %2060 = vmatprep.subr.mxu0 0.0
        %2061 = vmatpush2.msra.mxu0 0.0
        %2062 = vmatprep.subr.mxu0 0.0
        %2063 = vmatpush2.msra.mxu0 0.0
        %2064 = vmatprep.subr.mxu0 0.0
        %2065 = vmatpush2.msra.mxu0 0.0
        %2066 = vmatprep.subr.mxu0 0.0
        %2067 = vmatpush2.msra.mxu0 0.0
        %2068 = vmatprep.subr.mxu0 0.0
        %2069 = vmatpush2.msra.mxu0 0.0
        %2070 = vmatprep.subr.mxu0 0.0
        %2071 = vmatpush2.msra.mxu0 0.0
        %2072 = vmatprep.subr.mxu0 0.0
        %2073 = vmatpush2.msra.mxu0 0.0
        %2074 = vmatprep.subr.mxu0 0.0
        %2075 = vmatpush2.msra.mxu0 0.0
        %2076 = vmatprep.subr.mxu0 0.0
        %2077 = vmatpush2.msra.mxu0 0.0
        %2078 = vmatprep.subr.mxu0 0.0
        %2079 = vmatpush2.msra.mxu0 0.0
        %2080 = vmatprep.subr.mxu0 0.0
        %2081 = vmatpush2.msra.mxu0 0.0
        %2082 = vmatprep.subr.mxu0 0.0
        %2083 = vmatpush2.msra.mxu0 0.0
        %2084 = vmatprep.subr.mxu0 0.0
        %2085 = vmatpush2.msra.mxu0 0.0
        %2086 = vmatprep.subr.mxu0 0.0
        %2087 = vmatpush2.msra.mxu0 0.0
        %2088 = vmatprep.subr.mxu0 0.0
        %2089 = vmatpush2.msra.mxu0 0.0
        %2090 = vmatprep.mubr.f32.mxu0 0.0
        %2091 = vmatmul.mubr.f32.gmra.mxu0 %v2021
        %v2092 = vpop.f32.mrf.mxu0
        %v2093 = vadd.f32 %v2018, %v2092
        %v2094 = vpop.f32.mrf.mxu0
        %2095 = vmatprep.mubr.f32.mxu0 0.0
        %2096 = vmatmul.mubr.f32.gmra.mxu0 %v2024
        %v2097 = vpop.f32.mrf.mxu0
        %v2098 = vadd.f32 %v2018, %v2097
        %v2099 = vpop.f32.mrf.mxu0
        %2100 = vdwg.mxu0
        %v2101 = vadd.f32 %v2093, %v1057
        %v2102 = vadd.f32 %v2098, %v1058
        %v2103 = vld [vmem:[%s14] sm:$0x1]
        %v2104 = vld [vmem:[%s15] sm:$0x1]
        %v2105 = vsel %vm1015, %v2101, 0.0
        %2106 = vadd.xlane.f32.xlu0 %v2105
        %v2107 = vpop.xlane.xlu0 %2106
        %v2108 = vsel %vm1015, %v2102, 0.0
        %2109 = vadd.xlane.f32.xlu0 %v2108
        %v2110 = vpop.xlane.xlu0 %2109
        %v2111 = vmul.f32 %v2107, %v1022
        %v2112 = vmul.f32 %v2110, %v1022
        %v2113 = vsub.f32 %v2101, %v2111
        %v2114 = vsub.f32 %v2102, %v2112
        %v2115 = vmul.f32 %v2113, %v2113
        %v2116 = vmul.f32 %v2114, %v2114
        %v2117 = vsel %vm1015, %v2115, 0.0
        %2118 = vadd.xlane.f32.xlu0 %v2117
        %v2119 = vpop.xlane.xlu0 %2118
        %v2120 = vsel %vm1015, %v2116, 0.0
        %2121 = vadd.xlane.f32.xlu0 %v2120
        %v2122 = vpop.xlane.xlu0 %2121
        %v2123 = vmul.f32 %v2119, %v1022
        %v2124 = vmul.f32 %v2122, %v1022
        %v2125 = vadd.f32 %v2123, 1e-12
        %v2126 = vadd.f32 %v2124, 1e-12
        %v2127 = vrsqrt.pop %v2125
        %v2128 = vrsqrt.pop %v2126
        %v2129 = vmul.f32 %v2113, %v2127
        %v2130 = vmul.f32 %v2114, %v2128
        %v2132 = vlaneseq
        %v2133 = vshrl.u32 %v2132, 7
        %v2134 = vsub.s32 0, %v2133
        %v2135 = vrot.slane %v2103, %v2134
        %v2137 = vmul.f32 %v2129, %v2135
        %v2138 = vmul.f32 %v2130, %v2135
        %v2140 = vlaneseq
        %v2141 = vshrl.u32 %v2140, 7
        %v2142 = vsub.s32 0, %v2141
        %v2143 = vrot.slane %v2104, %v2142
        %v2145 = vadd.f32 %v2137, %v2143
        %v2146 = vadd.f32 %v2138, %v2143
        %v2147 = vld [vmem:[%s16] sm:$0xff]
        %v2148 = vld [vmem:[%s16 + $0x8] sm:$0xff]
        %v2149 = vld [vmem:[%s16 + $0x10] sm:$0xff]
        %v2150 = vld [vmem:[%s16 + $0x18] sm:$0xff]
        %v2151 = vld [vmem:[%s17] sm:$0x1]
        %v2153 = vlaneseq
        %v2154 = vshrl.u32 %v2153, 7
        %v2155 = vsub.s32 0, %v2154
        %v2156 = vrot.slane %v2151, %v2155
        %v2159 = vsel %vm1015, %v2145, 0
        %v2162 = vsel %vm1015, %v2146, 0
        %2164 = vmatprep.subr.mxu0 0.0
        %2165 = vmatpush1.msra.mxu0 0.0
        %2166 = vmatprep.subr.mxu0 0.0
        %2167 = vmatpush1.msra.mxu0 0.0
        %2168 = vmatprep.subr.mxu0 0.0
        %2169 = vmatpush1.msra.mxu0 0.0
        %2170 = vmatprep.subr.mxu0 0.0
        %2171 = vmatpush1.msra.mxu0 0.0
        %2172 = vmatprep.subr.mxu0 0.0
        %2173 = vmatpush1.msra.mxu0 0.0
        %2174 = vmatprep.subr.mxu0 0.0
        %2175 = vmatpush1.msra.mxu0 0.0
        %2176 = vmatprep.subr.mxu0 0.0
        %2177 = vmatpush1.msra.mxu0 0.0
        %2178 = vmatprep.subr.mxu0 0.0
        %2179 = vmatpush1.msra.mxu0 0.0
        %2180 = vmatprep.subr.mxu0 0.0
        %2181 = vmatpush1.msra.mxu0 0.0
        %2182 = vmatprep.subr.mxu0 0.0
        %2183 = vmatpush1.msra.mxu0 0.0
        %2184 = vmatprep.subr.mxu0 0.0
        %2185 = vmatpush1.msra.mxu0 0.0
        %2186 = vmatprep.subr.mxu0 0.0
        %2187 = vmatpush1.msra.mxu0 0.0
        %2188 = vmatprep.subr.mxu0 0.0
        %2189 = vmatpush1.msra.mxu0 %v2150
        %2190 = vmatprep.subr.mxu0 0.0
        %2191 = vmatpush1.msra.mxu0 %v2149
        %2192 = vmatprep.subr.mxu0 0.0
        %2193 = vmatpush1.msra.mxu0 %v2148
        %2194 = vmatprep.subr.mxu0 0.0
        %2195 = vmatpush1.msra.mxu0 %v2147
        %2196 = vmatprep.subr.mxu0 0.0
        %2197 = vmatpush2.msra.mxu0 0.0
        %2198 = vmatprep.subr.mxu0 0.0
        %2199 = vmatpush2.msra.mxu0 0.0
        %2200 = vmatprep.subr.mxu0 0.0
        %2201 = vmatpush2.msra.mxu0 0.0
        %2202 = vmatprep.subr.mxu0 0.0
        %2203 = vmatpush2.msra.mxu0 0.0
        %2204 = vmatprep.subr.mxu0 0.0
        %2205 = vmatpush2.msra.mxu0 0.0
        %2206 = vmatprep.subr.mxu0 0.0
        %2207 = vmatpush2.msra.mxu0 0.0
        %2208 = vmatprep.subr.mxu0 0.0
        %2209 = vmatpush2.msra.mxu0 0.0
        %2210 = vmatprep.subr.mxu0 0.0
        %2211 = vmatpush2.msra.mxu0 0.0
        %2212 = vmatprep.subr.mxu0 0.0
        %2213 = vmatpush2.msra.mxu0 0.0
        %2214 = vmatprep.subr.mxu0 0.0
        %2215 = vmatpush2.msra.mxu0 0.0
        %2216 = vmatprep.subr.mxu0 0.0
        %2217 = vmatpush2.msra.mxu0 0.0
        %2218 = vmatprep.subr.mxu0 0.0
        %2219 = vmatpush2.msra.mxu0 0.0
        %2220 = vmatprep.subr.mxu0 0.0
        %2221 = vmatpush2.msra.mxu0 0.0
        %2222 = vmatprep.subr.mxu0 0.0
        %2223 = vmatpush2.msra.mxu0 0.0
        %2224 = vmatprep.subr.mxu0 0.0
        %2225 = vmatpush2.msra.mxu0 0.0
        %2226 = vmatprep.subr.mxu0 0.0
        %2227 = vmatpush2.msra.mxu0 0.0
        %2228 = vmatprep.mubr.f32.mxu0 0.0
        %2229 = vmatmul.mubr.f32.gmra.mxu0 %v2159
        %v2230 = vpop.f32.mrf.mxu0
        %v2231 = vadd.f32 %v2156, %v2230
        %v2232 = vpop.f32.mrf.mxu0
        %2233 = vmatprep.mubr.f32.mxu0 0.0
        %2234 = vmatmul.mubr.f32.gmra.mxu0 %v2162
        %v2235 = vpop.f32.mrf.mxu0
        %v2236 = vadd.f32 %v2156, %v2235
        %v2237 = vpop.f32.mrf.mxu0
        %2238 = vdwg.mxu0
        %v2239 = vmul.f32 %v2231, 0.5
        %v2240 = vmul.f32 %v2236, 0.5
        %v2241 = vmul.f32 %v2231, 0.70710677
        %v2242 = vmul.f32 %v2236, 0.70710677
        %v2243 = verf.f32.pop %v2241
        %v2244 = verf.f32.pop %v2242
        %v2245 = vadd.f32 %v2243, 1.0
        %v2246 = vadd.f32 %v2244, 1.0
        %v2247 = vmul.f32 %v2239, %v2245
        %v2248 = vmul.f32 %v2240, %v2246
        %v2249 = vld [vmem:[%s18] sm:$0xff]
        %v2250 = vld [vmem:[%s18 + $0x8] sm:$0xff]
        %v2251 = vld [vmem:[%s18 + $0x10] sm:$0xff]
        %v2252 = vld [vmem:[%s18 + $0x18] sm:$0xff]
        %v2253 = vld [vmem:[%s18 + $0x20] sm:$0xff]
        %v2254 = vld [vmem:[%s18 + $0x28] sm:$0xff]
        %v2255 = vld [vmem:[%s18 + $0x30] sm:$0xff]
        %v2256 = vld [vmem:[%s18 + $0x38] sm:$0xff]
        %v2257 = vld [vmem:[%s19] sm:$0x1]
        %v2259 = vlaneseq
        %v2260 = vshrl.u32 %v2259, 7
        %v2261 = vsub.s32 0, %v2260
        %v2262 = vrot.slane %v2257, %v2261
        %vm2264 = vcmask 523264
        %v2266 = vsel %vm2264, %v2247, 0
        %v2269 = vsel %vm2264, %v2248, 0
        %2271 = vmatprep.subr.mxu0 0.0
        %2272 = vmatpush1.msra.mxu0 0.0
        %2273 = vmatprep.subr.mxu0 0.0
        %2274 = vmatpush1.msra.mxu0 0.0
        %2275 = vmatprep.subr.mxu0 0.0
        %2276 = vmatpush1.msra.mxu0 0.0
        %2277 = vmatprep.subr.mxu0 0.0
        %2278 = vmatpush1.msra.mxu0 0.0
        %2279 = vmatprep.subr.mxu0 0.0
        %2280 = vmatpush1.msra.mxu0 0.0
        %2281 = vmatprep.subr.mxu0 0.0
        %2282 = vmatpush1.msra.mxu0 0.0
        %2283 = vmatprep.subr.mxu0 0.0
        %2284 = vmatpush1.msra.mxu0 0.0
        %2285 = vmatprep.subr.mxu0 0.0
        %2286 = vmatpush1.msra.mxu0 0.0
        %2287 = vmatprep.subr.mxu0 0.0
        %2288 = vmatpush1.msra.mxu0 %v2256
        %2289 = vmatprep.subr.mxu0 0.0
        %2290 = vmatpush1.msra.mxu0 %v2255
        %2291 = vmatprep.subr.mxu0 0.0
        %2292 = vmatpush1.msra.mxu0 %v2254
        %2293 = vmatprep.subr.mxu0 0.0
        %2294 = vmatpush1.msra.mxu0 %v2253
        %2295 = vmatprep.subr.mxu0 0.0
        %2296 = vmatpush1.msra.mxu0 %v2252
        %2297 = vmatprep.subr.mxu0 0.0
        %2298 = vmatpush1.msra.mxu0 %v2251
        %2299 = vmatprep.subr.mxu0 0.0
        %2300 = vmatpush1.msra.mxu0 %v2250
        %2301 = vmatprep.subr.mxu0 0.0
        %2302 = vmatpush1.msra.mxu0 %v2249
        %2303 = vmatprep.subr.mxu0 0.0
        %2304 = vmatpush2.msra.mxu0 0.0
        %2305 = vmatprep.subr.mxu0 0.0
        %2306 = vmatpush2.msra.mxu0 0.0
        %2307 = vmatprep.subr.mxu0 0.0
        %2308 = vmatpush2.msra.mxu0 0.0
        %2309 = vmatprep.subr.mxu0 0.0
        %2310 = vmatpush2.msra.mxu0 0.0
        %2311 = vmatprep.subr.mxu0 0.0
        %2312 = vmatpush2.msra.mxu0 0.0
        %2313 = vmatprep.subr.mxu0 0.0
        %2314 = vmatpush2.msra.mxu0 0.0
        %2315 = vmatprep.subr.mxu0 0.0
        %2316 = vmatpush2.msra.mxu0 0.0
        %2317 = vmatprep.subr.mxu0 0.0
        %2318 = vmatpush2.msra.mxu0 0.0
        %2319 = vmatprep.subr.mxu0 0.0
        %2320 = vmatpush2.msra.mxu0 0.0
        %2321 = vmatprep.subr.mxu0 0.0
        %2322 = vmatpush2.msra.mxu0 0.0
        %2323 = vmatprep.subr.mxu0 0.0
        %2324 = vmatpush2.msra.mxu0 0.0
        %2325 = vmatprep.subr.mxu0 0.0
        %2326 = vmatpush2.msra.mxu0 0.0
        %2327 = vmatprep.subr.mxu0 0.0
        %2328 = vmatpush2.msra.mxu0 0.0
        %2329 = vmatprep.subr.mxu0 0.0
        %2330 = vmatpush2.msra.mxu0 0.0
        %2331 = vmatprep.subr.mxu0 0.0
        %2332 = vmatpush2.msra.mxu0 0.0
        %2333 = vmatprep.subr.mxu0 0.0
        %2334 = vmatpush2.msra.mxu0 0.0
        %2335 = vmatprep.mubr.f32.mxu0 0.0
        %2336 = vmatmul.mubr.f32.gmra.mxu0 %v2266
        %v2337 = vpop.f32.mrf.mxu0
        %v2338 = vadd.f32 %v2262, %v2337
        %v2339 = vpop.f32.mrf.mxu0
        %2340 = vmatprep.mubr.f32.mxu0 0.0
        %2341 = vmatmul.mubr.f32.gmra.mxu0 %v2269
        %v2342 = vpop.f32.mrf.mxu0
        %v2343 = vadd.f32 %v2262, %v2342
        %v2344 = vpop.f32.mrf.mxu0
        %2345 = vdwg.mxu0
        %v2346 = vadd.f32 %v2338, %v2145
        %v2347 = vadd.f32 %v2343, %v2146
        %v2348 = vld [vmem:[%s20] sm:$0x1]
        %v2349 = vld [vmem:[%s21] sm:$0x1]
        %v2350 = vsel %vm1015, %v2346, 0.0
        %2351 = vadd.xlane.f32.xlu0 %v2350
        %v2352 = vpop.xlane.xlu0 %2351
        %v2353 = vsel %vm1015, %v2347, 0.0
        %2354 = vadd.xlane.f32.xlu0 %v2353
        %v2355 = vpop.xlane.xlu0 %2354
        %v2356 = vmul.f32 %v2352, %v1022
        %v2357 = vmul.f32 %v2355, %v1022
        %v2358 = vsub.f32 %v2346, %v2356
        %v2359 = vsub.f32 %v2347, %v2357
        %v2360 = vmul.f32 %v2358, %v2358
        %v2361 = vmul.f32 %v2359, %v2359
        %v2362 = vsel %vm1015, %v2360, 0.0
        %2363 = vadd.xlane.f32.xlu0 %v2362
        %v2364 = vpop.xlane.xlu0 %2363
        %v2365 = vsel %vm1015, %v2361, 0.0
        %2366 = vadd.xlane.f32.xlu0 %v2365
        %v2367 = vpop.xlane.xlu0 %2366
        %v2368 = vmul.f32 %v2364, %v1022
        %v2369 = vmul.f32 %v2367, %v1022
        %v2370 = vadd.f32 %v2368, 1e-12
        %v2371 = vadd.f32 %v2369, 1e-12
        %v2372 = vrsqrt.pop %v2370
        %v2373 = vrsqrt.pop %v2371
        %v2374 = vmul.f32 %v2358, %v2372
        %v2375 = vmul.f32 %v2359, %v2373
        %v2377 = vlaneseq
        %v2378 = vshrl.u32 %v2377, 7
        %v2379 = vsub.s32 0, %v2378
        %v2380 = vrot.slane %v2348, %v2379
        %v2382 = vmul.f32 %v2374, %v2380
        %v2383 = vmul.f32 %v2375, %v2380
        %v2385 = vlaneseq
        %v2386 = vshrl.u32 %v2385, 7
        %v2387 = vsub.s32 0, %v2386
        %v2388 = vrot.slane %v2349, %v2387
        %v2390 = vadd.f32 %v2382, %v2388
        %v2391 = vadd.f32 %v2383, %v2388
        %s2392 = scalar_lea.vmem %s10, 32
        %v2393 = vld [vmem:[%s2392] sm:$0xff]
        %v2394 = vld [vmem:[%s2392 + $0x8] sm:$0xff]
        %v2395 = vld [vmem:[%s2392 + $0x10] sm:$0xff]
        %v2396 = vld [vmem:[%s2392 + $0x18] sm:$0xff]
        %s2397 = scalar_lea.vmem %s11, 1
        %v2398 = vld [vmem:[%s2397] sm:$0x1]
        %v2400 = vlaneseq
        %v2401 = vshrl.u32 %v2400, 7
        %v2402 = vsub.s32 0, %v2401
        %v2403 = vrot.slane %v2398, %v2402
        %v2406 = vsel %vm1015, %v2390, 0
        %v2409 = vsel %vm1015, %v2391, 0
        %2411 = vmatprep.subr.mxu0 0.0
        %2412 = vmatpush1.msra.mxu0 0.0
        %2413 = vmatprep.subr.mxu0 0.0
        %2414 = vmatpush1.msra.mxu0 0.0
        %2415 = vmatprep.subr.mxu0 0.0
        %2416 = vmatpush1.msra.mxu0 0.0
        %2417 = vmatprep.subr.mxu0 0.0
        %2418 = vmatpush1.msra.mxu0 0.0
        %2419 = vmatprep.subr.mxu0 0.0
        %2420 = vmatpush1.msra.mxu0 0.0
        %2421 = vmatprep.subr.mxu0 0.0
        %2422 = vmatpush1.msra.mxu0 0.0
        %2423 = vmatprep.subr.mxu0 0.0
        %2424 = vmatpush1.msra.mxu0 0.0
        %2425 = vmatprep.subr.mxu0 0.0
        %2426 = vmatpush1.msra.mxu0 0.0
        %2427 = vmatprep.subr.mxu0 0.0
        %2428 = vmatpush1.msra.mxu0 0.0
        %2429 = vmatprep.subr.mxu0 0.0
        %2430 = vmatpush1.msra.mxu0 0.0
        %2431 = vmatprep.subr.mxu0 0.0
        %2432 = vmatpush1.msra.mxu0 0.0
        %2433 = vmatprep.subr.mxu0 0.0
        %2434 = vmatpush1.msra.mxu0 0.0
        %2435 = vmatprep.subr.mxu0 0.0
        %2436 = vmatpush1.msra.mxu0 %v2396
        %2437 = vmatprep.subr.mxu0 0.0
        %2438 = vmatpush1.msra.mxu0 %v2395
        %2439 = vmatprep.subr.mxu0 0.0
        %2440 = vmatpush1.msra.mxu0 %v2394
        %2441 = vmatprep.subr.mxu0 0.0
        %2442 = vmatpush1.msra.mxu0 %v2393
        %2443 = vmatprep.subr.mxu0 0.0
        %2444 = vmatpush2.msra.mxu0 0.0
        %2445 = vmatprep.subr.mxu0 0.0
        %2446 = vmatpush2.msra.mxu0 0.0
        %2447 = vmatprep.subr.mxu0 0.0
        %2448 = vmatpush2.msra.mxu0 0.0
        %2449 = vmatprep.subr.mxu0 0.0
        %2450 = vmatpush2.msra.mxu0 0.0
        %2451 = vmatprep.subr.mxu0 0.0
        %2452 = vmatpush2.msra.mxu0 0.0
        %2453 = vmatprep.subr.mxu0 0.0
        %2454 = vmatpush2.msra.mxu0 0.0
        %2455 = vmatprep.subr.mxu0 0.0
        %2456 = vmatpush2.msra.mxu0 0.0
        %2457 = vmatprep.subr.mxu0 0.0
        %2458 = vmatpush2.msra.mxu0 0.0
        %2459 = vmatprep.subr.mxu0 0.0
        %2460 = vmatpush2.msra.mxu0 0.0
        %2461 = vmatprep.subr.mxu0 0.0
        %2462 = vmatpush2.msra.mxu0 0.0
        %2463 = vmatprep.subr.mxu0 0.0
        %2464 = vmatpush2.msra.mxu0 0.0
        %2465 = vmatprep.subr.mxu0 0.0
        %2466 = vmatpush2.msra.mxu0 0.0
        %2467 = vmatprep.subr.mxu0 0.0
        %2468 = vmatpush2.msra.mxu0 0.0
        %2469 = vmatprep.subr.mxu0 0.0
        %2470 = vmatpush2.msra.mxu0 0.0
        %2471 = vmatprep.subr.mxu0 0.0
        %2472 = vmatpush2.msra.mxu0 0.0
        %2473 = vmatprep.subr.mxu0 0.0
        %2474 = vmatpush2.msra.mxu0 0.0
        %2475 = vmatprep.mubr.f32.mxu0 0.0
        %2476 = vmatmul.mubr.f32.gmra.mxu0 %v2406
        %v2477 = vpop.f32.mrf.mxu0
        %v2478 = vadd.f32 %v2403, %v2477
        %v2479 = vpop.f32.mrf.mxu0
        %2480 = vmatprep.mubr.f32.mxu0 0.0
        %2481 = vmatmul.mubr.f32.gmra.mxu0 %v2409
        %v2482 = vpop.f32.mrf.mxu0
        %v2483 = vadd.f32 %v2403, %v2482
        %v2484 = vpop.f32.mrf.mxu0
        %2485 = vdwg.mxu0
        %v2486 = vmul.f32 %v2478, 0.35355338
        %v2487 = vmul.f32 %v2483, 0.35355338
        %2490 = vrot.lane.b32.xlu0 %v2478, 96
        %v2491 = vpop.permute.xlu0 %2490
        %2492 = vrot.lane.b32.xlu0 %v2483, 96
        %v2493 = vpop.permute.xlu0 %2492
        %v2495 = vsel %vm1182, %v2486, 0
        %v2498 = vsel %vm1182, %v2487, 0
        %v2500 = vsel %vm1182, %v2491, 0
        %v2502 = vsel %vm1182, %v2493, 0
        %2504 = vmatprep.subr.mxu0 0.0
        %2505 = vmatpush1.xpose.msra.mxu0 0.0
        %2506 = vmatprep.subr.mxu0 0.0
        %2507 = vmatpush1.xpose.msra.mxu0 0.0
        %2508 = vmatprep.subr.mxu0 0.0
        %2509 = vmatpush1.xpose.msra.mxu0 0.0
        %2510 = vmatprep.subr.mxu0 0.0
        %2511 = vmatpush1.xpose.msra.mxu0 0.0
        %2512 = vmatprep.subr.mxu0 0.0
        %2513 = vmatpush1.xpose.msra.mxu0 0.0
        %2514 = vmatprep.subr.mxu0 0.0
        %2515 = vmatpush1.xpose.msra.mxu0 0.0
        %2516 = vmatprep.subr.mxu0 0.0
        %2517 = vmatpush1.xpose.msra.mxu0 0.0
        %2518 = vmatprep.subr.mxu0 0.0
        %2519 = vmatpush1.xpose.msra.mxu0 0.0
        %2520 = vmatprep.subr.mxu0 0.0
        %2521 = vmatpush1.xpose.msra.mxu0 0.0
        %2522 = vmatprep.subr.mxu0 0.0
        %2523 = vmatpush1.xpose.msra.mxu0 0.0
        %2524 = vmatprep.subr.mxu0 0.0
        %2525 = vmatpush1.xpose.msra.mxu0 0.0
        %2526 = vmatprep.subr.mxu0 0.0
        %2527 = vmatpush1.xpose.msra.mxu0 0.0
        %2528 = vmatprep.subr.mxu0 0.0
        %2529 = vmatpush1.xpose.msra.mxu0 0.0
        %2530 = vmatprep.subr.mxu0 0.0
        %2531 = vmatpush1.xpose.msra.mxu0 0.0
        %2532 = vmatprep.subr.mxu0 0.0
        %2533 = vmatpush1.xpose.msra.mxu0 %v2502
        %2534 = vmatprep.subr.mxu0 0.0
        %2535 = vmatpush1.xpose.msra.mxu0 %v2500
        %2536 = vmatprep.subr.mxu0 0.0
        %2537 = vmatpush2.xpose.msra.mxu0 0.0
        %2538 = vmatprep.subr.mxu0 0.0
        %2539 = vmatpush2.xpose.msra.mxu0 0.0
        %2540 = vmatprep.subr.mxu0 0.0
        %2541 = vmatpush2.xpose.msra.mxu0 0.0
        %2542 = vmatprep.subr.mxu0 0.0
        %2543 = vmatpush2.xpose.msra.mxu0 0.0
        %2544 = vmatprep.subr.mxu0 0.0
        %2545 = vmatpush2.xpose.msra.mxu0 0.0
        %2546 = vmatprep.subr.mxu0 0.0
        %2547 = vmatpush2.xpose.msra.mxu0 0.0
        %2548 = vmatprep.subr.mxu0 0.0
        %2549 = vmatpush2.xpose.msra.mxu0 0.0
        %2550 = vmatprep.subr.mxu0 0.0
        %2551 = vmatpush2.xpose.msra.mxu0 0.0
        %2552 = vmatprep.subr.mxu0 0.0
        %2553 = vmatpush2.xpose.msra.mxu0 0.0
        %2554 = vmatprep.subr.mxu0 0.0
        %2555 = vmatpush2.xpose.msra.mxu0 0.0
        %2556 = vmatprep.subr.mxu0 0.0
        %2557 = vmatpush2.xpose.msra.mxu0 0.0
        %2558 = vmatprep.subr.mxu0 0.0
        %2559 = vmatpush2.xpose.msra.mxu0 0.0
        %2560 = vmatprep.subr.mxu0 0.0
        %2561 = vmatpush2.xpose.msra.mxu0 0.0
        %2562 = vmatprep.subr.mxu0 0.0
        %2563 = vmatpush2.xpose.msra.mxu0 0.0
        %2564 = vmatprep.subr.mxu0 0.0
        %2565 = vmatpush2.xpose.msra.mxu0 0.0
        %2566 = vmatprep.subr.mxu0 0.0
        %2567 = vmatpush2.xpose.msra.mxu0 0.0
        %2568 = vmatprep.mubr.f32.mxu0 0.0
        %2569 = vmatmul.mubr.f32.gmra.mxu0 %v2495
        %v2570 = vpop.f32.mrf.mxu0
        %v2571 = vadd.f32 %v1080, %v2570
        %v2572 = vpop.f32.mrf.mxu0
        %2573 = vmatprep.mubr.f32.mxu0 0.0
        %2574 = vmatmul.mubr.f32.gmra.mxu0 %v2498
        %v2575 = vpop.f32.mrf.mxu0
        %v2576 = vadd.f32 %v1081, %v2575
        %v2577 = vpop.f32.mrf.mxu0
        %2578 = vdwg.mxu0
        %v2579 = vsel %vm1268, %v2571, -inf
        %2580 = vmax.xlane.f32.xlu0 %v2579
        %v2581 = vpop.xlane.xlu0 %2580
        %v2582 = vsel %vm1268, %v2576, -inf
        %2583 = vmax.xlane.f32.xlu0 %v2582
        %v2584 = vpop.xlane.xlu0 %2583
        %v2585 = vsub.f32 %v2571, %v2581
        %v2586 = vsub.f32 %v2576, %v2584
        %v2587 = vmul.f32 %v2585, 1.442695
        %v2588 = vpow.pop %v2587
        %v2589 = vmul.f32 %v2586, 1.442695
        %v2590 = vpow.pop %v2589
        %v2591 = vsel %vm1268, %v2588, 0.0
        %2592 = vadd.xlane.f32.xlu0 %v2591
        %v2593 = vpop.xlane.xlu0 %2592
        %v2594 = vsel %vm1268, %v2590, 0.0
        %2595 = vadd.xlane.f32.xlu0 %v2594
        %v2596 = vpop.xlane.xlu0 %2595
        %v2597 = vrcp.pop %v2593
        %v2598 = vrcp.pop %v2596
        %v2599 = vmul.f32 %v2588, %v2597
        %v2600 = vmul.f32 %v2590, %v2598
        %2601 = vrot.lane.b32.xlu0 %v2478, 64
        %v2602 = vpop.permute.xlu0 %2601
        %2603 = vrot.lane.b32.xlu0 %v2483, 64
        %v2604 = vpop.permute.xlu0 %2603
        %v2608 = vsel %vm1268, %v2599, 0
        %v2611 = vsel %vm1268, %v2600, 0
        %2613 = vmatprep.subr.mxu0 0.0
        %2614 = vmatpush1.msra.mxu0 0.0
        %2615 = vmatprep.subr.mxu0 0.0
        %2616 = vmatpush1.msra.mxu0 0.0
        %2617 = vmatprep.subr.mxu0 0.0
        %2618 = vmatpush1.msra.mxu0 0.0
        %2619 = vmatprep.subr.mxu0 0.0
        %2620 = vmatpush1.msra.mxu0 0.0
        %2621 = vmatprep.subr.mxu0 0.0
        %2622 = vmatpush1.msra.mxu0 0.0
        %2623 = vmatprep.subr.mxu0 0.0
        %2624 = vmatpush1.msra.mxu0 0.0
        %2625 = vmatprep.subr.mxu0 0.0
        %2626 = vmatpush1.msra.mxu0 0.0
        %2627 = vmatprep.subr.mxu0 0.0
        %2628 = vmatpush1.msra.mxu0 0.0
        %2629 = vmatprep.subr.mxu0 0.0
        %2630 = vmatpush1.msra.mxu0 0.0
        %2631 = vmatprep.subr.mxu0 0.0
        %2632 = vmatpush1.msra.mxu0 0.0
        %2633 = vmatprep.subr.mxu0 0.0
        %2634 = vmatpush1.msra.mxu0 0.0
        %2635 = vmatprep.subr.mxu0 0.0
        %2636 = vmatpush1.msra.mxu0 0.0
        %2637 = vmatprep.subr.mxu0 0.0
        %2638 = vmatpush1.msra.mxu0 0.0
        %2639 = vmatprep.subr.mxu0 0.0
        %2640 = vmatpush1.msra.mxu0 0.0
        %2641 = vmatprep.subr.mxu0 0.0
        %2642 = vmatpush1.msra.mxu0 %v2604
        %2643 = vmatprep.subr.mxu0 0.0
        %2644 = vmatpush1.msra.mxu0 %v2602
        %2645 = vmatprep.subr.mxu0 0.0
        %2646 = vmatpush2.msra.mxu0 0.0
        %2647 = vmatprep.subr.mxu0 0.0
        %2648 = vmatpush2.msra.mxu0 0.0
        %2649 = vmatprep.subr.mxu0 0.0
        %2650 = vmatpush2.msra.mxu0 0.0
        %2651 = vmatprep.subr.mxu0 0.0
        %2652 = vmatpush2.msra.mxu0 0.0
        %2653 = vmatprep.subr.mxu0 0.0
        %2654 = vmatpush2.msra.mxu0 0.0
        %2655 = vmatprep.subr.mxu0 0.0
        %2656 = vmatpush2.msra.mxu0 0.0
        %2657 = vmatprep.subr.mxu0 0.0
        %2658 = vmatpush2.msra.mxu0 0.0
        %2659 = vmatprep.subr.mxu0 0.0
        %2660 = vmatpush2.msra.mxu0 0.0
        %2661 = vmatprep.subr.mxu0 0.0
        %2662 = vmatpush2.msra.mxu0 0.0
        %2663 = vmatprep.subr.mxu0 0.0
        %2664 = vmatpush2.msra.mxu0 0.0
        %2665 = vmatprep.subr.mxu0 0.0
        %2666 = vmatpush2.msra.mxu0 0.0
        %2667 = vmatprep.subr.mxu0 0.0
        %2668 = vmatpush2.msra.mxu0 0.0
        %2669 = vmatprep.subr.mxu0 0.0
        %2670 = vmatpush2.msra.mxu0 0.0
        %2671 = vmatprep.subr.mxu0 0.0
        %2672 = vmatpush2.msra.mxu0 0.0
        %2673 = vmatprep.subr.mxu0 0.0
        %2674 = vmatpush2.msra.mxu0 0.0
        %2675 = vmatprep.subr.mxu0 0.0
        %2676 = vmatpush2.msra.mxu0 0.0
        %2677 = vmatprep.mubr.f32.mxu0 0.0
        %2678 = vmatmul.mubr.f32.gmra.mxu0 %v2608
        %v2679 = vpop.f32.mrf.mxu0
        %v2680 = vadd.f32 0.0, %v2679
        %v2681 = vpop.f32.mrf.mxu0
        %2682 = vmatprep.mubr.f32.mxu0 0.0
        %2683 = vmatmul.mubr.f32.gmra.mxu0 %v2611
        %v2684 = vpop.f32.mrf.mxu0
        %v2685 = vadd.f32 0.0, %v2684
        %v2686 = vpop.f32.mrf.mxu0
        %2687 = vdwg.mxu0
        %2688 = vrot.lane.b32.xlu0 %v2486, 120
        %v2689 = vpop.permute.xlu0 %2688
        %2690 = vrot.lane.b32.xlu0 %v2487, 120
        %v2691 = vpop.permute.xlu0 %2690
        %2692 = vrot.lane.b32.xlu0 %v2478, 88
        %v2693 = vpop.permute.xlu0 %2692
        %2694 = vrot.lane.b32.xlu0 %v2483, 88
        %v2695 = vpop.permute.xlu0 %2694
        %v2696 = vsel %vm1182, %v2689, 0
        %v2698 = vsel %vm1182, %v2691, 0
        %v2700 = vsel %vm1182, %v2693, 0
        %v2702 = vsel %vm1182, %v2695, 0
        %2704 = vmatprep.subr.mxu0 0.0
        %2705 = vmatpush1.xpose.msra.mxu0 0.0
        %2706 = vmatprep.subr.mxu0 0.0
        %2707 = vmatpush1.xpose.msra.mxu0 0.0
        %2708 = vmatprep.subr.mxu0 0.0
        %2709 = vmatpush1.xpose.msra.mxu0 0.0
        %2710 = vmatprep.subr.mxu0 0.0
        %2711 = vmatpush1.xpose.msra.mxu0 0.0
        %2712 = vmatprep.subr.mxu0 0.0
        %2713 = vmatpush1.xpose.msra.mxu0 0.0
        %2714 = vmatprep.subr.mxu0 0.0
        %2715 = vmatpush1.xpose.msra.mxu0 0.0
        %2716 = vmatprep.subr.mxu0 0.0
        %2717 = vmatpush1.xpose.msra.mxu0 0.0
        %2718 = vmatprep.subr.mxu0 0.0
        %2719 = vmatpush1.xpose.msra.mxu0 0.0
        %2720 = vmatprep.subr.mxu0 0.0
        %2721 = vmatpush1.xpose.msra.mxu0 0.0
        %2722 = vmatprep.subr.mxu0 0.0
        %2723 = vmatpush1.xpose.msra.mxu0 0.0
        %2724 = vmatprep.subr.mxu0 0.0
        %2725 = vmatpush1.xpose.msra.mxu0 0.0
        %2726 = vmatprep.subr.mxu0 0.0
        %2727 = vmatpush1.xpose.msra.mxu0 0.0
        %2728 = vmatprep.subr.mxu0 0.0
        %2729 = vmatpush1.xpose.msra.mxu0 0.0
        %2730 = vmatprep.subr.mxu0 0.0
        %2731 = vmatpush1.xpose.msra.mxu0 0.0
        %2732 = vmatprep.subr.mxu0 0.0
        %2733 = vmatpush1.xpose.msra.mxu0 %v2702
        %2734 = vmatprep.subr.mxu0 0.0
        %2735 = vmatpush1.xpose.msra.mxu0 %v2700
        %2736 = vmatprep.subr.mxu0 0.0
        %2737 = vmatpush2.xpose.msra.mxu0 0.0
        %2738 = vmatprep.subr.mxu0 0.0
        %2739 = vmatpush2.xpose.msra.mxu0 0.0
        %2740 = vmatprep.subr.mxu0 0.0
        %2741 = vmatpush2.xpose.msra.mxu0 0.0
        %2742 = vmatprep.subr.mxu0 0.0
        %2743 = vmatpush2.xpose.msra.mxu0 0.0
        %2744 = vmatprep.subr.mxu0 0.0
        %2745 = vmatpush2.xpose.msra.mxu0 0.0
        %2746 = vmatprep.subr.mxu0 0.0
        %2747 = vmatpush2.xpose.msra.mxu0 0.0
        %2748 = vmatprep.subr.mxu0 0.0
        %2749 = vmatpush2.xpose.msra.mxu0 0.0
        %2750 = vmatprep.subr.mxu0 0.0
        %2751 = vmatpush2.xpose.msra.mxu0 0.0
        %2752 = vmatprep.subr.mxu0 0.0
        %2753 = vmatpush2.xpose.msra.mxu0 0.0
        %2754 = vmatprep.subr.mxu0 0.0
        %2755 = vmatpush2.xpose.msra.mxu0 0.0
        %2756 = vmatprep.subr.mxu0 0.0
        %2757 = vmatpush2.xpose.msra.mxu0 0.0
        %2758 = vmatprep.subr.mxu0 0.0
        %2759 = vmatpush2.xpose.msra.mxu0 0.0
        %2760 = vmatprep.subr.mxu0 0.0
        %2761 = vmatpush2.xpose.msra.mxu0 0.0
        %2762 = vmatprep.subr.mxu0 0.0
        %2763 = vmatpush2.xpose.msra.mxu0 0.0
        %2764 = vmatprep.subr.mxu0 0.0
        %2765 = vmatpush2.xpose.msra.mxu0 0.0
        %2766 = vmatprep.subr.mxu0 0.0
        %2767 = vmatpush2.xpose.msra.mxu0 0.0
        %2768 = vmatprep.mubr.f32.mxu0 0.0
        %2769 = vmatmul.mubr.f32.gmra.mxu0 %v2696
        %v2770 = vpop.f32.mrf.mxu0
        %v2771 = vadd.f32 %v1080, %v2770
        %v2772 = vpop.f32.mrf.mxu0
        %2773 = vmatprep.mubr.f32.mxu0 0.0
        %2774 = vmatmul.mubr.f32.gmra.mxu0 %v2698
        %v2775 = vpop.f32.mrf.mxu0
        %v2776 = vadd.f32 %v1081, %v2775
        %v2777 = vpop.f32.mrf.mxu0
        %2778 = vdwg.mxu0
        %v2779 = vsel %vm1268, %v2771, -inf
        %2780 = vmax.xlane.f32.xlu0 %v2779
        %v2781 = vpop.xlane.xlu0 %2780
        %v2782 = vsel %vm1268, %v2776, -inf
        %2783 = vmax.xlane.f32.xlu0 %v2782
        %v2784 = vpop.xlane.xlu0 %2783
        %v2785 = vsub.f32 %v2771, %v2781
        %v2786 = vsub.f32 %v2776, %v2784
        %v2787 = vmul.f32 %v2785, 1.442695
        %v2788 = vpow.pop %v2787
        %v2789 = vmul.f32 %v2786, 1.442695
        %v2790 = vpow.pop %v2789
        %v2791 = vsel %vm1268, %v2788, 0.0
        %2792 = vadd.xlane.f32.xlu0 %v2791
        %v2793 = vpop.xlane.xlu0 %2792
        %v2794 = vsel %vm1268, %v2790, 0.0
        %2795 = vadd.xlane.f32.xlu0 %v2794
        %v2796 = vpop.xlane.xlu0 %2795
        %v2797 = vrcp.pop %v2793
        %v2798 = vrcp.pop %v2796
        %v2799 = vmul.f32 %v2788, %v2797
        %v2800 = vmul.f32 %v2790, %v2798
        %2801 = vrot.lane.b32.xlu0 %v2478, 56
        %v2802 = vpop.permute.xlu0 %2801
        %2803 = vrot.lane.b32.xlu0 %v2483, 56
        %v2804 = vpop.permute.xlu0 %2803
        %v2808 = vsel %vm1268, %v2799, 0
        %v2811 = vsel %vm1268, %v2800, 0
        %2813 = vmatprep.subr.mxu0 0.0
        %2814 = vmatpush1.msra.mxu0 0.0
        %2815 = vmatprep.subr.mxu0 0.0
        %2816 = vmatpush1.msra.mxu0 0.0
        %2817 = vmatprep.subr.mxu0 0.0
        %2818 = vmatpush1.msra.mxu0 0.0
        %2819 = vmatprep.subr.mxu0 0.0
        %2820 = vmatpush1.msra.mxu0 0.0
        %2821 = vmatprep.subr.mxu0 0.0
        %2822 = vmatpush1.msra.mxu0 0.0
        %2823 = vmatprep.subr.mxu0 0.0
        %2824 = vmatpush1.msra.mxu0 0.0
        %2825 = vmatprep.subr.mxu0 0.0
        %2826 = vmatpush1.msra.mxu0 0.0
        %2827 = vmatprep.subr.mxu0 0.0
        %2828 = vmatpush1.msra.mxu0 0.0
        %2829 = vmatprep.subr.mxu0 0.0
        %2830 = vmatpush1.msra.mxu0 0.0
        %2831 = vmatprep.subr.mxu0 0.0
        %2832 = vmatpush1.msra.mxu0 0.0
        %2833 = vmatprep.subr.mxu0 0.0
        %2834 = vmatpush1.msra.mxu0 0.0
        %2835 = vmatprep.subr.mxu0 0.0
        %2836 = vmatpush1.msra.mxu0 0.0
        %2837 = vmatprep.subr.mxu0 0.0
        %2838 = vmatpush1.msra.mxu0 0.0
        %2839 = vmatprep.subr.mxu0 0.0
        %2840 = vmatpush1.msra.mxu0 0.0
        %2841 = vmatprep.subr.mxu0 0.0
        %2842 = vmatpush1.msra.mxu0 %v2804
        %2843 = vmatprep.subr.mxu0 0.0
        %2844 = vmatpush1.msra.mxu0 %v2802
        %2845 = vmatprep.subr.mxu0 0.0
        %2846 = vmatpush2.msra.mxu0 0.0
        %2847 = vmatprep.subr.mxu0 0.0
        %2848 = vmatpush2.msra.mxu0 0.0
        %2849 = vmatprep.subr.mxu0 0.0
        %2850 = vmatpush2.msra.mxu0 0.0
        %2851 = vmatprep.subr.mxu0 0.0
        %2852 = vmatpush2.msra.mxu0 0.0
        %2853 = vmatprep.subr.mxu0 0.0
        %2854 = vmatpush2.msra.mxu0 0.0
        %2855 = vmatprep.subr.mxu0 0.0
        %2856 = vmatpush2.msra.mxu0 0.0
        %2857 = vmatprep.subr.mxu0 0.0
        %2858 = vmatpush2.msra.mxu0 0.0
        %2859 = vmatprep.subr.mxu0 0.0
        %2860 = vmatpush2.msra.mxu0 0.0
        %2861 = vmatprep.subr.mxu0 0.0
        %2862 = vmatpush2.msra.mxu0 0.0
        %2863 = vmatprep.subr.mxu0 0.0
        %2864 = vmatpush2.msra.mxu0 0.0
        %2865 = vmatprep.subr.mxu0 0.0
        %2866 = vmatpush2.msra.mxu0 0.0
        %2867 = vmatprep.subr.mxu0 0.0
        %2868 = vmatpush2.msra.mxu0 0.0
        %2869 = vmatprep.subr.mxu0 0.0
        %2870 = vmatpush2.msra.mxu0 0.0
        %2871 = vmatprep.subr.mxu0 0.0
        %2872 = vmatpush2.msra.mxu0 0.0
        %2873 = vmatprep.subr.mxu0 0.0
        %2874 = vmatpush2.msra.mxu0 0.0
        %2875 = vmatprep.subr.mxu0 0.0
        %2876 = vmatpush2.msra.mxu0 0.0
        %2877 = vmatprep.mubr.f32.mxu0 0.0
        %2878 = vmatmul.mubr.f32.gmra.mxu0 %v2808
        %v2879 = vpop.f32.mrf.mxu0
        %v2880 = vadd.f32 0.0, %v2879
        %v2881 = vpop.f32.mrf.mxu0
        %2882 = vmatprep.mubr.f32.mxu0 0.0
        %2883 = vmatmul.mubr.f32.gmra.mxu0 %v2811
        %v2884 = vpop.f32.mrf.mxu0
        %v2885 = vadd.f32 0.0, %v2884
        %v2886 = vpop.f32.mrf.mxu0
        %2887 = vdwg.mxu0
        %2888 = vrot.lane.b32.xlu0 %v2486, 112
        %v2889 = vpop.permute.xlu0 %2888
        %2890 = vrot.lane.b32.xlu0 %v2487, 112
        %v2891 = vpop.permute.xlu0 %2890
        %2892 = vrot.lane.b32.xlu0 %v2478, 80
        %v2893 = vpop.permute.xlu0 %2892
        %2894 = vrot.lane.b32.xlu0 %v2483, 80
        %v2895 = vpop.permute.xlu0 %2894
        %v2896 = vsel %vm1182, %v2889, 0
        %v2898 = vsel %vm1182, %v2891, 0
        %v2900 = vsel %vm1182, %v2893, 0
        %v2902 = vsel %vm1182, %v2895, 0
        %2904 = vmatprep.subr.mxu0 0.0
        %2905 = vmatpush1.xpose.msra.mxu0 0.0
        %2906 = vmatprep.subr.mxu0 0.0
        %2907 = vmatpush1.xpose.msra.mxu0 0.0
        %2908 = vmatprep.subr.mxu0 0.0
        %2909 = vmatpush1.xpose.msra.mxu0 0.0
        %2910 = vmatprep.subr.mxu0 0.0
        %2911 = vmatpush1.xpose.msra.mxu0 0.0
        %2912 = vmatprep.subr.mxu0 0.0
        %2913 = vmatpush1.xpose.msra.mxu0 0.0
        %2914 = vmatprep.subr.mxu0 0.0
        %2915 = vmatpush1.xpose.msra.mxu0 0.0
        %2916 = vmatprep.subr.mxu0 0.0
        %2917 = vmatpush1.xpose.msra.mxu0 0.0
        %2918 = vmatprep.subr.mxu0 0.0
        %2919 = vmatpush1.xpose.msra.mxu0 0.0
        %2920 = vmatprep.subr.mxu0 0.0
        %2921 = vmatpush1.xpose.msra.mxu0 0.0
        %2922 = vmatprep.subr.mxu0 0.0
        %2923 = vmatpush1.xpose.msra.mxu0 0.0
        %2924 = vmatprep.subr.mxu0 0.0
        %2925 = vmatpush1.xpose.msra.mxu0 0.0
        %2926 = vmatprep.subr.mxu0 0.0
        %2927 = vmatpush1.xpose.msra.mxu0 0.0
        %2928 = vmatprep.subr.mxu0 0.0
        %2929 = vmatpush1.xpose.msra.mxu0 0.0
        %2930 = vmatprep.subr.mxu0 0.0
        %2931 = vmatpush1.xpose.msra.mxu0 0.0
        %2932 = vmatprep.subr.mxu0 0.0
        %2933 = vmatpush1.xpose.msra.mxu0 %v2902
        %2934 = vmatprep.subr.mxu0 0.0
        %2935 = vmatpush1.xpose.msra.mxu0 %v2900
        %2936 = vmatprep.subr.mxu0 0.0
        %2937 = vmatpush2.xpose.msra.mxu0 0.0
        %2938 = vmatprep.subr.mxu0 0.0
        %2939 = vmatpush2.xpose.msra.mxu0 0.0
        %2940 = vmatprep.subr.mxu0 0.0
        %2941 = vmatpush2.xpose.msra.mxu0 0.0
        %2942 = vmatprep.subr.mxu0 0.0
        %2943 = vmatpush2.xpose.msra.mxu0 0.0
        %2944 = vmatprep.subr.mxu0 0.0
        %2945 = vmatpush2.xpose.msra.mxu0 0.0
        %2946 = vmatprep.subr.mxu0 0.0
        %2947 = vmatpush2.xpose.msra.mxu0 0.0
        %2948 = vmatprep.subr.mxu0 0.0
        %2949 = vmatpush2.xpose.msra.mxu0 0.0
        %2950 = vmatprep.subr.mxu0 0.0
        %2951 = vmatpush2.xpose.msra.mxu0 0.0
        %2952 = vmatprep.subr.mxu0 0.0
        %2953 = vmatpush2.xpose.msra.mxu0 0.0
        %2954 = vmatprep.subr.mxu0 0.0
        %2955 = vmatpush2.xpose.msra.mxu0 0.0
        %2956 = vmatprep.subr.mxu0 0.0
        %2957 = vmatpush2.xpose.msra.mxu0 0.0
        %2958 = vmatprep.subr.mxu0 0.0
        %2959 = vmatpush2.xpose.msra.mxu0 0.0
        %2960 = vmatprep.subr.mxu0 0.0
        %2961 = vmatpush2.xpose.msra.mxu0 0.0
        %2962 = vmatprep.subr.mxu0 0.0
        %2963 = vmatpush2.xpose.msra.mxu0 0.0
        %2964 = vmatprep.subr.mxu0 0.0
        %2965 = vmatpush2.xpose.msra.mxu0 0.0
        %2966 = vmatprep.subr.mxu0 0.0
        %2967 = vmatpush2.xpose.msra.mxu0 0.0
        %2968 = vmatprep.mubr.f32.mxu0 0.0
        %2969 = vmatmul.mubr.f32.gmra.mxu0 %v2896
        %v2970 = vpop.f32.mrf.mxu0
        %v2971 = vadd.f32 %v1080, %v2970
        %v2972 = vpop.f32.mrf.mxu0
        %2973 = vmatprep.mubr.f32.mxu0 0.0
        %2974 = vmatmul.mubr.f32.gmra.mxu0 %v2898
        %v2975 = vpop.f32.mrf.mxu0
        %v2976 = vadd.f32 %v1081, %v2975
        %v2977 = vpop.f32.mrf.mxu0
        %2978 = vdwg.mxu0
        %v2979 = vsel %vm1268, %v2971, -inf
        %2980 = vmax.xlane.f32.xlu0 %v2979
        %v2981 = vpop.xlane.xlu0 %2980
        %v2982 = vsel %vm1268, %v2976, -inf
        %2983 = vmax.xlane.f32.xlu0 %v2982
        %v2984 = vpop.xlane.xlu0 %2983
        %v2985 = vsub.f32 %v2971, %v2981
        %v2986 = vsub.f32 %v2976, %v2984
        %v2987 = vmul.f32 %v2985, 1.442695
        %v2988 = vpow.pop %v2987
        %v2989 = vmul.f32 %v2986, 1.442695
        %v2990 = vpow.pop %v2989
        %v2991 = vsel %vm1268, %v2988, 0.0
        %2992 = vadd.xlane.f32.xlu0 %v2991
        %v2993 = vpop.xlane.xlu0 %2992
        %v2994 = vsel %vm1268, %v2990, 0.0
        %2995 = vadd.xlane.f32.xlu0 %v2994
        %v2996 = vpop.xlane.xlu0 %2995
        %v2997 = vrcp.pop %v2993
        %v2998 = vrcp.pop %v2996
        %v2999 = vmul.f32 %v2988, %v2997
        %v3000 = vmul.f32 %v2990, %v2998
        %3001 = vrot.lane.b32.xlu0 %v2478, 48
        %v3002 = vpop.permute.xlu0 %3001
        %3003 = vrot.lane.b32.xlu0 %v2483, 48
        %v3004 = vpop.permute.xlu0 %3003
        %v3008 = vsel %vm1268, %v2999, 0
        %v3011 = vsel %vm1268, %v3000, 0
        %3013 = vmatprep.subr.mxu0 0.0
        %3014 = vmatpush1.msra.mxu0 0.0
        %3015 = vmatprep.subr.mxu0 0.0
        %3016 = vmatpush1.msra.mxu0 0.0
        %3017 = vmatprep.subr.mxu0 0.0
        %3018 = vmatpush1.msra.mxu0 0.0
        %3019 = vmatprep.subr.mxu0 0.0
        %3020 = vmatpush1.msra.mxu0 0.0
        %3021 = vmatprep.subr.mxu0 0.0
        %3022 = vmatpush1.msra.mxu0 0.0
        %3023 = vmatprep.subr.mxu0 0.0
        %3024 = vmatpush1.msra.mxu0 0.0
        %3025 = vmatprep.subr.mxu0 0.0
        %3026 = vmatpush1.msra.mxu0 0.0
        %3027 = vmatprep.subr.mxu0 0.0
        %3028 = vmatpush1.msra.mxu0 0.0
        %3029 = vmatprep.subr.mxu0 0.0
        %3030 = vmatpush1.msra.mxu0 0.0
        %3031 = vmatprep.subr.mxu0 0.0
        %3032 = vmatpush1.msra.mxu0 0.0
        %3033 = vmatprep.subr.mxu0 0.0
        %3034 = vmatpush1.msra.mxu0 0.0
        %3035 = vmatprep.subr.mxu0 0.0
        %3036 = vmatpush1.msra.mxu0 0.0
        %3037 = vmatprep.subr.mxu0 0.0
        %3038 = vmatpush1.msra.mxu0 0.0
        %3039 = vmatprep.subr.mxu0 0.0
        %3040 = vmatpush1.msra.mxu0 0.0
        %3041 = vmatprep.subr.mxu0 0.0
        %3042 = vmatpush1.msra.mxu0 %v3004
        %3043 = vmatprep.subr.mxu0 0.0
        %3044 = vmatpush1.msra.mxu0 %v3002
        %3045 = vmatprep.subr.mxu0 0.0
        %3046 = vmatpush2.msra.mxu0 0.0
        %3047 = vmatprep.subr.mxu0 0.0
        %3048 = vmatpush2.msra.mxu0 0.0
        %3049 = vmatprep.subr.mxu0 0.0
        %3050 = vmatpush2.msra.mxu0 0.0
        %3051 = vmatprep.subr.mxu0 0.0
        %3052 = vmatpush2.msra.mxu0 0.0
        %3053 = vmatprep.subr.mxu0 0.0
        %3054 = vmatpush2.msra.mxu0 0.0
        %3055 = vmatprep.subr.mxu0 0.0
        %3056 = vmatpush2.msra.mxu0 0.0
        %3057 = vmatprep.subr.mxu0 0.0
        %3058 = vmatpush2.msra.mxu0 0.0
        %3059 = vmatprep.subr.mxu0 0.0
        %3060 = vmatpush2.msra.mxu0 0.0
        %3061 = vmatprep.subr.mxu0 0.0
        %3062 = vmatpush2.msra.mxu0 0.0
        %3063 = vmatprep.subr.mxu0 0.0
        %3064 = vmatpush2.msra.mxu0 0.0
        %3065 = vmatprep.subr.mxu0 0.0
        %3066 = vmatpush2.msra.mxu0 0.0
        %3067 = vmatprep.subr.mxu0 0.0
        %3068 = vmatpush2.msra.mxu0 0.0
        %3069 = vmatprep.subr.mxu0 0.0
        %3070 = vmatpush2.msra.mxu0 0.0
        %3071 = vmatprep.subr.mxu0 0.0
        %3072 = vmatpush2.msra.mxu0 0.0
        %3073 = vmatprep.subr.mxu0 0.0
        %3074 = vmatpush2.msra.mxu0 0.0
        %3075 = vmatprep.subr.mxu0 0.0
        %3076 = vmatpush2.msra.mxu0 0.0
        %3077 = vmatprep.mubr.f32.mxu0 0.0
        %3078 = vmatmul.mubr.f32.gmra.mxu0 %v3008
        %v3079 = vpop.f32.mrf.mxu0
        %v3080 = vadd.f32 0.0, %v3079
        %v3081 = vpop.f32.mrf.mxu0
        %3082 = vmatprep.mubr.f32.mxu0 0.0
        %3083 = vmatmul.mubr.f32.gmra.mxu0 %v3011
        %v3084 = vpop.f32.mrf.mxu0
        %v3085 = vadd.f32 0.0, %v3084
        %v3086 = vpop.f32.mrf.mxu0
        %3087 = vdwg.mxu0
        %3088 = vrot.lane.b32.xlu0 %v2486, 104
        %v3089 = vpop.permute.xlu0 %3088
        %3090 = vrot.lane.b32.xlu0 %v2487, 104
        %v3091 = vpop.permute.xlu0 %3090
        %3092 = vrot.lane.b32.xlu0 %v2478, 72
        %v3093 = vpop.permute.xlu0 %3092
        %3094 = vrot.lane.b32.xlu0 %v2483, 72
        %v3095 = vpop.permute.xlu0 %3094
        %v3096 = vsel %vm1182, %v3089, 0
        %v3098 = vsel %vm1182, %v3091, 0
        %v3100 = vsel %vm1182, %v3093, 0
        %v3102 = vsel %vm1182, %v3095, 0
        %3104 = vmatprep.subr.mxu0 0.0
        %3105 = vmatpush1.xpose.msra.mxu0 0.0
        %3106 = vmatprep.subr.mxu0 0.0
        %3107 = vmatpush1.xpose.msra.mxu0 0.0
        %3108 = vmatprep.subr.mxu0 0.0
        %3109 = vmatpush1.xpose.msra.mxu0 0.0
        %3110 = vmatprep.subr.mxu0 0.0
        %3111 = vmatpush1.xpose.msra.mxu0 0.0
        %3112 = vmatprep.subr.mxu0 0.0
        %3113 = vmatpush1.xpose.msra.mxu0 0.0
        %3114 = vmatprep.subr.mxu0 0.0
        %3115 = vmatpush1.xpose.msra.mxu0 0.0
        %3116 = vmatprep.subr.mxu0 0.0
        %3117 = vmatpush1.xpose.msra.mxu0 0.0
        %3118 = vmatprep.subr.mxu0 0.0
        %3119 = vmatpush1.xpose.msra.mxu0 0.0
        %3120 = vmatprep.subr.mxu0 0.0
        %3121 = vmatpush1.xpose.msra.mxu0 0.0
        %3122 = vmatprep.subr.mxu0 0.0
        %3123 = vmatpush1.xpose.msra.mxu0 0.0
        %3124 = vmatprep.subr.mxu0 0.0
        %3125 = vmatpush1.xpose.msra.mxu0 0.0
        %3126 = vmatprep.subr.mxu0 0.0
        %3127 = vmatpush1.xpose.msra.mxu0 0.0
        %3128 = vmatprep.subr.mxu0 0.0
        %3129 = vmatpush1.xpose.msra.mxu0 0.0
        %3130 = vmatprep.subr.mxu0 0.0
        %3131 = vmatpush1.xpose.msra.mxu0 0.0
        %3132 = vmatprep.subr.mxu0 0.0
        %3133 = vmatpush1.xpose.msra.mxu0 %v3102
        %3134 = vmatprep.subr.mxu0 0.0
        %3135 = vmatpush1.xpose.msra.mxu0 %v3100
        %3136 = vmatprep.subr.mxu0 0.0
        %3137 = vmatpush2.xpose.msra.mxu0 0.0
        %3138 = vmatprep.subr.mxu0 0.0
        %3139 = vmatpush2.xpose.msra.mxu0 0.0
        %3140 = vmatprep.subr.mxu0 0.0
        %3141 = vmatpush2.xpose.msra.mxu0 0.0
        %3142 = vmatprep.subr.mxu0 0.0
        %3143 = vmatpush2.xpose.msra.mxu0 0.0
        %3144 = vmatprep.subr.mxu0 0.0
        %3145 = vmatpush2.xpose.msra.mxu0 0.0
        %3146 = vmatprep.subr.mxu0 0.0
        %3147 = vmatpush2.xpose.msra.mxu0 0.0
        %3148 = vmatprep.subr.mxu0 0.0
        %3149 = vmatpush2.xpose.msra.mxu0 0.0
        %3150 = vmatprep.subr.mxu0 0.0
        %3151 = vmatpush2.xpose.msra.mxu0 0.0
        %3152 = vmatprep.subr.mxu0 0.0
        %3153 = vmatpush2.xpose.msra.mxu0 0.0
        %3154 = vmatprep.subr.mxu0 0.0
        %3155 = vmatpush2.xpose.msra.mxu0 0.0
        %3156 = vmatprep.subr.mxu0 0.0
        %3157 = vmatpush2.xpose.msra.mxu0 0.0
        %3158 = vmatprep.subr.mxu0 0.0
        %3159 = vmatpush2.xpose.msra.mxu0 0.0
        %3160 = vmatprep.subr.mxu0 0.0
        %3161 = vmatpush2.xpose.msra.mxu0 0.0
        %3162 = vmatprep.subr.mxu0 0.0
        %3163 = vmatpush2.xpose.msra.mxu0 0.0
        %3164 = vmatprep.subr.mxu0 0.0
        %3165 = vmatpush2.xpose.msra.mxu0 0.0
        %3166 = vmatprep.subr.mxu0 0.0
        %3167 = vmatpush2.xpose.msra.mxu0 0.0
        %3168 = vmatprep.mubr.f32.mxu0 0.0
        %3169 = vmatmul.mubr.f32.gmra.mxu0 %v3096
        %v3170 = vpop.f32.mrf.mxu0
        %v3171 = vadd.f32 %v1080, %v3170
        %v3172 = vpop.f32.mrf.mxu0
        %3173 = vmatprep.mubr.f32.mxu0 0.0
        %3174 = vmatmul.mubr.f32.gmra.mxu0 %v3098
        %v3175 = vpop.f32.mrf.mxu0
        %v3176 = vadd.f32 %v1081, %v3175
        %v3177 = vpop.f32.mrf.mxu0
        %3178 = vdwg.mxu0
        %v3179 = vsel %vm1268, %v3171, -inf
        %3180 = vmax.xlane.f32.xlu0 %v3179
        %v3181 = vpop.xlane.xlu0 %3180
        %v3182 = vsel %vm1268, %v3176, -inf
        %3183 = vmax.xlane.f32.xlu0 %v3182
        %v3184 = vpop.xlane.xlu0 %3183
        %v3185 = vsub.f32 %v3171, %v3181
        %v3186 = vsub.f32 %v3176, %v3184
        %v3187 = vmul.f32 %v3185, 1.442695
        %v3188 = vpow.pop %v3187
        %v3189 = vmul.f32 %v3186, 1.442695
        %v3190 = vpow.pop %v3189
        %v3191 = vsel %vm1268, %v3188, 0.0
        %3192 = vadd.xlane.f32.xlu0 %v3191
        %v3193 = vpop.xlane.xlu0 %3192
        %v3194 = vsel %vm1268, %v3190, 0.0
        %3195 = vadd.xlane.f32.xlu0 %v3194
        %v3196 = vpop.xlane.xlu0 %3195
        %v3197 = vrcp.pop %v3193
        %v3198 = vrcp.pop %v3196
        %v3199 = vmul.f32 %v3188, %v3197
        %v3200 = vmul.f32 %v3190, %v3198
        %3201 = vrot.lane.b32.xlu0 %v2478, 40
        %v3202 = vpop.permute.xlu0 %3201
        %3203 = vrot.lane.b32.xlu0 %v2483, 40
        %v3204 = vpop.permute.xlu0 %3203
        %v3208 = vsel %vm1268, %v3199, 0
        %v3211 = vsel %vm1268, %v3200, 0
        %3213 = vmatprep.subr.mxu0 0.0
        %3214 = vmatpush1.msra.mxu0 0.0
        %3215 = vmatprep.subr.mxu0 0.0
        %3216 = vmatpush1.msra.mxu0 0.0
        %3217 = vmatprep.subr.mxu0 0.0
        %3218 = vmatpush1.msra.mxu0 0.0
        %3219 = vmatprep.subr.mxu0 0.0
        %3220 = vmatpush1.msra.mxu0 0.0
        %3221 = vmatprep.subr.mxu0 0.0
        %3222 = vmatpush1.msra.mxu0 0.0
        %3223 = vmatprep.subr.mxu0 0.0
        %3224 = vmatpush1.msra.mxu0 0.0
        %3225 = vmatprep.subr.mxu0 0.0
        %3226 = vmatpush1.msra.mxu0 0.0
        %3227 = vmatprep.subr.mxu0 0.0
        %3228 = vmatpush1.msra.mxu0 0.0
        %3229 = vmatprep.subr.mxu0 0.0
        %3230 = vmatpush1.msra.mxu0 0.0
        %3231 = vmatprep.subr.mxu0 0.0
        %3232 = vmatpush1.msra.mxu0 0.0
        %3233 = vmatprep.subr.mxu0 0.0
        %3234 = vmatpush1.msra.mxu0 0.0
        %3235 = vmatprep.subr.mxu0 0.0
        %3236 = vmatpush1.msra.mxu0 0.0
        %3237 = vmatprep.subr.mxu0 0.0
        %3238 = vmatpush1.msra.mxu0 0.0
        %3239 = vmatprep.subr.mxu0 0.0
        %3240 = vmatpush1.msra.mxu0 0.0
        %3241 = vmatprep.subr.mxu0 0.0
        %3242 = vmatpush1.msra.mxu0 %v3204
        %3243 = vmatprep.subr.mxu0 0.0
        %3244 = vmatpush1.msra.mxu0 %v3202
        %3245 = vmatprep.subr.mxu0 0.0
        %3246 = vmatpush2.msra.mxu0 0.0
        %3247 = vmatprep.subr.mxu0 0.0
        %3248 = vmatpush2.msra.mxu0 0.0
        %3249 = vmatprep.subr.mxu0 0.0
        %3250 = vmatpush2.msra.mxu0 0.0
        %3251 = vmatprep.subr.mxu0 0.0
        %3252 = vmatpush2.msra.mxu0 0.0
        %3253 = vmatprep.subr.mxu0 0.0
        %3254 = vmatpush2.msra.mxu0 0.0
        %3255 = vmatprep.subr.mxu0 0.0
        %3256 = vmatpush2.msra.mxu0 0.0
        %3257 = vmatprep.subr.mxu0 0.0
        %3258 = vmatpush2.msra.mxu0 0.0
        %3259 = vmatprep.subr.mxu0 0.0
        %3260 = vmatpush2.msra.mxu0 0.0
        %3261 = vmatprep.subr.mxu0 0.0
        %3262 = vmatpush2.msra.mxu0 0.0
        %3263 = vmatprep.subr.mxu0 0.0
        %3264 = vmatpush2.msra.mxu0 0.0
        %3265 = vmatprep.subr.mxu0 0.0
        %3266 = vmatpush2.msra.mxu0 0.0
        %3267 = vmatprep.subr.mxu0 0.0
        %3268 = vmatpush2.msra.mxu0 0.0
        %3269 = vmatprep.subr.mxu0 0.0
        %3270 = vmatpush2.msra.mxu0 0.0
        %3271 = vmatprep.subr.mxu0 0.0
        %3272 = vmatpush2.msra.mxu0 0.0
        %3273 = vmatprep.subr.mxu0 0.0
        %3274 = vmatpush2.msra.mxu0 0.0
        %3275 = vmatprep.subr.mxu0 0.0
        %3276 = vmatpush2.msra.mxu0 0.0
        %3277 = vmatprep.mubr.f32.mxu0 0.0
        %3278 = vmatmul.mubr.f32.gmra.mxu0 %v3208
        %v3279 = vpop.f32.mrf.mxu0
        %v3280 = vadd.f32 0.0, %v3279
        %v3281 = vpop.f32.mrf.mxu0
        %3282 = vmatprep.mubr.f32.mxu0 0.0
        %3283 = vmatmul.mubr.f32.gmra.mxu0 %v3211
        %v3284 = vpop.f32.mrf.mxu0
        %v3285 = vadd.f32 0.0, %v3284
        %v3286 = vpop.f32.mrf.mxu0
        %3287 = vdwg.mxu0
        %3290 = vrot.lane.b32.xlu0 %v2880, 8
        %v3291 = vpop.permute.xlu0 %3290
        %3292 = vrot.lane.b32.xlu0 %v2885, 8
        %v3293 = vpop.permute.xlu0 %3292
        %3298 = vrot.lane.b32.xlu0 %v3080, 16
        %v3299 = vpop.permute.xlu0 %3298
        %3300 = vrot.lane.b32.xlu0 %v3085, 16
        %v3301 = vpop.permute.xlu0 %3300
        %3306 = vrot.lane.b32.xlu0 %v3280, 24
        %v3307 = vpop.permute.xlu0 %3306
        %3308 = vrot.lane.b32.xlu0 %v3285, 24
        %v3309 = vpop.permute.xlu0 %3308
        %v3312 = vsel %vm1182, %v2680, %v3291
        %v3313 = vsel %vm1182, %v2685, %v3293
        %v3314 = vsel %vm1268, %v3312, %v3299
        %v3315 = vsel %vm1268, %v3313, %v3301
        %v3316 = vsel %vm2006, %v3314, %v3307
        %v3317 = vsel %vm2006, %v3315, %v3309
        %s3318 = scalar_lea.vmem %s12, 32
        %v3319 = vld [vmem:[%s3318] sm:$0xff]
        %v3320 = vld [vmem:[%s3318 + $0x8] sm:$0xff]
        %v3321 = vld [vmem:[%s3318 + $0x10] sm:$0xff]
        %v3322 = vld [vmem:[%s3318 + $0x18] sm:$0xff]
        %s3323 = scalar_lea.vmem %s13, 1
        %v3324 = vld [vmem:[%s3323] sm:$0x1]
        %v3326 = vlaneseq
        %v3327 = vshrl.u32 %v3326, 7
        %v3328 = vsub.s32 0, %v3327
        %v3329 = vrot.slane %v3324, %v3328
        %v3332 = vsel %vm1015, %v3316, 0
        %v3335 = vsel %vm1015, %v3317, 0
        %3337 = vmatprep.subr.mxu0 0.0
        %3338 = vmatpush1.msra.mxu0 0.0
        %3339 = vmatprep.subr.mxu0 0.0
        %3340 = vmatpush1.msra.mxu0 0.0
        %3341 = vmatprep.subr.mxu0 0.0
        %3342 = vmatpush1.msra.mxu0 0.0
        %3343 = vmatprep.subr.mxu0 0.0
        %3344 = vmatpush1.msra.mxu0 0.0
        %3345 = vmatprep.subr.mxu0 0.0
        %3346 = vmatpush1.msra.mxu0 0.0
        %3347 = vmatprep.subr.mxu0 0.0
        %3348 = vmatpush1.msra.mxu0 0.0
        %3349 = vmatprep.subr.mxu0 0.0
        %3350 = vmatpush1.msra.mxu0 0.0
        %3351 = vmatprep.subr.mxu0 0.0
        %3352 = vmatpush1.msra.mxu0 0.0
        %3353 = vmatprep.subr.mxu0 0.0
        %3354 = vmatpush1.msra.mxu0 0.0
        %3355 = vmatprep.subr.mxu0 0.0
        %3356 = vmatpush1.msra.mxu0 0.0
        %3357 = vmatprep.subr.mxu0 0.0
        %3358 = vmatpush1.msra.mxu0 0.0
        %3359 = vmatprep.subr.mxu0 0.0
        %3360 = vmatpush1.msra.mxu0 0.0
        %3361 = vmatprep.subr.mxu0 0.0
        %3362 = vmatpush1.msra.mxu0 %v3322
        %3363 = vmatprep.subr.mxu0 0.0
        %3364 = vmatpush1.msra.mxu0 %v3321
        %3365 = vmatprep.subr.mxu0 0.0
        %3366 = vmatpush1.msra.mxu0 %v3320
        %3367 = vmatprep.subr.mxu0 0.0
        %3368 = vmatpush1.msra.mxu0 %v3319
        %3369 = vmatprep.subr.mxu0 0.0
        %3370 = vmatpush2.msra.mxu0 0.0
        %3371 = vmatprep.subr.mxu0 0.0
        %3372 = vmatpush2.msra.mxu0 0.0
        %3373 = vmatprep.subr.mxu0 0.0
        %3374 = vmatpush2.msra.mxu0 0.0
        %3375 = vmatprep.subr.mxu0 0.0
        %3376 = vmatpush2.msra.mxu0 0.0
        %3377 = vmatprep.subr.mxu0 0.0
        %3378 = vmatpush2.msra.mxu0 0.0
        %3379 = vmatprep.subr.mxu0 0.0
        %3380 = vmatpush2.msra.mxu0 0.0
        %3381 = vmatprep.subr.mxu0 0.0
        %3382 = vmatpush2.msra.mxu0 0.0
        %3383 = vmatprep.subr.mxu0 0.0
        %3384 = vmatpush2.msra.mxu0 0.0
        %3385 = vmatprep.subr.mxu0 0.0
        %3386 = vmatpush2.msra.mxu0 0.0
        %3387 = vmatprep.subr.mxu0 0.0
        %3388 = vmatpush2.msra.mxu0 0.0
        %3389 = vmatprep.subr.mxu0 0.0
        %3390 = vmatpush2.msra.mxu0 0.0
        %3391 = vmatprep.subr.mxu0 0.0
        %3392 = vmatpush2.msra.mxu0 0.0
        %3393 = vmatprep.subr.mxu0 0.0
        %3394 = vmatpush2.msra.mxu0 0.0
        %3395 = vmatprep.subr.mxu0 0.0
        %3396 = vmatpush2.msra.mxu0 0.0
        %3397 = vmatprep.subr.mxu0 0.0
        %3398 = vmatpush2.msra.mxu0 0.0
        %3399 = vmatprep.subr.mxu0 0.0
        %3400 = vmatpush2.msra.mxu0 0.0
        %3401 = vmatprep.mubr.f32.mxu0 0.0
        %3402 = vmatmul.mubr.f32.gmra.mxu0 %v3332
        %v3403 = vpop.f32.mrf.mxu0
        %v3404 = vadd.f32 %v3329, %v3403
        %v3405 = vpop.f32.mrf.mxu0
        %3406 = vmatprep.mubr.f32.mxu0 0.0
        %3407 = vmatmul.mubr.f32.gmra.mxu0 %v3335
        %v3408 = vpop.f32.mrf.mxu0
        %v3409 = vadd.f32 %v3329, %v3408
        %v3410 = vpop.f32.mrf.mxu0
        %3411 = vdwg.mxu0
        %v3412 = vadd.f32 %v3404, %v2390
        %v3413 = vadd.f32 %v3409, %v2391
        %s3414 = scalar_lea.vmem %s14, 1
        %v3415 = vld [vmem:[%s3414] sm:$0x1]
        %s3416 = scalar_lea.vmem %s15, 1
        %v3417 = vld [vmem:[%s3416] sm:$0x1]
        %v3418 = vsel %vm1015, %v3412, 0.0
        %3419 = vadd.xlane.f32.xlu0 %v3418
        %v3420 = vpop.xlane.xlu0 %3419
        %v3421 = vsel %vm1015, %v3413, 0.0
        %3422 = vadd.xlane.f32.xlu0 %v3421
        %v3423 = vpop.xlane.xlu0 %3422
        %v3424 = vmul.f32 %v3420, %v1022
        %v3425 = vmul.f32 %v3423, %v1022
        %v3426 = vsub.f32 %v3412, %v3424
        %v3427 = vsub.f32 %v3413, %v3425
        %v3428 = vmul.f32 %v3426, %v3426
        %v3429 = vmul.f32 %v3427, %v3427
        %v3430 = vsel %vm1015, %v3428, 0.0
        %3431 = vadd.xlane.f32.xlu0 %v3430
        %v3432 = vpop.xlane.xlu0 %3431
        %v3433 = vsel %vm1015, %v3429, 0.0
        %3434 = vadd.xlane.f32.xlu0 %v3433
        %v3435 = vpop.xlane.xlu0 %3434
        %v3436 = vmul.f32 %v3432, %v1022
        %v3437 = vmul.f32 %v3435, %v1022
        %v3438 = vadd.f32 %v3436, 1e-12
        %v3439 = vadd.f32 %v3437, 1e-12
        %v3440 = vrsqrt.pop %v3438
        %v3441 = vrsqrt.pop %v3439
        %v3442 = vmul.f32 %v3426, %v3440
        %v3443 = vmul.f32 %v3427, %v3441
        %v3445 = vlaneseq
        %v3446 = vshrl.u32 %v3445, 7
        %v3447 = vsub.s32 0, %v3446
        %v3448 = vrot.slane %v3415, %v3447
        %v3450 = vmul.f32 %v3442, %v3448
        %v3451 = vmul.f32 %v3443, %v3448
        %v3453 = vlaneseq
        %v3454 = vshrl.u32 %v3453, 7
        %v3455 = vsub.s32 0, %v3454
        %v3456 = vrot.slane %v3417, %v3455
        %v3458 = vadd.f32 %v3450, %v3456
        %v3459 = vadd.f32 %v3451, %v3456
        %s3460 = scalar_lea.vmem %s16, 32
        %v3461 = vld [vmem:[%s3460] sm:$0xff]
        %v3462 = vld [vmem:[%s3460 + $0x8] sm:$0xff]
        %v3463 = vld [vmem:[%s3460 + $0x10] sm:$0xff]
        %v3464 = vld [vmem:[%s3460 + $0x18] sm:$0xff]
        %s3465 = scalar_lea.vmem %s17, 1
        %v3466 = vld [vmem:[%s3465] sm:$0x1]
        %v3468 = vlaneseq
        %v3469 = vshrl.u32 %v3468, 7
        %v3470 = vsub.s32 0, %v3469
        %v3471 = vrot.slane %v3466, %v3470
        %v3474 = vsel %vm1015, %v3458, 0
        %v3477 = vsel %vm1015, %v3459, 0
        %3479 = vmatprep.subr.mxu0 0.0
        %3480 = vmatpush1.msra.mxu0 0.0
        %3481 = vmatprep.subr.mxu0 0.0
        %3482 = vmatpush1.msra.mxu0 0.0
        %3483 = vmatprep.subr.mxu0 0.0
        %3484 = vmatpush1.msra.mxu0 0.0
        %3485 = vmatprep.subr.mxu0 0.0
        %3486 = vmatpush1.msra.mxu0 0.0
        %3487 = vmatprep.subr.mxu0 0.0
        %3488 = vmatpush1.msra.mxu0 0.0
        %3489 = vmatprep.subr.mxu0 0.0
        %3490 = vmatpush1.msra.mxu0 0.0
        %3491 = vmatprep.subr.mxu0 0.0
        %3492 = vmatpush1.msra.mxu0 0.0
        %3493 = vmatprep.subr.mxu0 0.0
        %3494 = vmatpush1.msra.mxu0 0.0
        %3495 = vmatprep.subr.mxu0 0.0
        %3496 = vmatpush1.msra.mxu0 0.0
        %3497 = vmatprep.subr.mxu0 0.0
        %3498 = vmatpush1.msra.mxu0 0.0
        %3499 = vmatprep.subr.mxu0 0.0
        %3500 = vmatpush1.msra.mxu0 0.0
        %3501 = vmatprep.subr.mxu0 0.0
        %3502 = vmatpush1.msra.mxu0 0.0
        %3503 = vmatprep.subr.mxu0 0.0
        %3504 = vmatpush1.msra.mxu0 %v3464
        %3505 = vmatprep.subr.mxu0 0.0
        %3506 = vmatpush1.msra.mxu0 %v3463
        %3507 = vmatprep.subr.mxu0 0.0
        %3508 = vmatpush1.msra.mxu0 %v3462
        %3509 = vmatprep.subr.mxu0 0.0
        %3510 = vmatpush1.msra.mxu0 %v3461
        %3511 = vmatprep.subr.mxu0 0.0
        %3512 = vmatpush2.msra.mxu0 0.0
        %3513 = vmatprep.subr.mxu0 0.0
        %3514 = vmatpush2.msra.mxu0 0.0
        %3515 = vmatprep.subr.mxu0 0.0
        %3516 = vmatpush2.msra.mxu0 0.0
        %3517 = vmatprep.subr.mxu0 0.0
        %3518 = vmatpush2.msra.mxu0 0.0
        %3519 = vmatprep.subr.mxu0 0.0
        %3520 = vmatpush2.msra.mxu0 0.0
        %3521 = vmatprep.subr.mxu0 0.0
        %3522 = vmatpush2.msra.mxu0 0.0
        %3523 = vmatprep.subr.mxu0 0.0
        %3524 = vmatpush2.msra.mxu0 0.0
        %3525 = vmatprep.subr.mxu0 0.0
        %3526 = vmatpush2.msra.mxu0 0.0
        %3527 = vmatprep.subr.mxu0 0.0
        %3528 = vmatpush2.msra.mxu0 0.0
        %3529 = vmatprep.subr.mxu0 0.0
        %3530 = vmatpush2.msra.mxu0 0.0
        %3531 = vmatprep.subr.mxu0 0.0
        %3532 = vmatpush2.msra.mxu0 0.0
        %3533 = vmatprep.subr.mxu0 0.0
        %3534 = vmatpush2.msra.mxu0 0.0
        %3535 = vmatprep.subr.mxu0 0.0
        %3536 = vmatpush2.msra.mxu0 0.0
        %3537 = vmatprep.subr.mxu0 0.0
        %3538 = vmatpush2.msra.mxu0 0.0
        %3539 = vmatprep.subr.mxu0 0.0
        %3540 = vmatpush2.msra.mxu0 0.0
        %3541 = vmatprep.subr.mxu0 0.0
        %3542 = vmatpush2.msra.mxu0 0.0
        %3543 = vmatprep.mubr.f32.mxu0 0.0
        %3544 = vmatmul.mubr.f32.gmra.mxu0 %v3474
        %v3545 = vpop.f32.mrf.mxu0
        %v3546 = vadd.f32 %v3471, %v3545
        %v3547 = vpop.f32.mrf.mxu0
        %3548 = vmatprep.mubr.f32.mxu0 0.0
        %3549 = vmatmul.mubr.f32.gmra.mxu0 %v3477
        %v3550 = vpop.f32.mrf.mxu0
        %v3551 = vadd.f32 %v3471, %v3550
        %v3552 = vpop.f32.mrf.mxu0
        %3553 = vdwg.mxu0
        %v3554 = vmul.f32 %v3546, 0.5
        %v3555 = vmul.f32 %v3551, 0.5
        %v3556 = vmul.f32 %v3546, 0.70710677
        %v3557 = vmul.f32 %v3551, 0.70710677
        %v3558 = verf.f32.pop %v3556
        %v3559 = verf.f32.pop %v3557
        %v3560 = vadd.f32 %v3558, 1.0
        %v3561 = vadd.f32 %v3559, 1.0
        %v3562 = vmul.f32 %v3554, %v3560
        %v3563 = vmul.f32 %v3555, %v3561
        %s3564 = scalar_lea.vmem %s18, 64
        %v3565 = vld [vmem:[%s3564] sm:$0xff]
        %v3566 = vld [vmem:[%s3564 + $0x8] sm:$0xff]
        %v3567 = vld [vmem:[%s3564 + $0x10] sm:$0xff]
        %v3568 = vld [vmem:[%s3564 + $0x18] sm:$0xff]
        %v3569 = vld [vmem:[%s3564 + $0x20] sm:$0xff]
        %v3570 = vld [vmem:[%s3564 + $0x28] sm:$0xff]
        %v3571 = vld [vmem:[%s3564 + $0x30] sm:$0xff]
        %v3572 = vld [vmem:[%s3564 + $0x38] sm:$0xff]
        %s3573 = scalar_lea.vmem %s19, 1
        %v3574 = vld [vmem:[%s3573] sm:$0x1]
        %v3576 = vlaneseq
        %v3577 = vshrl.u32 %v3576, 7
        %v3578 = vsub.s32 0, %v3577
        %v3579 = vrot.slane %v3574, %v3578
        %v3582 = vsel %vm2264, %v3562, 0
        %v3585 = vsel %vm2264, %v3563, 0
        %3587 = vmatprep.subr.mxu0 0.0
        %3588 = vmatpush1.msra.mxu0 0.0
        %3589 = vmatprep.subr.mxu0 0.0
        %3590 = vmatpush1.msra.mxu0 0.0
        %3591 = vmatprep.subr.mxu0 0.0
        %3592 = vmatpush1.msra.mxu0 0.0
        %3593 = vmatprep.subr.mxu0 0.0
        %3594 = vmatpush1.msra.mxu0 0.0
        %3595 = vmatprep.subr.mxu0 0.0
        %3596 = vmatpush1.msra.mxu0 0.0
        %3597 = vmatprep.subr.mxu0 0.0
        %3598 = vmatpush1.msra.mxu0 0.0
        %3599 = vmatprep.subr.mxu0 0.0
        %3600 = vmatpush1.msra.mxu0 0.0
        %3601 = vmatprep.subr.mxu0 0.0
        %3602 = vmatpush1.msra.mxu0 0.0
        %3603 = vmatprep.subr.mxu0 0.0
        %3604 = vmatpush1.msra.mxu0 %v3572
        %3605 = vmatprep.subr.mxu0 0.0
        %3606 = vmatpush1.msra.mxu0 %v3571
        %3607 = vmatprep.subr.mxu0 0.0
        %3608 = vmatpush1.msra.mxu0 %v3570
        %3609 = vmatprep.subr.mxu0 0.0
        %3610 = vmatpush1.msra.mxu0 %v3569
        %3611 = vmatprep.subr.mxu0 0.0
        %3612 = vmatpush1.msra.mxu0 %v3568
        %3613 = vmatprep.subr.mxu0 0.0
        %3614 = vmatpush1.msra.mxu0 %v3567
        %3615 = vmatprep.subr.mxu0 0.0
        %3616 = vmatpush1.msra.mxu0 %v3566
        %3617 = vmatprep.subr.mxu0 0.0
        %3618 = vmatpush1.msra.mxu0 %v3565
        %3619 = vmatprep.subr.mxu0 0.0
        %3620 = vmatpush2.msra.mxu0 0.0
        %3621 = vmatprep.subr.mxu0 0.0
        %3622 = vmatpush2.msra.mxu0 0.0
        %3623 = vmatprep.subr.mxu0 0.0
        %3624 = vmatpush2.msra.mxu0 0.0
        %3625 = vmatprep.subr.mxu0 0.0
        %3626 = vmatpush2.msra.mxu0 0.0
        %3627 = vmatprep.subr.mxu0 0.0
        %3628 = vmatpush2.msra.mxu0 0.0
        %3629 = vmatprep.subr.mxu0 0.0
        %3630 = vmatpush2.msra.mxu0 0.0
        %3631 = vmatprep.subr.mxu0 0.0
        %3632 = vmatpush2.msra.mxu0 0.0
        %3633 = vmatprep.subr.mxu0 0.0
        %3634 = vmatpush2.msra.mxu0 0.0
        %3635 = vmatprep.subr.mxu0 0.0
        %3636 = vmatpush2.msra.mxu0 0.0
        %3637 = vmatprep.subr.mxu0 0.0
        %3638 = vmatpush2.msra.mxu0 0.0
        %3639 = vmatprep.subr.mxu0 0.0
        %3640 = vmatpush2.msra.mxu0 0.0
        %3641 = vmatprep.subr.mxu0 0.0
        %3642 = vmatpush2.msra.mxu0 0.0
        %3643 = vmatprep.subr.mxu0 0.0
        %3644 = vmatpush2.msra.mxu0 0.0
        %3645 = vmatprep.subr.mxu0 0.0
        %3646 = vmatpush2.msra.mxu0 0.0
        %3647 = vmatprep.subr.mxu0 0.0
        %3648 = vmatpush2.msra.mxu0 0.0
        %3649 = vmatprep.subr.mxu0 0.0
        %3650 = vmatpush2.msra.mxu0 0.0
        %3651 = vmatprep.mubr.f32.mxu0 0.0
        %3652 = vmatmul.mubr.f32.gmra.mxu0 %v3582
        %v3653 = vpop.f32.mrf.mxu0
        %v3654 = vadd.f32 %v3579, %v3653
        %v3655 = vpop.f32.mrf.mxu0
        %3656 = vmatprep.mubr.f32.mxu0 0.0
        %3657 = vmatmul.mubr.f32.gmra.mxu0 %v3585
        %v3658 = vpop.f32.mrf.mxu0
        %v3659 = vadd.f32 %v3579, %v3658
        %v3660 = vpop.f32.mrf.mxu0
        %3661 = vdwg.mxu0
        %v3662 = vadd.f32 %v3654, %v3458
        %v3663 = vadd.f32 %v3659, %v3459
        %s3664 = scalar_lea.vmem %s20, 1
        %v3665 = vld [vmem:[%s3664] sm:$0x1]
        %s3666 = scalar_lea.vmem %s21, 1
        %v3667 = vld [vmem:[%s3666] sm:$0x1]
        %v3668 = vsel %vm1015, %v3662, 0.0
        %3669 = vadd.xlane.f32.xlu0 %v3668
        %v3670 = vpop.xlane.xlu0 %3669
        %v3671 = vsel %vm1015, %v3663, 0.0
        %3672 = vadd.xlane.f32.xlu0 %v3671
        %v3673 = vpop.xlane.xlu0 %3672
        %v3674 = vmul.f32 %v3670, %v1022
        %v3675 = vmul.f32 %v3673, %v1022
        %v3676 = vsub.f32 %v3662, %v3674
        %v3677 = vsub.f32 %v3663, %v3675
        %v3678 = vmul.f32 %v3676, %v3676
        %v3679 = vmul.f32 %v3677, %v3677
        %v3680 = vsel %vm1015, %v3678, 0.0
        %3681 = vadd.xlane.f32.xlu0 %v3680
        %v3682 = vpop.xlane.xlu0 %3681
        %v3683 = vsel %vm1015, %v3679, 0.0
        %3684 = vadd.xlane.f32.xlu0 %v3683
        %v3685 = vpop.xlane.xlu0 %3684
        %v3686 = vmul.f32 %v3682, %v1022
        %v3687 = vmul.f32 %v3685, %v1022
        %v3688 = vadd.f32 %v3686, 1e-12
        %v3689 = vadd.f32 %v3687, 1e-12
        %v3690 = vrsqrt.pop %v3688
        %v3691 = vrsqrt.pop %v3689
        %v3692 = vmul.f32 %v3676, %v3690
        %v3693 = vmul.f32 %v3677, %v3691
        %v3695 = vlaneseq
        %v3696 = vshrl.u32 %v3695, 7
        %v3697 = vsub.s32 0, %v3696
        %v3698 = vrot.slane %v3665, %v3697
        %v3700 = vmul.f32 %v3692, %v3698
        %v3701 = vmul.f32 %v3693, %v3698
        %v3703 = vlaneseq
        %v3704 = vshrl.u32 %v3703, 7
        %v3705 = vsub.s32 0, %v3704
        %v3706 = vrot.slane %v3667, %v3705
        %v3708 = vadd.f32 %v3700, %v3706
        %v3709 = vadd.f32 %v3701, %v3706
        %v3710 = vld [vmem:[%s22] sm:$0xff]
        %v3711 = vld [vmem:[%s22 + $0x8] sm:$0xff]
        %v3712 = vld [vmem:[%s22 + $0x10] sm:$0xff]
        %v3713 = vld [vmem:[%s22 + $0x18] sm:$0xff]
        %v3714 = vld [vmem:[%s23] sm:$0x1]
        %v3716 = vlaneseq
        %v3717 = vshrl.u32 %v3716, 7
        %v3718 = vsub.s32 0, %v3717
        %v3719 = vrot.slane %v3714, %v3718
        %v3722 = vsel %vm1015, %v3708, 0
        %v3725 = vsel %vm1015, %v3709, 0
        %3727 = vmatprep.subr.mxu0 0.0
        %3728 = vmatpush1.msra.mxu0 0.0
        %3729 = vmatprep.subr.mxu0 0.0
        %3730 = vmatpush1.msra.mxu0 0.0
        %3731 = vmatprep.subr.mxu0 0.0
        %3732 = vmatpush1.msra.mxu0 0.0
        %3733 = vmatprep.subr.mxu0 0.0
        %3734 = vmatpush1.msra.mxu0 0.0
        %3735 = vmatprep.subr.mxu0 0.0
        %3736 = vmatpush1.msra.mxu0 0.0
        %3737 = vmatprep.subr.mxu0 0.0
        %3738 = vmatpush1.msra.mxu0 0.0
        %3739 = vmatprep.subr.mxu0 0.0
        %3740 = vmatpush1.msra.mxu0 0.0
        %3741 = vmatprep.subr.mxu0 0.0
        %3742 = vmatpush1.msra.mxu0 0.0
        %3743 = vmatprep.subr.mxu0 0.0
        %3744 = vmatpush1.msra.mxu0 0.0
        %3745 = vmatprep.subr.mxu0 0.0
        %3746 = vmatpush1.msra.mxu0 0.0
        %3747 = vmatprep.subr.mxu0 0.0
        %3748 = vmatpush1.msra.mxu0 0.0
        %3749 = vmatprep.subr.mxu0 0.0
        %3750 = vmatpush1.msra.mxu0 0.0
        %3751 = vmatprep.subr.mxu0 0.0
        %3752 = vmatpush1.msra.mxu0 %v3713
        %3753 = vmatprep.subr.mxu0 0.0
        %3754 = vmatpush1.msra.mxu0 %v3712
        %3755 = vmatprep.subr.mxu0 0.0
        %3756 = vmatpush1.msra.mxu0 %v3711
        %3757 = vmatprep.subr.mxu0 0.0
        %3758 = vmatpush1.msra.mxu0 %v3710
        %3759 = vmatprep.subr.mxu0 0.0
        %3760 = vmatpush2.msra.mxu0 0.0
        %3761 = vmatprep.subr.mxu0 0.0
        %3762 = vmatpush2.msra.mxu0 0.0
        %3763 = vmatprep.subr.mxu0 0.0
        %3764 = vmatpush2.msra.mxu0 0.0
        %3765 = vmatprep.subr.mxu0 0.0
        %3766 = vmatpush2.msra.mxu0 0.0
        %3767 = vmatprep.subr.mxu0 0.0
        %3768 = vmatpush2.msra.mxu0 0.0
        %3769 = vmatprep.subr.mxu0 0.0
        %3770 = vmatpush2.msra.mxu0 0.0
        %3771 = vmatprep.subr.mxu0 0.0
        %3772 = vmatpush2.msra.mxu0 0.0
        %3773 = vmatprep.subr.mxu0 0.0
        %3774 = vmatpush2.msra.mxu0 0.0
        %3775 = vmatprep.subr.mxu0 0.0
        %3776 = vmatpush2.msra.mxu0 0.0
        %3777 = vmatprep.subr.mxu0 0.0
        %3778 = vmatpush2.msra.mxu0 0.0
        %3779 = vmatprep.subr.mxu0 0.0
        %3780 = vmatpush2.msra.mxu0 0.0
        %3781 = vmatprep.subr.mxu0 0.0
        %3782 = vmatpush2.msra.mxu0 0.0
        %3783 = vmatprep.subr.mxu0 0.0
        %3784 = vmatpush2.msra.mxu0 0.0
        %3785 = vmatprep.subr.mxu0 0.0
        %3786 = vmatpush2.msra.mxu0 0.0
        %3787 = vmatprep.subr.mxu0 0.0
        %3788 = vmatpush2.msra.mxu0 0.0
        %3789 = vmatprep.subr.mxu0 0.0
        %3790 = vmatpush2.msra.mxu0 0.0
        %3791 = vmatprep.mubr.f32.mxu0 0.0
        %3792 = vmatmul.mubr.f32.gmra.mxu0 %v3722
        %v3793 = vpop.f32.mrf.mxu0
        %v3794 = vadd.f32 %v3719, %v3793
        %v3795 = vpop.f32.mrf.mxu0
        %3796 = vmatprep.mubr.f32.mxu0 0.0
        %3797 = vmatmul.mubr.f32.gmra.mxu0 %v3725
        %v3798 = vpop.f32.mrf.mxu0
        %v3799 = vadd.f32 %v3719, %v3798
        %v3800 = vpop.f32.mrf.mxu0
        %3801 = vdwg.mxu0
        %v3802 = vmul.f32 %v3794, 0.5
        %v3803 = vmul.f32 %v3799, 0.5
        %v3804 = vmul.f32 %v3794, 0.70710677
        %v3805 = vmul.f32 %v3799, 0.70710677
        %v3806 = verf.f32.pop %v3804
        %v3807 = verf.f32.pop %v3805
        %v3808 = vadd.f32 %v3806, 1.0
        %v3809 = vadd.f32 %v3807, 1.0
        %v3810 = vmul.f32 %v3802, %v3808
        %v3811 = vmul.f32 %v3803, %v3809
        %v3812 = vld [vmem:[%s24] sm:$0x1]
        %v3813 = vld [vmem:[%s25] sm:$0x1]
        %v3814 = vsel %vm1015, %v3810, 0.0
        %3815 = vadd.xlane.f32.xlu0 %v3814
        %v3816 = vpop.xlane.xlu0 %3815
        %v3817 = vsel %vm1015, %v3811, 0.0
        %3818 = vadd.xlane.f32.xlu0 %v3817
        %v3819 = vpop.xlane.xlu0 %3818
        %v3820 = vmul.f32 %v3816, %v1022
        %v3821 = vmul.f32 %v3819, %v1022
        %v3822 = vsub.f32 %v3810, %v3820
        %v3823 = vsub.f32 %v3811, %v3821
        %v3824 = vmul.f32 %v3822, %v3822
        %v3825 = vmul.f32 %v3823, %v3823
        %v3826 = vsel %vm1015, %v3824, 0.0
        %3827 = vadd.xlane.f32.xlu0 %v3826
        %v3828 = vpop.xlane.xlu0 %3827
        %v3829 = vsel %vm1015, %v3825, 0.0
        %3830 = vadd.xlane.f32.xlu0 %v3829
        %v3831 = vpop.xlane.xlu0 %3830
        %v3832 = vmul.f32 %v3828, %v1022
        %v3833 = vmul.f32 %v3831, %v1022
        %v3834 = vadd.f32 %v3832, 1e-12
        %v3835 = vadd.f32 %v3833, 1e-12
        %v3836 = vrsqrt.pop %v3834
        %v3837 = vrsqrt.pop %v3835
        %v3838 = vmul.f32 %v3822, %v3836
        %v3839 = vmul.f32 %v3823, %v3837
        %v3841 = vlaneseq
        %v3842 = vshrl.u32 %v3841, 7
        %v3843 = vsub.s32 0, %v3842
        %v3844 = vrot.slane %v3812, %v3843
        %v3846 = vmul.f32 %v3838, %v3844
        %v3847 = vmul.f32 %v3839, %v3844
        %v3849 = vlaneseq
        %v3850 = vshrl.u32 %v3849, 7
        %v3851 = vsub.s32 0, %v3850
        %v3852 = vrot.slane %v3813, %v3851
        %v3854 = vadd.f32 %v3846, %v3852
        %v3855 = vadd.f32 %v3847, %v3852
        %v3856 = vld [vmem:[%s26] sm:$0x1]
        %v3858 = vlaneseq
        %v3859 = vshrl.u32 %v3858, 7
        %v3860 = vsub.s32 0, %v3859
        %v3861 = vrot.slane %v3856, %v3860
        %v3864 = vsel %vm1015, %v3854, 0
        %v3867 = vsel %vm1015, %v3855, 0
        %v3870 = vsel %vm1015, %v889, 0
        %v3873 = vsel %vm1015, %v890, 0
        %v3876 = vsel %vm1015, %v891, 0
        %v3879 = vsel %vm1015, %v892, 0
        %v3882 = vsel %vm1015, %v893, 0
        %v3885 = vsel %vm1015, %v894, 0
        %v3888 = vsel %vm1015, %v895, 0
        %v3891 = vsel %vm1015, %v896, 0
        %v3894 = vsel %vm1015, %v897, 0
        %v3897 = vsel %vm1015, %v898, 0
        %v3900 = vsel %vm1015, %v899, 0
        %v3903 = vsel %vm1015, %v900, 0
        %v3906 = vsel %vm1015, %v901, 0
        %v3909 = vsel %vm1015, %v902, 0
        %v3912 = vsel %vm1015, %v903, 0
        %v3915 = vsel %vm1015, %v904, 0
        %3917 = vmatprep.subr.mxu0 0.0
        %3918 = vmatpush1.xpose.msra.mxu0 %v3915
        %3919 = vmatprep.subr.mxu0 0.0
        %3920 = vmatpush1.xpose.msra.mxu0 %v3912
        %3921 = vmatprep.subr.mxu0 0.0
        %3922 = vmatpush1.xpose.msra.mxu0 %v3909
        %3923 = vmatprep.subr.mxu0 0.0
        %3924 = vmatpush1.xpose.msra.mxu0 %v3906
        %3925 = vmatprep.subr.mxu0 0.0
        %3926 = vmatpush1.xpose.msra.mxu0 %v3903
        %3927 = vmatprep.subr.mxu0 0.0
        %3928 = vmatpush1.xpose.msra.mxu0 %v3900
        %3929 = vmatprep.subr.mxu0 0.0
        %3930 = vmatpush1.xpose.msra.mxu0 %v3897
        %3931 = vmatprep.subr.mxu0 0.0
        %3932 = vmatpush1.xpose.msra.mxu0 %v3894
        %3933 = vmatprep.subr.mxu0 0.0
        %3934 = vmatpush1.xpose.msra.mxu0 %v3891
        %3935 = vmatprep.subr.mxu0 0.0
        %3936 = vmatpush1.xpose.msra.mxu0 %v3888
        %3937 = vmatprep.subr.mxu0 0.0
        %3938 = vmatpush1.xpose.msra.mxu0 %v3885
        %3939 = vmatprep.subr.mxu0 0.0
        %3940 = vmatpush1.xpose.msra.mxu0 %v3882
        %3941 = vmatprep.subr.mxu0 0.0
        %3942 = vmatpush1.xpose.msra.mxu0 %v3879
        %3943 = vmatprep.subr.mxu0 0.0
        %3944 = vmatpush1.xpose.msra.mxu0 %v3876
        %3945 = vmatprep.subr.mxu0 0.0
        %3946 = vmatpush1.xpose.msra.mxu0 %v3873
        %3947 = vmatprep.subr.mxu0 0.0
        %3948 = vmatpush1.xpose.msra.mxu0 %v3870
        %3949 = vmatprep.subr.mxu0 0.0
        %3950 = vmatpush2.xpose.msra.mxu0 0.0
        %3951 = vmatprep.subr.mxu0 0.0
        %3952 = vmatpush2.xpose.msra.mxu0 0.0
        %3953 = vmatprep.subr.mxu0 0.0
        %3954 = vmatpush2.xpose.msra.mxu0 0.0
        %3955 = vmatprep.subr.mxu0 0.0
        %3956 = vmatpush2.xpose.msra.mxu0 0.0
        %3957 = vmatprep.subr.mxu0 0.0
        %3958 = vmatpush2.xpose.msra.mxu0 0.0
        %3959 = vmatprep.subr.mxu0 0.0
        %3960 = vmatpush2.xpose.msra.mxu0 0.0
        %3961 = vmatprep.subr.mxu0 0.0
        %3962 = vmatpush2.xpose.msra.mxu0 0.0
        %3963 = vmatprep.subr.mxu0 0.0
        %3964 = vmatpush2.xpose.msra.mxu0 0.0
        %3965 = vmatprep.subr.mxu0 0.0
        %3966 = vmatpush2.xpose.msra.mxu0 0.0
        %3967 = vmatprep.subr.mxu0 0.0
        %3968 = vmatpush2.xpose.msra.mxu0 0.0
        %3969 = vmatprep.subr.mxu0 0.0
        %3970 = vmatpush2.xpose.msra.mxu0 0.0
        %3971 = vmatprep.subr.mxu0 0.0
        %3972 = vmatpush2.xpose.msra.mxu0 0.0
        %3973 = vmatprep.subr.mxu0 0.0
        %3974 = vmatpush2.xpose.msra.mxu0 0.0
        %3975 = vmatprep.subr.mxu0 0.0
        %3976 = vmatpush2.xpose.msra.mxu0 0.0
        %3977 = vmatprep.subr.mxu0 0.0
        %3978 = vmatpush2.xpose.msra.mxu0 0.0
        %3979 = vmatprep.subr.mxu0 0.0
        %3980 = vmatpush2.xpose.msra.mxu0 0.0
        %3981 = vmatprep.mubr.f32.mxu0 0.0
        %3982 = vmatmul.mubr.f32.gmra.mxu0 %v3864
        %v3983 = vpop.f32.mrf.mxu0
        %v3984 = vadd.f32 %v3861, %v3983
        %v3985 = vpop.f32.mrf.mxu0
        %3986 = vmatprep.mubr.f32.mxu0 0.0
        %3987 = vmatmul.mubr.f32.gmra.mxu0 %v3867
        %v3988 = vpop.f32.mrf.mxu0
        %v3989 = vadd.f32 %v3861, %v3988
        %v3990 = vpop.f32.mrf.mxu0
        %3991 = vdwg.mxu0
        %3992 = vst [vmem:[%s852] sm:$0xff] %v3984
        %3993 = vst [vmem:[%s852 + $0x8] sm:$0xff] %v3989
        %s3994 = sand.u32 %s636, 1
        %s3995 = scalar_lea.sflag [#allocation3], %s3994
        %s3996 = sand.u32 %s636, 1
        %s3997 = smul.addr %s3996, 16
        %s3998 = scalar_lea.vmem [#allocation2], %s3997
        // Predicated region
        $region129: #{unilm_forward.1} parent=127 // pred_check
          %p3999 = pneg %p646
        $region130: #{unilm_forward.1} parent=127 // pred_check_branch
          %4001 = sbr.rel (%p3999) target = $region132
        $region131: #{unilm_forward.1} parent=127 // pred_region
          %s4003 = ssub.s32 256, 256
          %4004 = vsyncadd %s3995, %s4003
          %s4005 = smul.addr %s41, 2
          %s4006 = smul.addr %s4005, 128
          %s4007 = scalar_lea.hbm %s27, %s4006
          %s4008 = sshll.u32 %s3998, 4
          %s4009 = int_to_ptr.vmem [resolvable:$true] %s4008
          %4014 = dma.vmem_to_hbm [thread:$0]  %s4009, 256, %s4007, %s3995, 128, 128, 8
        $region132: #{unilm_forward.1} parent=127 // pred_fallthru
          _
      $region128: #{unilm_forward.1} parent=5 // pred_fallthru
        _
      %p4015 = scmp.le.s32.totalorder 2, %s36
      // Predicated region
      $region133: #{unilm_forward.1} parent=5 // pred_check
        %p4016 = pneg %p4015
      $region134: #{unilm_forward.1} parent=5 // pred_check_branch
        %4018 = sbr.rel (%p4016) target = $region136
      $region135: #{unilm_forward.1} parent=5 // pred_region
        %s4019 = ssub.s32 %s36, 2
        // Predicated region
        $region137: #{unilm_forward.1} parent=135 // pred_check
          %p4020 = pneg %p652
        $region138: #{unilm_forward.1} parent=135 // pred_check_branch
          %4022 = sbr.rel (%p4020) target = $region140
        $region139: #{unilm_forward.1} parent=135 // pred_region
          %s4023 = sand.u32 %s637, 1
          %s4024 = scalar_lea.sflag [#allocation3], %s4023
          %s4025 = sand.u32 %s637, 1
          %s4026 = smul.addr %s4025, 16
          %s4027 = scalar_lea.vmem [#allocation2], %s4026
          %4028 = dma.done %s4024, 256
        $region140: #{unilm_forward.1} parent=135 // pred_fallthru
          _
      $region136: #{unilm_forward.1} parent=5 // pred_fallthru
        _
    $region6: #{unilm_forward.1} parent=1 // loop_footer
      %s40 = sadd.s32 1, %s36
    $region7: #{unilm_forward.1} parent=1 // loop_footer_branch
      %35 = sbr.rel target = $region3
    $region8: #{unilm_forward.1} parent=1 // loop_exit
      _
    %4029 = vsyncpa [#allocation3], 1
    %s4030 = scalar_lea.sflag [#allocation3], 1
    %4031 = vsyncpa %s4030, 1

</llo_original>
